<compile_context>
chip_gen: v7x
topology: tpu7x:2x2x1
jax: 0.10.0
libtpu: 0.0.40
codegen_flags: <defaults>
</compile_context>

<pallas_src>
import functools

import jax
import jax.numpy as jnp
from jax import lax
from jax.experimental import pallas as pl
from jax.experimental.pallas import tpu as pltpu

EPS = 1e-5
LANE = 128


# ------------------------------- small helpers --------------------------------
def _round_up(n, m):
    return ((n + m - 1) // m) * m


def _pad_to(a, axis, size):
    if a.shape[axis] == size:
        return a
    widths = [(0, 0)] * a.ndim
    widths[axis] = (0, size - a.shape[axis])
    return jnp.pad(a, widths)


def _pick_tile(m, target):
    """Largest multiple of 8 that divides m and is <= target (fallback: m)."""
    for cand in range(min(target, m), 7, -1):
        if m % cand == 0 and cand % 8 == 0:
            return cand
    return m


def _compiler_params(grid_rank, est_bytes):
    limit = int(min(max(2 * est_bytes + (8 << 20), 32 << 20), 64 << 20))
    return pltpu.CompilerParams(
        dimension_semantics=("parallel",) * grid_rank,
        vmem_limit_bytes=limit)


def _bn_fold(partial_stats, count, gamma, beta):
    """Reduce per-tile (sum, sumsq) -> folded per-channel scale/bias (f32)."""
    tot = jnp.sum(partial_stats, axis=0)                 # (2, C)
    mean = tot[0] / count
    var = jnp.maximum(tot[1] / count - mean * mean, 0.0)
    scale = gamma * lax.rsqrt(var + EPS)
    bias = beta - mean * scale
    return scale.reshape(1, -1), bias.reshape(1, -1)


# --------------------------------- kernels -------------------------------------
def _pointwise_conv_kernel(apply_pre, *refs):
    """(optional scale/bias + ReLU prologue) -> 1x1 conv (matmul) -> BN stats."""
    if apply_pre:
        x_ref, scale_ref, bias_ref, w_ref, out_ref, stats_ref = refs
    else:
        x_ref, w_ref, out_ref, stats_ref = refs

    x = x_ref[...].astype(jnp.float32)
    if apply_pre:
        x = jnp.maximum(x * scale_ref[...] + bias_ref[...], 0.0)

    h = jnp.dot(x.astype(w_ref.dtype), w_ref[...],
                preferred_element_type=jnp.float32)
    out_ref[...] = h
    stats_ref[...] = jnp.concatenate(
        [jnp.sum(h, axis=0, keepdims=True),
         jnp.sum(h * h, axis=0, keepdims=True)], axis=0)


def _conv2_kernel(stride, Ho, Wo, h1_ref, s1_ref, b1_ref, w2_ref,
                  out_ref, stats_ref, pad_ref):
    """BN1+ReLU prologue -> 3x3/stride conv as one im2col matmul -> BN2 stats."""
    H, W, P = h1_ref.shape
    s = stride

    a1 = jnp.maximum(h1_ref[...] * s1_ref[...] + b1_ref[...], 0.0)

    # Zero only the 1-pixel border of the pad scratch, then write the interior.
    zrow = jnp.zeros((1, W + 2, P), jnp.float32)
    zcol = jnp.zeros((H, 1, P), jnp.float32)
    pad_ref[0:1, :, :] = zrow
    pad_ref[H + 1:H + 2, :, :] = zrow
    pad_ref[1:H + 1, 0:1, :] = zcol
    pad_ref[1:H + 1, W + 1:W + 2, :] = zcol
    pad_ref[1:H + 1, 1:W + 1, :] = a1

    # im2col: 9 shifted ref windows concatenated along the lane axis, then one
    # big-K (9*P) matmul on the MXU.
    cols = []
    for ky in range(3):
        for kx in range(3):
            if s == 1:
                win = pad_ref[ky:ky + Ho, kx:kx + Wo, :]
            else:
                win = pad_ref[pl.ds(ky, Ho, s), pl.ds(kx, Wo, s), :]
            cols.append(win.reshape(Ho * Wo, P))
    patches = jnp.concatenate(cols, axis=-1).astype(w2_ref.dtype)

    h2 = jnp.dot(patches, w2_ref[...], preferred_element_type=jnp.float32)
    out_ref[...] = h2
    stats_ref[...] = jnp.concatenate(
        [jnp.sum(h2, axis=0, keepdims=True),
         jnp.sum(h2 * h2, axis=0, keepdims=True)], axis=0)


def _combine_kernel(h3_ref, sc_ref, s3_ref, b3_ref, ss_ref, bs_ref, out_ref):
    """Residual add with BN3 / BN_shortcut folded to scale+bias, then ReLU."""
    out_ref[...] = jnp.maximum(
        h3_ref[...] * s3_ref[...] + b3_ref[...]
        + sc_ref[...] * ss_ref[...] + bs_ref[...], 0.0)


# ------------------------------ pallas_call wrappers ---------------------------
def _pointwise_conv(x, w, *, pre_scale=None, pre_bias=None, mxu_dtype, pixel_tile):
    M, Cin = x.shape
    Cout = w.shape[1]
    TM = _pick_tile(M, pixel_tile)
    T = M // TM
    apply_pre = pre_scale is not None

    in_specs = [pl.BlockSpec((TM, Cin), lambda i: (i, 0))]
    args = [x]
    if apply_pre:
        in_specs += [pl.BlockSpec((1, Cin), lambda i: (0, 0)),
                     pl.BlockSpec((1, Cin), lambda i: (0, 0))]
        args += [pre_scale, pre_bias]
    in_specs.append(pl.BlockSpec((Cin, Cout), lambda i: (0, 0)))
    args.append(w.astype(mxu_dtype))

    est = (2 * TM * (Cin + Cout) * 4
           + 2 * Cin * Cout * jnp.dtype(mxu_dtype).itemsize)
    h, stats = pl.pallas_call(
        functools.partial(_pointwise_conv_kernel, apply_pre),
        grid=(T,),
        in_specs=in_specs,
        out_specs=[pl.BlockSpec((TM, Cout), lambda i: (i, 0)),
                   pl.BlockSpec((None, 2, Cout), lambda i: (i, 0, 0))],
        out_shape=(jax.ShapeDtypeStruct((M, Cout), jnp.float32),
                   jax.ShapeDtypeStruct((T, 2, Cout), jnp.float32)),
        compiler_params=_compiler_params(1, est),
    )(*args)
    return h, stats


def _conv2_3x3(h1_img, scale1, bias1, w2col, *, stride, Ho, Wo, mxu_dtype):
    N, H, W, P = h1_img.shape
    KP = w2col.shape[0]                     # 9 * P
    isz = jnp.dtype(mxu_dtype).itemsize
    est = (2 * H * W * P * 4 + 2 * Ho * Wo * P * 4
           + (H + 2) * (W + 2) * P * 4
           + Ho * Wo * KP * isz + KP * P * isz)
    h2, stats = pl.pallas_call(
        functools.partial(_conv2_kernel, stride, Ho, Wo),
        grid=(N,),
        in_specs=[pl.BlockSpec((None, H, W, P), lambda n: (n, 0, 0, 0)),
                  pl.BlockSpec((1, P), lambda n: (0, 0)),
                  pl.BlockSpec((1, P), lambda n: (0, 0)),
                  pl.BlockSpec((KP, P), lambda n: (0, 0))],
        out_specs=[pl.BlockSpec((None, Ho * Wo, P), lambda n: (n, 0, 0)),
                   pl.BlockSpec((None, 2, P), lambda n: (n, 0, 0))],
        out_shape=(jax.ShapeDtypeStruct((N, Ho * Wo, P), jnp.float32),
                   jax.ShapeDtypeStruct((N, 2, P), jnp.float32)),
        scratch_shapes=[pltpu.VMEM((H + 2, W + 2, P), jnp.float32)],
        compiler_params=_compiler_params(1, est),
    )(h1_img, scale1, bias1, w2col.astype(mxu_dtype))
    return h2, stats


def _combine(h3, sc, s3, b3, ss, bs, *, pixel_tile):
    M, C = h3.shape
    TM = _pick_tile(M, pixel_tile)
    T = M // TM
    est = 2 * 3 * TM * C * 4
    return pl.pallas_call(
        _combine_kernel,
        grid=(T,),
        in_specs=[pl.BlockSpec((TM, C), lambda i: (i, 0)),
                  pl.BlockSpec((TM, C), lambda i: (i, 0)),
                  pl.BlockSpec((1, C), lambda i: (0, 0)),
                  pl.BlockSpec((1, C), lambda i: (0, 0)),
                  pl.BlockSpec((1, C), lambda i: (0, 0)),
                  pl.BlockSpec((1, C), lambda i: (0, 0))],
        out_specs=pl.BlockSpec((TM, C), lambda i: (i, 0)),
        out_shape=jax.ShapeDtypeStruct((M, C), jnp.float32),
        compiler_params=_compiler_params(1, est),
    )(h3, sc, s3, b3, ss, bs)


# --------------------------------- forward pass --------------------------------
@functools.partial(jax.jit, static_argnames=("stride", "mxu_dtype", "pixel_tile"))
def bottleneck_forward(x_nchw, params, *, stride=1,
                       mxu_dtype=jnp.bfloat16, pixel_tile=1024):
    """x_nchw: (N, Cin, H, W) f32 -> (N, 4*planes, Ho, Wo) f32 (PyTorch NCHW)."""
    N, Cin, H, W = x_nchw.shape
    P = params["w1"].shape[0]                  # planes
    Co = 4 * P
    Ho = (H - 1) // stride + 1
    Wo = (W - 1) // stride + 1
    M1, M2 = N * H * W, N * Ho * Wo

    Cin_p, P_p, Co_p = (_round_up(c, LANE) for c in (Cin, P, Co))
    f32 = jnp.float32

    # ---- layout glue: NCHW -> NHWC, lane-dense channel padding to 128 -------
    x = _pad_to(jnp.transpose(x_nchw, (0, 2, 3, 1)).astype(f32), 3, Cin_p)
    x_flat = x.reshape(M1, Cin_p)

    # conv weights (PyTorch OIHW) -> matmul layouts, channel padded.
    w1 = _pad_to(_pad_to(params["w1"][:, :, 0, 0].T, 0, Cin_p), 1, P_p)
    w3 = _pad_to(_pad_to(params["w3"][:, :, 0, 0].T, 0, P_p), 1, Co_p)
    w2 = jnp.transpose(params["w2"], (2, 3, 1, 0))              # (3,3,in,out)
    w2 = _pad_to(_pad_to(w2, 2, P_p), 3, P_p).reshape(9 * P_p, P_p)

    def vec(name, size):
        return _pad_to(params[name].astype(f32), 0, size)

    # ---- conv1 (1x1) + BN1 partial stats -------------------------------------
    h1_flat, st1 = _pointwise_conv(x_flat, w1,
                                   mxu_dtype=mxu_dtype, pixel_tile=pixel_tile)
    s1, sb1 = _bn_fold(st1, M1, vec("g1", P_p), vec("b1", P_p))

    # ---- conv2 (3x3, stride) with BN1+ReLU fused in its prologue -------------
    h2, st2 = _conv2_3x3(h1_flat.reshape(N, H, W, P_p), s1, sb1, w2,
                         stride=stride, Ho=Ho, Wo=Wo, mxu_dtype=mxu_dtype)
    s2, sb2 = _bn_fold(st2, M2, vec("g2", P_p), vec("b2", P_p))

    # ---- conv3 (1x1) with BN2+ReLU fused in its prologue ----------------------
    h3_flat, st3 = _pointwise_conv(h2.reshape(M2, P_p), w3,
                                   pre_scale=s2, pre_bias=sb2,
                                   mxu_dtype=mxu_dtype, pixel_tile=pixel_tile)
    s3, sb3 = _bn_fold(st3, M2, vec("g3", Co_p), vec("b3", Co_p))

    # ---- shortcut -------------------------------------------------------------
    if stride != 1 or Cin != Co:          # projection shortcut: 1x1 conv + BN
        ws = _pad_to(_pad_to(params["ws"][:, :, 0, 0].T, 0, Cin_p), 1, Co_p)
        # stride decimation done once in the wrapper (DMA-time), not in-kernel.
        xs = x if stride == 1 else x[:, ::stride, ::stride, :]
        sc_flat, sts = _pointwise_conv(xs.reshape(M2, Cin_p), ws,
                                       mxu_dtype=mxu_dtype,
                                       pixel_tile=pixel_tile)
        ss, sbs = _bn_fold(sts, M2, vec("gs", Co_p), vec("bs", Co_p))
    else:                                  # identity shortcut
        sc_flat = x_flat                   # Cin_p == Co_p, stride == 1
        ss = jnp.ones((1, Co_p), f32)
        sbs = jnp.zeros((1, Co_p), f32)

    # ---- residual add (BN folded to scale+bias) + ReLU ------------------------
    out_flat = _combine(h3_flat, sc_flat, s3, sb3, ss, sbs,
                        pixel_tile=pixel_tile)
    out = out_flat.reshape(N, Ho, Wo, Co_p)[:, :, :, :Co]
    return jnp.transpose(out, (0, 3, 1, 2))


# ----------------------------- pure-JAX reference -----------------------------
def _reference_forward(x, params, *, stride=1):
    def conv(h, w, s, pad):
        return lax.conv_general_dilated(
            h, w, (s, s), pad,
            dimension_numbers=("NCHW", "OIHW", "NCHW"),
            precision=lax.Precision.HIGHEST)

    def bn(h, g, b):
        mu = h.mean(axis=(0, 2, 3), keepdims=True)
        var = ((h - mu) ** 2).mean(axis=(0, 2, 3), keepdims=True)
        return ((h - mu) * lax.rsqrt(var + EPS) * g.reshape(1, -1, 1, 1)
                + b.reshape(1, -1, 1, 1))

    out = jax.nn.relu(bn(conv(x, params["w1"], 1, [(0, 0), (0, 0)]),
                         params["g1"], params["b1"]))
    out = jax.nn.relu(bn(conv(out, params["w2"], stride, [(1, 1), (1, 1)]),
                         params["g2"], params["b2"]))
    out = bn(conv(out, params["w3"], 1, [(0, 0), (0, 0)]),
             params["g3"], params["b3"])
    sc = bn(conv(x, params["ws"], stride, [(0, 0), (0, 0)]),
            params["gs"], params["bs"])
    return jax.nn.relu(out + sc)


def make_params(key, in_planes, planes):
    expansion = 4
    ks = jax.random.split(key, 12)
    return {
        # conv weights in PyTorch OIHW layout, bias=False
        "w1": 0.2 * jax.random.normal(ks[0], (planes, in_planes, 1, 1), jnp.float32),
        "w2": 0.2 * jax.random.normal(ks[1], (planes, planes, 3, 3), jnp.float32),
        "w3": 0.2 * jax.random.normal(ks[2], (expansion * planes, planes, 1, 1), jnp.float32),
        "ws": 0.2 * jax.random.normal(ks[3], (expansion * planes, in_planes, 1, 1), jnp.float32),
        # BN affine params
        "g1": 1.0 + 0.1 * jax.random.normal(ks[4], (planes,), jnp.float32),
        "b1": 0.1 * jax.random.normal(ks[5], (planes,), jnp.float32),
        "g2": 1.0 + 0.1 * jax.random.normal(ks[6], (planes,), jnp.float32),
        "b2": 0.1 * jax.random.normal(ks[7], (planes,), jnp.float32),
        "g3": 1.0 + 0.1 * jax.random.normal(ks[8], (expansion * planes,), jnp.float32),
        "b3": 0.1 * jax.random.normal(ks[9], (expansion * planes,), jnp.float32),
        "gs": 1.0 + 0.1 * jax.random.normal(ks[10], (expansion * planes,), jnp.float32),
        "bs": 0.1 * jax.random.normal(ks[11], (expansion * planes,), jnp.float32),
    }


if __name__ == "__main__":
    key = jax.random.PRNGKey(0)
    k_x, k_p = jax.random.split(key)

    N, in_planes, planes, H, W = 2, 4, 4, 16, 16
    stride = 1   # projection shortcut still active since in_planes != 4*planes

    x = jax.random.normal(k_x, (N, in_planes, H, W), jnp.float32)
    params = make_params(k_p, in_planes, planes)

    ref = jax.block_until_ready(_reference_forward(x, params, stride=stride))

    # f32 MXU path; small pixel tile so the multi-tile BN-stat reduction path
    # is exercised even at this toy size.
    out_f32 = jax.block_until_ready(
        bottleneck_forward(x, params, stride=stride,
                           mxu_dtype=jnp.float32, pixel_tile=128))
    assert out_f32.shape == ref.shape == (N, 4 * planes, H // stride, W // stride)
    err_f32 = float(jnp.max(jnp.abs(out_f32 - ref)))
    assert err_f32 < 2e-3, err_f32

    # Default perf path: bf16-fed MXU (f32 accumulation, f32 BN math).
    out_bf16 = jax.block_until_ready(
        bottleneck_forward(x, params, stride=stride,
                           mxu_dtype=jnp.bfloat16, pixel_tile=1024))
    err_bf16 = float(jnp.max(jnp.abs(out_bf16 - ref)))
    assert err_bf16 < 1e-1, err_bf16

    print("KERNEL_OK")
</pallas_src>

<mosaic_0001>
module attributes {stable_mosaic.version = 11 : i64} {
  func.func @_conv2_kernel(%arg0: i32, %arg1: memref<1x16x16x128xf32, #tpu.memory_space<vmem>>, %arg2: memref<1x128xf32, #tpu.memory_space<vmem>>, %arg3: memref<1x128xf32, #tpu.memory_space<vmem>>, %arg4: memref<1152x128xf32, #tpu.memory_space<vmem>>, %arg5: memref<1x256x128xf32, #tpu.memory_space<vmem>>, %arg6: memref<1x2x128xf32, #tpu.memory_space<vmem>>, %arg7: memref<18x18x128xf32, #tpu.memory_space<vmem>>) attributes {dimension_semantics = [#tpu.dimension_semantics<parallel>], iteration_bounds = array<i64: 2>, scalar_prefetch = 0 : i64, scratch_operands = 1 : i64, tpu.core_type = #tpu.core_type<tc>, window_params = [{transform_indices = @transform_0, window_bounds = array<i64: 1, 16, 16, 128>}, {pipeline_mode = #tpu.pipeline_mode<synchronous>, transform_indices = @transform_1, window_bounds = array<i64: 1, 128>}, {pipeline_mode = #tpu.pipeline_mode<synchronous>, transform_indices = @transform_2, window_bounds = array<i64: 1, 128>}, {pipeline_mode = #tpu.pipeline_mode<synchronous>, transform_indices = @transform_3, window_bounds = array<i64: 1152, 128>}, {transform_indices = @transform_4, window_bounds = array<i64: 1, 256, 128>}, {transform_indices = @transform_5, window_bounds = array<i64: 1, 2, 128>}]} {
    %c0 = arith.constant 0 : index
    %c0_0 = arith.constant 0 : index
    %c0_1 = arith.constant 0 : index
    %c0_2 = arith.constant 0 : index
    %0 = vector.load %arg1[%c0, %c0_0, %c0_1, %c0_2] : memref<1x16x16x128xf32, #tpu.memory_space<vmem>>, vector<1x16x16x128xf32>
    %1 = vector.shape_cast %0 : vector<1x16x16x128xf32> to vector<16x16x128xf32>
    %c0_3 = arith.constant 0 : index
    %c0_4 = arith.constant 0 : index
    %2 = vector.load %arg2[%c0_3, %c0_4] : memref<1x128xf32, #tpu.memory_space<vmem>>, vector<1x128xf32>
    %3 = vector.shape_cast %2 : vector<1x128xf32> to vector<1x1x128xf32>
    %4 = vector.broadcast %3 : vector<1x1x128xf32> to vector<16x16x128xf32>
    %5 = arith.mulf %1, %4 : vector<16x16x128xf32>
    %c0_5 = arith.constant 0 : index
    %c0_6 = arith.constant 0 : index
    %6 = vector.load %arg3[%c0_5, %c0_6] : memref<1x128xf32, #tpu.memory_space<vmem>>, vector<1x128xf32>
    %7 = vector.shape_cast %6 : vector<1x128xf32> to vector<1x1x128xf32>
    %8 = vector.broadcast %7 : vector<1x1x128xf32> to vector<16x16x128xf32>
    %9 = arith.addf %5, %8 : vector<16x16x128xf32>
    %cst = arith.constant 0.000000e+00 : f32
    %10 = vector.broadcast %cst : f32 to vector<16x16x128xf32>
    %11 = arith.maximumf %9, %10 : vector<16x16x128xf32>
    %cst_7 = arith.constant 0.000000e+00 : f32
    %12 = vector.broadcast %cst_7 : f32 to vector<1x18x128xf32>
    %cst_8 = arith.constant 0.000000e+00 : f32
    %13 = vector.broadcast %cst_8 : f32 to vector<16x1x128xf32>
    %c0_9 = arith.constant 0 : index
    %c0_10 = arith.constant 0 : index
    %c0_11 = arith.constant 0 : index
    %14 = vector.load %arg7[%c0_9, %c0_10, %c0_11] : memref<18x18x128xf32, #tpu.memory_space<vmem>>, vector<1x18x128xf32>
    tpu.vector_store %arg7[%c0_9, %c0_10, %c0_11], %12 {strides = array<i32>} : memref<18x18x128xf32, #tpu.memory_space<vmem>>, vector<1x18x128xf32>,
    %c17 = arith.constant 17 : index
    %c0_12 = arith.constant 0 : index
    %c0_13 = arith.constant 0 : index
    %15 = vector.load %arg7[%c17, %c0_12, %c0_13] : memref<18x18x128xf32, #tpu.memory_space<vmem>>, vector<1x18x128xf32>
    tpu.vector_store %arg7[%c17, %c0_12, %c0_13], %12 {strides = array<i32>} : memref<18x18x128xf32, #tpu.memory_space<vmem>>, vector<1x18x128xf32>,
    %c1 = arith.constant 1 : index
    %c0_14 = arith.constant 0 : index
    %c0_15 = arith.constant 0 : index
    %16 = vector.load %arg7[%c1, %c0_14, %c0_15] : memref<18x18x128xf32, #tpu.memory_space<vmem>>, vector<16x1x128xf32>
    tpu.vector_store %arg7[%c1, %c0_14, %c0_15], %13 {strides = array<i32>} : memref<18x18x128xf32, #tpu.memory_space<vmem>>, vector<16x1x128xf32>,
    %c1_16 = arith.constant 1 : index
    %c17_17 = arith.constant 17 : index
    %c0_18 = arith.constant 0 : index
    %17 = vector.load %arg7[%c1_16, %c17_17, %c0_18] : memref<18x18x128xf32, #tpu.memory_space<vmem>>, vector<16x1x128xf32>
    tpu.vector_store %arg7[%c1_16, %c17_17, %c0_18], %13 {strides = array<i32>} : memref<18x18x128xf32, #tpu.memory_space<vmem>>, vector<16x1x128xf32>,
    %c1_19 = arith.constant 1 : index
    %c1_20 = arith.constant 1 : index
    %c0_21 = arith.constant 0 : index
    %18 = vector.load %arg7[%c1_19, %c1_20, %c0_21] : memref<18x18x128xf32, #tpu.memory_space<vmem>>, vector<16x16x128xf32>
    tpu.vector_store %arg7[%c1_19, %c1_20, %c0_21], %11 {strides = array<i32>} : memref<18x18x128xf32, #tpu.memory_space<vmem>>, vector<16x16x128xf32>,
    %c0_22 = arith.constant 0 : index
    %c0_23 = arith.constant 0 : index
    %c0_24 = arith.constant 0 : index
    %19 = vector.load %arg7[%c0_22, %c0_23, %c0_24] : memref<18x18x128xf32, #tpu.memory_space<vmem>>, vector<16x16x128xf32>
    %20 = vector.shape_cast %19 : vector<16x16x128xf32> to vector<256x128xf32>
    %c0_25 = arith.constant 0 : index
    %c1_26 = arith.constant 1 : index
    %c0_27 = arith.constant 0 : index
    %21 = vector.load %arg7[%c0_25, %c1_26, %c0_27] : memref<18x18x128xf32, #tpu.memory_space<vmem>>, vector<16x16x128xf32>
    %22 = vector.shape_cast %21 : vector<16x16x128xf32> to vector<256x128xf32>
    %c0_28 = arith.constant 0 : index
    %c2 = arith.constant 2 : index
    %c0_29 = arith.constant 0 : index
    %23 = vector.load %arg7[%c0_28, %c2, %c0_29] : memref<18x18x128xf32, #tpu.memory_space<vmem>>, vector<16x16x128xf32>
    %24 = vector.shape_cast %23 : vector<16x16x128xf32> to vector<256x128xf32>
    %c1_30 = arith.constant 1 : index
    %c0_31 = arith.constant 0 : index
    %c0_32 = arith.constant 0 : index
    %25 = vector.load %arg7[%c1_30, %c0_31, %c0_32] : memref<18x18x128xf32, #tpu.memory_space<vmem>>, vector<16x16x128xf32>
    %26 = vector.shape_cast %25 : vector<16x16x128xf32> to vector<256x128xf32>
    %c1_33 = arith.constant 1 : index
    %c1_34 = arith.constant 1 : index
    %c0_35 = arith.constant 0 : index
    %27 = vector.load %arg7[%c1_33, %c1_34, %c0_35] : memref<18x18x128xf32, #tpu.memory_space<vmem>>, vector<16x16x128xf32>
    %28 = vector.shape_cast %27 : vector<16x16x128xf32> to vector<256x128xf32>
    %c1_36 = arith.constant 1 : index
    %c2_37 = arith.constant 2 : index
    %c0_38 = arith.constant 0 : index
    %29 = vector.load %arg7[%c1_36, %c2_37, %c0_38] : memref<18x18x128xf32, #tpu.memory_space<vmem>>, vector<16x16x128xf32>
    %30 = vector.shape_cast %29 : vector<16x16x128xf32> to vector<256x128xf32>
    %c2_39 = arith.constant 2 : index
    %c0_40 = arith.constant 0 : index
    %c0_41 = arith.constant 0 : index
    %31 = vector.load %arg7[%c2_39, %c0_40, %c0_41] : memref<18x18x128xf32, #tpu.memory_space<vmem>>, vector<16x16x128xf32>
    %32 = vector.shape_cast %31 : vector<16x16x128xf32> to vector<256x128xf32>
    %c2_42 = arith.constant 2 : index
    %c1_43 = arith.constant 1 : index
    %c0_44 = arith.constant 0 : index
    %33 = vector.load %arg7[%c2_42, %c1_43, %c0_44] : memref<18x18x128xf32, #tpu.memory_space<vmem>>, vector<16x16x128xf32>
    %34 = vector.shape_cast %33 : vector<16x16x128xf32> to vector<256x128xf32>
    %c2_45 = arith.constant 2 : index
    %c2_46 = arith.constant 2 : index
    %c0_47 = arith.constant 0 : index
    %35 = vector.load %arg7[%c2_45, %c2_46, %c0_47] : memref<18x18x128xf32, #tpu.memory_space<vmem>>, vector<16x16x128xf32>
    %36 = vector.shape_cast %35 : vector<16x16x128xf32> to vector<256x128xf32>
    %37 = tpu.concatenate %20, %22, %24, %26, %28, %30, %32, %34, %36 in 1 : vector<256x128xf32>, vector<256x128xf32>, vector<256x128xf32>, vector<256x128xf32>, vector<256x128xf32>, vector<256x128xf32>, vector<256x128xf32>, vector<256x128xf32>, vector<256x128xf32> -> vector<256x1152xf32>
    %c0_48 = arith.constant 0 : index
    %c0_49 = arith.constant 0 : index
    %38 = vector.load %arg4[%c0_48, %c0_49] : memref<1152x128xf32, #tpu.memory_space<vmem>>, vector<1152x128xf32>
    %cst_50 = arith.constant dense<0.000000e+00> : vector<256x128xf32>
    %39 = tpu.matmul %37, %38, %cst_50 {dimension_numbers = #tpu.dot_dimension_numbers<[1], [0], [0], [1], [0, 0, 1, 1], [], []>} : vector<256x1152xf32>, vector<1152x128xf32>, vector<256x128xf32> -> vector<256x128xf32>
    %c0_51 = arith.constant 0 : index
    %c0_52 = arith.constant 0 : index
    %c0_53 = arith.constant 0 : index
    %40 = vector.load %arg5[%c0_51, %c0_52, %c0_53] : memref<1x256x128xf32, #tpu.memory_space<vmem>>, vector<1x256x128xf32>
    %41 = vector.shape_cast %40 : vector<1x256x128xf32> to vector<256x128xf32>
    %42 = vector.shape_cast %39 : vector<256x128xf32> to vector<1x256x128xf32>
    tpu.vector_store %arg5[%c0_51, %c0_52, %c0_53], %42 {strides = array<i32>} : memref<1x256x128xf32, #tpu.memory_space<vmem>>, vector<1x256x128xf32>,
    %cst_54 = arith.constant dense<0.000000e+00> : vector<128xf32>
    %43 = vector.multi_reduction <add>, %39, %cst_54 [0] : vector<256x128xf32> to vector<128xf32>
    %44 = vector.shape_cast %43 : vector<128xf32> to vector<1x128xf32>
    %45 = arith.mulf %39, %39 : vector<256x128xf32>
    %cst_55 = arith.constant dense<0.000000e+00> : vector<128xf32>
    %46 = vector.multi_reduction <add>, %45, %cst_55 [0] : vector<256x128xf32> to vector<128xf32>
    %47 = vector.shape_cast %46 : vector<128xf32> to vector<1x128xf32>
    %48 = tpu.concatenate %44, %47 in 0 : vector<1x128xf32>, vector<1x128xf32> -> vector<2x128xf32>
    %c0_56 = arith.constant 0 : index
    %c0_57 = arith.constant 0 : index
    %c0_58 = arith.constant 0 : index
    %49 = vector.load %arg6[%c0_56, %c0_57, %c0_58] : memref<1x2x128xf32, #tpu.memory_space<vmem>>, vector<1x2x128xf32>
    %50 = vector.shape_cast %49 : vector<1x2x128xf32> to vector<2x128xf32>
    %51 = vector.shape_cast %48 : vector<2x128xf32> to vector<1x2x128xf32>
    tpu.vector_store %arg6[%c0_56, %c0_57, %c0_58], %51 {strides = array<i32>} : memref<1x2x128xf32, #tpu.memory_space<vmem>>, vector<1x2x128xf32>,
    return
  }
  func.func @transform_0(%arg0: i32) -> (i32, i32, i32, i32) {
    %c0_i32 = arith.constant 0 : i32
    %c0_i32_0 = arith.constant 0 : i32
    %c0_i32_1 = arith.constant 0 : i32
    %c0_i32_2 = arith.constant 0 : i32
    return %arg0, %c0_i32, %c0_i32_0, %c0_i32_1 : i32, i32, i32, i32
  }
  func.func @transform_1(%arg0: i32) -> (i32, i32) {
    %c0_i32 = arith.constant 0 : i32
    %c0_i32_0 = arith.constant 0 : i32
    %c0_i32_1 = arith.constant 0 : i32
    return %c0_i32, %c0_i32_0 : i32, i32
  }
  func.func @transform_2(%arg0: i32) -> (i32, i32) {
    %c0_i32 = arith.constant 0 : i32
    %c0_i32_0 = arith.constant 0 : i32
    %c0_i32_1 = arith.constant 0 : i32
    return %c0_i32, %c0_i32_0 : i32, i32
  }
  func.func @transform_3(%arg0: i32) -> (i32, i32) {
    %c0_i32 = arith.constant 0 : i32
    %c0_i32_0 = arith.constant 0 : i32
    %c0_i32_1 = arith.constant 0 : i32
    return %c0_i32, %c0_i32_0 : i32, i32
  }
  func.func @transform_4(%arg0: i32) -> (i32, i32, i32) {
    %c0_i32 = arith.constant 0 : i32
    %c0_i32_0 = arith.constant 0 : i32
    %c0_i32_1 = arith.constant 0 : i32
    return %arg0, %c0_i32, %c0_i32_0 : i32, i32, i32
  }
  func.func @transform_5(%arg0: i32) -> (i32, i32, i32) {
    %c0_i32 = arith.constant 0 : i32
    %c0_i32_0 = arith.constant 0 : i32
    %c0_i32_1 = arith.constant 0 : i32
    return %arg0, %c0_i32, %c0_i32_0 : i32, i32, i32
  }
}

module attributes {stable_mosaic.version = 11 : i64} {
  func.func @_pointwise_conv_kernel(%arg0: i32, %arg1: memref<128x128xf32, #tpu.memory_space<vmem>>, %arg2: memref<128x128xf32, #tpu.memory_space<vmem>>, %arg3: memref<128x128xf32, #tpu.memory_space<vmem>>, %arg4: memref<1x2x128xf32, #tpu.memory_space<vmem>>) attributes {dimension_semantics = [#tpu.dimension_semantics<parallel>], iteration_bounds = array<i64: 4>, scalar_prefetch = 0 : i64, scratch_operands = 0 : i64, tpu.core_type = #tpu.core_type<tc>, window_params = [{transform_indices = @transform_0, window_bounds = array<i64: 128, 128>}, {pipeline_mode = #tpu.pipeline_mode<synchronous>, transform_indices = @transform_1, window_bounds = array<i64: 128, 128>}, {transform_indices = @transform_2, window_bounds = array<i64: 128, 128>}, {transform_indices = @transform_3, window_bounds = array<i64: 1, 2, 128>}]} {
    %c0 = arith.constant 0 : index
    %c0_0 = arith.constant 0 : index
    %0 = vector.load %arg1[%c0, %c0_0] : memref<128x128xf32, #tpu.memory_space<vmem>>, vector<128x128xf32>
    %c0_1 = arith.constant 0 : index
    %c0_2 = arith.constant 0 : index
    %1 = vector.load %arg2[%c0_1, %c0_2] : memref<128x128xf32, #tpu.memory_space<vmem>>, vector<128x128xf32>
    %cst = arith.constant dense<0.000000e+00> : vector<128x128xf32>
    %2 = tpu.matmul %0, %1, %cst {dimension_numbers = #tpu.dot_dimension_numbers<[1], [0], [0], [1], [0, 0, 1, 1], [], []>} : vector<128x128xf32>, vector<128x128xf32>, vector<128x128xf32> -> vector<128x128xf32>
    %c0_3 = arith.constant 0 : index
    %c0_4 = arith.constant 0 : index
    %3 = vector.load %arg3[%c0_3, %c0_4] : memref<128x128xf32, #tpu.memory_space<vmem>>, vector<128x128xf32>
    tpu.vector_store %arg3[%c0_3, %c0_4], %2 {strides = array<i32>} : memref<128x128xf32, #tpu.memory_space<vmem>>, vector<128x128xf32>,
    %cst_5 = arith.constant dense<0.000000e+00> : vector<128xf32>
    %4 = vector.multi_reduction <add>, %2, %cst_5 [0] : vector<128x128xf32> to vector<128xf32>
    %5 = vector.shape_cast %4 : vector<128xf32> to vector<1x128xf32>
    %6 = arith.mulf %2, %2 : vector<128x128xf32>
    %cst_6 = arith.constant dense<0.000000e+00> : vector<128xf32>
    %7 = vector.multi_reduction <add>, %6, %cst_6 [0] : vector<128x128xf32> to vector<128xf32>
    %8 = vector.shape_cast %7 : vector<128xf32> to vector<1x128xf32>
    %9 = tpu.concatenate %5, %8 in 0 : vector<1x128xf32>, vector<1x128xf32> -> vector<2x128xf32>
    %c0_7 = arith.constant 0 : index
    %c0_8 = arith.constant 0 : index
    %c0_9 = arith.constant 0 : index
    %10 = vector.load %arg4[%c0_7, %c0_8, %c0_9] : memref<1x2x128xf32, #tpu.memory_space<vmem>>, vector<1x2x128xf32>
    %11 = vector.shape_cast %10 : vector<1x2x128xf32> to vector<2x128xf32>
    %12 = vector.shape_cast %9 : vector<2x128xf32> to vector<1x2x128xf32>
    tpu.vector_store %arg4[%c0_7, %c0_8, %c0_9], %12 {strides = array<i32>} : memref<1x2x128xf32, #tpu.memory_space<vmem>>, vector<1x2x128xf32>,
    return
  }
  func.func @transform_0(%arg0: i32) -> (i32, i32) {
    %c0_i32 = arith.constant 0 : i32
    %c0_i32_0 = arith.constant 0 : i32
    return %arg0, %c0_i32 : i32, i32
  }
  func.func @transform_1(%arg0: i32) -> (i32, i32) {
    %c0_i32 = arith.constant 0 : i32
    %c0_i32_0 = arith.constant 0 : i32
    %c0_i32_1 = arith.constant 0 : i32
    return %c0_i32, %c0_i32_0 : i32, i32
  }
  func.func @transform_2(%arg0: i32) -> (i32, i32) {
    %c0_i32 = arith.constant 0 : i32
    %c0_i32_0 = arith.constant 0 : i32
    return %arg0, %c0_i32 : i32, i32
  }
  func.func @transform_3(%arg0: i32) -> (i32, i32, i32) {
    %c0_i32 = arith.constant 0 : i32
    %c0_i32_0 = arith.constant 0 : i32
    %c0_i32_1 = arith.constant 0 : i32
    return %arg0, %c0_i32, %c0_i32_0 : i32, i32, i32
  }
}

module attributes {stable_mosaic.version = 11 : i64} {
  func.func @_pointwise_conv_kernel(%arg0: i32, %arg1: memref<128x128xf32, #tpu.memory_space<vmem>>, %arg2: memref<1x128xf32, #tpu.memory_space<vmem>>, %arg3: memref<1x128xf32, #tpu.memory_space<vmem>>, %arg4: memref<128x128xf32, #tpu.memory_space<vmem>>, %arg5: memref<128x128xf32, #tpu.memory_space<vmem>>, %arg6: memref<1x2x128xf32, #tpu.memory_space<vmem>>) attributes {dimension_semantics = [#tpu.dimension_semantics<parallel>], iteration_bounds = array<i64: 4>, scalar_prefetch = 0 : i64, scratch_operands = 0 : i64, tpu.core_type = #tpu.core_type<tc>, window_params = [{transform_indices = @transform_0, window_bounds = array<i64: 128, 128>}, {pipeline_mode = #tpu.pipeline_mode<synchronous>, transform_indices = @transform_1, window_bounds = array<i64: 1, 128>}, {pipeline_mode = #tpu.pipeline_mode<synchronous>, transform_indices = @transform_2, window_bounds = array<i64: 1, 128>}, {pipeline_mode = #tpu.pipeline_mode<synchronous>, transform_indices = @transform_3, window_bounds = array<i64: 128, 128>}, {transform_indices = @transform_4, window_bounds = array<i64: 128, 128>}, {transform_indices = @transform_5, window_bounds = array<i64: 1, 2, 128>}]} {
    %c0 = arith.constant 0 : index
    %c0_0 = arith.constant 0 : index
    %0 = vector.load %arg1[%c0, %c0_0] : memref<128x128xf32, #tpu.memory_space<vmem>>, vector<128x128xf32>
    %c0_1 = arith.constant 0 : index
    %c0_2 = arith.constant 0 : index
    %1 = vector.load %arg2[%c0_1, %c0_2] : memref<1x128xf32, #tpu.memory_space<vmem>>, vector<1x128xf32>
    %2 = vector.broadcast %1 : vector<1x128xf32> to vector<128x128xf32>
    %3 = arith.mulf %0, %2 : vector<128x128xf32>
    %c0_3 = arith.constant 0 : index
    %c0_4 = arith.constant 0 : index
    %4 = vector.load %arg3[%c0_3, %c0_4] : memref<1x128xf32, #tpu.memory_space<vmem>>, vector<1x128xf32>
    %5 = vector.broadcast %4 : vector<1x128xf32> to vector<128x128xf32>
    %6 = arith.addf %3, %5 : vector<128x128xf32>
    %cst = arith.constant 0.000000e+00 : f32
    %7 = vector.broadcast %cst : f32 to vector<128x128xf32>
    %8 = arith.maximumf %6, %7 : vector<128x128xf32>
    %c0_5 = arith.constant 0 : index
    %c0_6 = arith.constant 0 : index
    %9 = vector.load %arg4[%c0_5, %c0_6] : memref<128x128xf32, #tpu.memory_space<vmem>>, vector<128x128xf32>
    %cst_7 = arith.constant dense<0.000000e+00> : vector<128x128xf32>
    %10 = tpu.matmul %8, %9, %cst_7 {dimension_numbers = #tpu.dot_dimension_numbers<[1], [0], [0], [1], [0, 0, 1, 1], [], []>} : vector<128x128xf32>, vector<128x128xf32>, vector<128x128xf32> -> vector<128x128xf32>
    %c0_8 = arith.constant 0 : index
    %c0_9 = arith.constant 0 : index
    %11 = vector.load %arg5[%c0_8, %c0_9] : memref<128x128xf32, #tpu.memory_space<vmem>>, vector<128x128xf32>
    tpu.vector_store %arg5[%c0_8, %c0_9], %10 {strides = array<i32>} : memref<128x128xf32, #tpu.memory_space<vmem>>, vector<128x128xf32>,
    %cst_10 = arith.constant dense<0.000000e+00> : vector<128xf32>
    %12 = vector.multi_reduction <add>, %10, %cst_10 [0] : vector<128x128xf32> to vector<128xf32>
    %13 = vector.shape_cast %12 : vector<128xf32> to vector<1x128xf32>
    %14 = arith.mulf %10, %10 : vector<128x128xf32>
    %cst_11 = arith.constant dense<0.000000e+00> : vector<128xf32>
    %15 = vector.multi_reduction <add>, %14, %cst_11 [0] : vector<128x128xf32> to vector<128xf32>
    %16 = vector.shape_cast %15 : vector<128xf32> to vector<1x128xf32>
    %17 = tpu.concatenate %13, %16 in 0 : vector<1x128xf32>, vector<1x128xf32> -> vector<2x128xf32>
    %c0_12 = arith.constant 0 : index
    %c0_13 = arith.constant 0 : index
    %c0_14 = arith.constant 0 : index
    %18 = vector.load %arg6[%c0_12, %c0_13, %c0_14] : memref<1x2x128xf32, #tpu.memory_space<vmem>>, vector<1x2x128xf32>
    %19 = vector.shape_cast %18 : vector<1x2x128xf32> to vector<2x128xf32>
    %20 = vector.shape_cast %17 : vector<2x128xf32> to vector<1x2x128xf32>
    tpu.vector_store %arg6[%c0_12, %c0_13, %c0_14], %20 {strides = array<i32>} : memref<1x2x128xf32, #tpu.memory_space<vmem>>, vector<1x2x128xf32>,
    return
  }
  func.func @transform_0(%arg0: i32) -> (i32, i32) {
    %c0_i32 = arith.constant 0 : i32
    %c0_i32_0 = arith.constant 0 : i32
    return %arg0, %c0_i32 : i32, i32
  }
  func.func @transform_1(%arg0: i32) -> (i32, i32) {
    %c0_i32 = arith.constant 0 : i32
    %c0_i32_0 = arith.constant 0 : i32
    %c0_i32_1 = arith.constant 0 : i32
    return %c0_i32, %c0_i32_0 : i32, i32
  }
  func.func @transform_2(%arg0: i32) -> (i32, i32) {
    %c0_i32 = arith.constant 0 : i32
    %c0_i32_0 = arith.constant 0 : i32
    %c0_i32_1 = arith.constant 0 : i32
    return %c0_i32, %c0_i32_0 : i32, i32
  }
  func.func @transform_3(%arg0: i32) -> (i32, i32) {
    %c0_i32 = arith.constant 0 : i32
    %c0_i32_0 = arith.constant 0 : i32
    %c0_i32_1 = arith.constant 0 : i32
    return %c0_i32, %c0_i32_0 : i32, i32
  }
  func.func @transform_4(%arg0: i32) -> (i32, i32) {
    %c0_i32 = arith.constant 0 : i32
    %c0_i32_0 = arith.constant 0 : i32
    return %arg0, %c0_i32 : i32, i32
  }
  func.func @transform_5(%arg0: i32) -> (i32, i32, i32) {
    %c0_i32 = arith.constant 0 : i32
    %c0_i32_0 = arith.constant 0 : i32
    %c0_i32_1 = arith.constant 0 : i32
    return %arg0, %c0_i32, %c0_i32_0 : i32, i32, i32
  }
}

module attributes {stable_mosaic.version = 11 : i64} {
  func.func @_combine_kernel(%arg0: i32, %arg1: memref<128x128xf32, #tpu.memory_space<vmem>>, %arg2: memref<128x128xf32, #tpu.memory_space<vmem>>, %arg3: memref<1x128xf32, #tpu.memory_space<vmem>>, %arg4: memref<1x128xf32, #tpu.memory_space<vmem>>, %arg5: memref<1x128xf32, #tpu.memory_space<vmem>>, %arg6: memref<1x128xf32, #tpu.memory_space<vmem>>, %arg7: memref<128x128xf32, #tpu.memory_space<vmem>>) attributes {dimension_semantics = [#tpu.dimension_semantics<parallel>], iteration_bounds = array<i64: 4>, scalar_prefetch = 0 : i64, scratch_operands = 0 : i64, tpu.core_type = #tpu.core_type<tc>, window_params = [{transform_indices = @transform_0, window_bounds = array<i64: 128, 128>}, {transform_indices = @transform_1, window_bounds = array<i64: 128, 128>}, {pipeline_mode = #tpu.pipeline_mode<synchronous>, transform_indices = @transform_2, window_bounds = array<i64: 1, 128>}, {pipeline_mode = #tpu.pipeline_mode<synchronous>, transform_indices = @transform_3, window_bounds = array<i64: 1, 128>}, {pipeline_mode = #tpu.pipeline_mode<synchronous>, transform_indices = @transform_4, window_bounds = array<i64: 1, 128>}, {pipeline_mode = #tpu.pipeline_mode<synchronous>, transform_indices = @transform_5, window_bounds = array<i64: 1, 128>}, {transform_indices = @transform_6, window_bounds = array<i64: 128, 128>}]} {
    %c0 = arith.constant 0 : index
    %c0_0 = arith.constant 0 : index
    %0 = vector.load %arg1[%c0, %c0_0] : memref<128x128xf32, #tpu.memory_space<vmem>>, vector<128x128xf32>
    %c0_1 = arith.constant 0 : index
    %c0_2 = arith.constant 0 : index
    %1 = vector.load %arg3[%c0_1, %c0_2] : memref<1x128xf32, #tpu.memory_space<vmem>>, vector<1x128xf32>
    %2 = vector.broadcast %1 : vector<1x128xf32> to vector<128x128xf32>
    %3 = arith.mulf %0, %2 : vector<128x128xf32>
    %c0_3 = arith.constant 0 : index
    %c0_4 = arith.constant 0 : index
    %4 = vector.load %arg4[%c0_3, %c0_4] : memref<1x128xf32, #tpu.memory_space<vmem>>, vector<1x128xf32>
    %5 = vector.broadcast %4 : vector<1x128xf32> to vector<128x128xf32>
    %6 = arith.addf %3, %5 : vector<128x128xf32>
    %c0_5 = arith.constant 0 : index
    %c0_6 = arith.constant 0 : index
    %7 = vector.load %arg2[%c0_5, %c0_6] : memref<128x128xf32, #tpu.memory_space<vmem>>, vector<128x128xf32>
    %c0_7 = arith.constant 0 : index
    %c0_8 = arith.constant 0 : index
    %8 = vector.load %arg5[%c0_7, %c0_8] : memref<1x128xf32, #tpu.memory_space<vmem>>, vector<1x128xf32>
    %9 = vector.broadcast %8 : vector<1x128xf32> to vector<128x128xf32>
    %10 = arith.mulf %7, %9 : vector<128x128xf32>
    %11 = arith.addf %6, %10 : vector<128x128xf32>
    %c0_9 = arith.constant 0 : index
    %c0_10 = arith.constant 0 : index
    %12 = vector.load %arg6[%c0_9, %c0_10] : memref<1x128xf32, #tpu.memory_space<vmem>>, vector<1x128xf32>
    %13 = vector.broadcast %12 : vector<1x128xf32> to vector<128x128xf32>
    %14 = arith.addf %11, %13 : vector<128x128xf32>
    %cst = arith.constant 0.000000e+00 : f32
    %15 = vector.broadcast %cst : f32 to vector<128x128xf32>
    %16 = arith.maximumf %14, %15 : vector<128x128xf32>
    %c0_11 = arith.constant 0 : index
    %c0_12 = arith.constant 0 : index
    %17 = vector.load %arg7[%c0_11, %c0_12] : memref<128x128xf32, #tpu.memory_space<vmem>>, vector<128x128xf32>
    tpu.vector_store %arg7[%c0_11, %c0_12], %16 {strides = array<i32>} : memref<128x128xf32, #tpu.memory_space<vmem>>, vector<128x128xf32>,
    return
  }
  func.func @transform_0(%arg0: i32) -> (i32, i32) {
    %c0_i32 = arith.constant 0 : i32
    %c0_i32_0 = arith.constant 0 : i32
    return %arg0, %c0_i32 : i32, i32
  }
  func.func @transform_1(%arg0: i32) -> (i32, i32) {
    %c0_i32 = arith.constant 0 : i32
    %c0_i32_0 = arith.constant 0 : i32
    return %arg0, %c0_i32 : i32, i32
  }
  func.func @transform_2(%arg0: i32) -> (i32, i32) {
    %c0_i32 = arith.constant 0 : i32
    %c0_i32_0 = arith.constant 0 : i32
    %c0_i32_1 = arith.constant 0 : i32
    return %c0_i32, %c0_i32_0 : i32, i32
  }
  func.func @transform_3(%arg0: i32) -> (i32, i32) {
    %c0_i32 = arith.constant 0 : i32
    %c0_i32_0 = arith.constant 0 : i32
    %c0_i32_1 = arith.constant 0 : i32
    return %c0_i32, %c0_i32_0 : i32, i32
  }
  func.func @transform_4(%arg0: i32) -> (i32, i32) {
    %c0_i32 = arith.constant 0 : i32
    %c0_i32_0 = arith.constant 0 : i32
    %c0_i32_1 = arith.constant 0 : i32
    return %c0_i32, %c0_i32_0 : i32, i32
  }
  func.func @transform_5(%arg0: i32) -> (i32, i32) {
    %c0_i32 = arith.constant 0 : i32
    %c0_i32_0 = arith.constant 0 : i32
    %c0_i32_1 = arith.constant 0 : i32
    return %c0_i32, %c0_i32_0 : i32, i32
  }
  func.func @transform_6(%arg0: i32) -> (i32, i32) {
    %c0_i32 = arith.constant 0 : i32
    %c0_i32_0 = arith.constant 0 : i32
    return %arg0, %c0_i32 : i32, i32
  }
}

</mosaic_0001>

<llo_original>
// kernel: bottleneck_forward.5
$region0: #{bottleneck_forward.5}
  #allocation0 [shape = 'u32[]', space=smem, size = 0x4, offset = 0x4, fixed_abs, tag = 'smem constant byte address 0x4 - core index']
  #allocation1 [shape = 'u32[144,128]{1,0:T(1,128)}', space=vmem, size = 0x12000, scoped, tag = 'internal scratch']
  %s0 = inlined_call_operand.vmem [shape: f32[512,128], index: 0, kind: input, shape index: {}]
  %s1 = inlined_call_operand.vmem [shape: f32[128,128], index: 1, kind: input, shape index: {}]
  %s2 = inlined_call_operand.vmem [shape: f32[512,128], index: 2, kind: output, shape index: {0}]
  %s3 = inlined_call_operand.vmem [shape: f32[4,2,128], index: 3, kind: output, shape index: {1}]
  %4 = xla_tuple %s2, %s3
  %s5 = sld [smem:[#allocation0]]
  $region49: #{bottleneck_forward.5} parent=0
    _
  %s7 = ssub.s32 1, %s5
  %s8 = scalar_select 0, %s7, %s5
  loop: start=0, step=1, limit=6
  $region2: #{bottleneck_forward.5} parent=0 // loop_pre_header
    _
  $region3: #{bottleneck_forward.5} parent=0 // loop_header
    %s10 = sphi 0, %s14
    %p11 = scmp.ge.s32.totalorder %s10, 6
    %s20 = sphi 0, %s22
    %s23 = sphi 0, %s20
    %s24 = sphi 0, %s23
    %s40 = sphi 0, %s24
    %s44 = sphi 0, %s44
    %s46 = sphi 0, %s44
    %s47 = sphi 0, %s46
    %s61 = sphi 0, %s47
    %s67 = sphi 0, %s69
    %s70 = sphi 0, %s67
    %s71 = sphi 0, %s70
    %s87 = sphi 0, %s71
    %s93 = sphi 0, %s95
    %s96 = sphi 0, %s93
    %s97 = sphi 0, %s96
    %s113 = sphi 0, %s97
  $region4: #{bottleneck_forward.5} parent=0 // loop_header_branch
    %13 = sbr.rel (%p11) target = $region8
  $region5: #{bottleneck_forward.5} parent=0 // loop_body
    %s15 = ssub.s32 %s10, 1
    %s16 = ssub.s32 %s10, 2
    %s17 = sadd.s32 %s10, 1
    %s18 = ssub.s32 %s10, %s17
    %p19 = scmp.eq.s32.totalorder %s18, 0
    %s21 = sadd.s32 %s20, 1
    %s22 = scalar_select %p19, %s20, %s21
    %p25 = pneg %p19
    %p26 = scmp.eq.s32.totalorder %s10, 3
    %p27 = por %p25, %p26
    %p28 = scmp.ne.s32.totalorder %s20, %s23
    %p29 = scmp.eq.s32.totalorder %s10, 0
    %p30 = por %p28, %p29
    %p31 = scmp.ne.s32.totalorder %s20, %s23
    %p32 = scmp.eq.s32.totalorder %s15, 3
    %p33 = por %p31, %p32
    %p34 = scmp.ne.s32.totalorder %s23, %s24
    %p35 = scmp.eq.s32.totalorder %s15, 0
    %p36 = por %p34, %p35
    %p37 = scmp.ne.s32.totalorder %s23, %s24
    %p38 = scmp.eq.s32.totalorder %s16, 3
    %p39 = por %p37, %p38
    %p41 = scmp.ne.s32.totalorder %s24, %s40
    %p42 = scmp.eq.s32.totalorder %s16, 0
    %p43 = por %p41, %p42
    %s45 = sadd.s32 %s44, 1
    %p48 = scmp.eq.s32.totalorder %s10, 3
    %p49 = scmp.ne.s32.totalorder %s44, %s46
    %p50 = scmp.eq.s32.totalorder %s10, 0
    %p51 = por %p49, %p50
    %p52 = scmp.ne.s32.totalorder %s44, %s46
    %p53 = scmp.eq.s32.totalorder %s15, 3
    %p54 = por %p52, %p53
    %p55 = scmp.ne.s32.totalorder %s46, %s47
    %p56 = scmp.eq.s32.totalorder %s15, 0
    %p57 = por %p55, %p56
    %p58 = scmp.ne.s32.totalorder %s46, %s47
    %p59 = scmp.eq.s32.totalorder %s16, 3
    %p60 = por %p58, %p59
    %p62 = scmp.ne.s32.totalorder %s47, %s61
    %p63 = scmp.eq.s32.totalorder %s16, 0
    %p64 = por %p62, %p63
    %s65 = ssub.s32 %s10, %s17
    %p66 = scmp.eq.s32.totalorder %s65, 0
    %s68 = sadd.s32 %s67, 1
    %s69 = scalar_select %p66, %s67, %s68
    %p72 = pneg %p66
    %p73 = scmp.eq.s32.totalorder %s10, 3
    %p74 = por %p72, %p73
    %p75 = scmp.ne.s32.totalorder %s67, %s70
    %p76 = scmp.eq.s32.totalorder %s10, 0
    %p77 = por %p75, %p76
    %p78 = scmp.ne.s32.totalorder %s67, %s70
    %p79 = scmp.eq.s32.totalorder %s15, 3
    %p80 = por %p78, %p79
    %p81 = scmp.ne.s32.totalorder %s70, %s71
    %p82 = scmp.eq.s32.totalorder %s15, 0
    %p83 = por %p81, %p82
    %p84 = scmp.ne.s32.totalorder %s70, %s71
    %p85 = scmp.eq.s32.totalorder %s16, 3
    %p86 = por %p84, %p85
    %p88 = scmp.ne.s32.totalorder %s71, %s87
    %p89 = scmp.eq.s32.totalorder %s16, 0
    %p90 = por %p88, %p89
    %s91 = ssub.s32 %s10, %s17
    %p92 = scmp.eq.s32.totalorder %s91, 0
    %s94 = sadd.s32 %s93, 1
    %s95 = scalar_select %p92, %s93, %s94
    %p98 = pneg %p92
    %p99 = scmp.eq.s32.totalorder %s10, 3
    %p100 = por %p98, %p99
    %p101 = scmp.ne.s32.totalorder %s93, %s96
    %p102 = scmp.eq.s32.totalorder %s10, 0
    %p103 = por %p101, %p102
    %p104 = scmp.ne.s32.totalorder %s93, %s96
    %p105 = scmp.eq.s32.totalorder %s15, 3
    %p106 = por %p104, %p105
    %p107 = scmp.ne.s32.totalorder %s96, %s97
    %p108 = scmp.eq.s32.totalorder %s15, 0
    %p109 = por %p107, %p108
    %p110 = scmp.ne.s32.totalorder %s96, %s97
    %p111 = scmp.eq.s32.totalorder %s16, 3
    %p112 = por %p110, %p111
    %p114 = scmp.ne.s32.totalorder %s97, %s113
    %p115 = scmp.eq.s32.totalorder %s16, 0
    %p116 = por %p114, %p115
    %p117 = scmp.le.s32.totalorder 1, %s10
    %p118 = scmp.lt.s32.totalorder %s10, 5
    %p119 = pnand %p117, %p118
    %p120 = pneg %p119
    // Predicated region
    $region9: #{bottleneck_forward.5} parent=5 // pred_check
      _
    $region10: #{bottleneck_forward.5} parent=5 // pred_check_branch
      %122 = sbr.rel (%p119) target = $region12
    $region11: #{bottleneck_forward.5} parent=5 // pred_region
      %s123 = ssub.s32 %s10, 1
      // Predicated region
      $region13: #{bottleneck_forward.5} parent=11 // pred_check
        %p124 = pneg %p57
      $region14: #{bottleneck_forward.5} parent=11 // pred_check_branch
        %126 = sbr.rel (%p124) target = $region16
      $region15: #{bottleneck_forward.5} parent=11 // pred_region
        _
      $region16: #{bottleneck_forward.5} parent=11 // pred_fallthru
        _
    $region12: #{bottleneck_forward.5} parent=5 // pred_fallthru
      _
    %p127 = scmp.lt.s32.totalorder %s10, 4
    // Predicated region
    $region17: #{bottleneck_forward.5} parent=5 // pred_check
      %p128 = pneg %p127
    $region18: #{bottleneck_forward.5} parent=5 // pred_check_branch
      %130 = sbr.rel (%p128) target = $region20
    $region19: #{bottleneck_forward.5} parent=5 // pred_region
      // Predicated region
      $region21: #{bottleneck_forward.5} parent=19 // pred_check
        %p131 = pneg %p30
      $region22: #{bottleneck_forward.5} parent=19 // pred_check_branch
        %133 = sbr.rel (%p131) target = $region24
      $region23: #{bottleneck_forward.5} parent=19 // pred_region
        %s134 = smul.u32 16, %s10
        %p135 = scmp.lt.s32.totalorder %s134, 63
        %s136 = scalar_select %p135, %s134, 63
        %s137 = smul.addr %s136, 8
        %s138 = scalar_lea.vmem %s0, %s137
        %s139 = smul.u32 16, %s10
      $region24: #{bottleneck_forward.5} parent=19 // pred_fallthru
        _
    $region20: #{bottleneck_forward.5} parent=5 // pred_fallthru
      _
    %p140 = scmp.le.s32.totalorder 1, %s10
    %p141 = scmp.lt.s32.totalorder %s10, 5
    %p142 = pnand %p140, %p141
    %p143 = pneg %p142
    // Predicated region
    $region25: #{bottleneck_forward.5} parent=5 // pred_check
      _
    $region26: #{bottleneck_forward.5} parent=5 // pred_check_branch
      %145 = sbr.rel (%p142) target = $region28
    $region27: #{bottleneck_forward.5} parent=5 // pred_region
      %s146 = ssub.s32 %s10, 1
      %s147 = smul.u32 16, %s15
      %p148 = scmp.lt.s32.totalorder %s147, 63
      %s149 = scalar_select %p148, %s147, 63
      %s150 = smul.addr %s149, 8
      %s151 = scalar_lea.vmem %s0, %s150
      %p152 = pneg %p36
      %p153 = pneg %p33
      %p154 = pneg %p57
      %p155 = pneg %p54
      %p156 = pneg %p83
      %p157 = pneg %p80
      %s158 = smul.u32 16, %s15
      %p159 = scmp.lt.s32.totalorder %s158, 63
      %s160 = scalar_select %p159, %s158, 63
      %s161 = smul.addr %s160, 8
      %s162 = scalar_lea.vmem %s2, %s161
      %p163 = pneg %p109
      %p164 = pneg %p106
      %p165 = scmp.lt.s32.totalorder %s15, 3
      %s166 = scalar_select %p165, %s15, 3
      %s167 = smul.addr %s166, 2
      %s168 = scalar_lea.vmem %s3, %s167
      %s169 = smul.u32 16, %s15
      %p170 = scmp.lt.s32.totalorder %s169, 63
      %s171 = scalar_select %p170, %s169, 63
      %s172 = smul.addr %s171, 8
      %s173 = scalar_lea.vmem %s0, %s172
      %s174 = smul.u32 16, %s15
      %s175 = smul.u32 16, %s15
      %p176 = scmp.lt.s32.totalorder %s175, 63
      %s177 = scalar_select %p176, %s175, 63
      %s178 = smul.addr %s177, 8
      %s179 = scalar_lea.vmem %s2, %s178
      %s180 = smul.u32 16, %s15
      %p181 = scmp.lt.s32.totalorder %s15, 3
      %s182 = scalar_select %p181, %s15, 3
      %s183 = smul.addr %s182, 2
      %s184 = scalar_lea.vmem %s3, %s183
      %v185 = vld [vmem:[%s173] sm:$0xff]
      %v186 = vld [vmem:[%s173 + $0x8] sm:$0xff]
      %v187 = vld [vmem:[%s173 + $0x10] sm:$0xff]
      %v188 = vld [vmem:[%s173 + $0x18] sm:$0xff]
      %v189 = vld [vmem:[%s173 + $0x20] sm:$0xff]
      %v190 = vld [vmem:[%s173 + $0x28] sm:$0xff]
      %v191 = vld [vmem:[%s173 + $0x30] sm:$0xff]
      %v192 = vld [vmem:[%s173 + $0x38] sm:$0xff]
      %v193 = vld [vmem:[%s173 + $0x40] sm:$0xff]
      %v194 = vld [vmem:[%s173 + $0x48] sm:$0xff]
      %v195 = vld [vmem:[%s173 + $0x50] sm:$0xff]
      %v196 = vld [vmem:[%s173 + $0x58] sm:$0xff]
      %v197 = vld [vmem:[%s173 + $0x60] sm:$0xff]
      %v198 = vld [vmem:[%s173 + $0x68] sm:$0xff]
      %v199 = vld [vmem:[%s173 + $0x70] sm:$0xff]
      %v200 = vld [vmem:[%s173 + $0x78] sm:$0xff]
      %v201 = vld [vmem:[%s1] sm:$0xff]
      %v202 = vld [vmem:[%s1 + $0x8] sm:$0xff]
      %v203 = vld [vmem:[%s1 + $0x10] sm:$0xff]
      %v204 = vld [vmem:[%s1 + $0x18] sm:$0xff]
      %v205 = vld [vmem:[%s1 + $0x20] sm:$0xff]
      %v206 = vld [vmem:[%s1 + $0x28] sm:$0xff]
      %v207 = vld [vmem:[%s1 + $0x30] sm:$0xff]
      %v208 = vld [vmem:[%s1 + $0x38] sm:$0xff]
      %v209 = vld [vmem:[%s1 + $0x40] sm:$0xff]
      %v210 = vld [vmem:[%s1 + $0x48] sm:$0xff]
      %v211 = vld [vmem:[%s1 + $0x50] sm:$0xff]
      %v212 = vld [vmem:[%s1 + $0x58] sm:$0xff]
      %v213 = vld [vmem:[%s1 + $0x60] sm:$0xff]
      %v214 = vld [vmem:[%s1 + $0x68] sm:$0xff]
      %v215 = vld [vmem:[%s1 + $0x70] sm:$0xff]
      %v216 = vld [vmem:[%s1 + $0x78] sm:$0xff]
      %217 = vmatprep.subr.mxu0 0.0
      %218 = vmatpush1.msra.mxu0 %v201
      %219 = vmatprep.subr.mxu0 0.0
      %220 = vmatpush1.msra.mxu0 %v202
      %221 = vmatprep.subr.mxu0 0.0
      %222 = vmatpush1.msra.mxu0 %v203
      %223 = vmatprep.subr.mxu0 0.0
      %224 = vmatpush1.msra.mxu0 %v204
      %225 = vmatprep.subr.mxu0 0.0
      %226 = vmatpush1.msra.mxu0 %v205
      %227 = vmatprep.subr.mxu0 0.0
      %228 = vmatpush1.msra.mxu0 %v206
      %229 = vmatprep.subr.mxu0 0.0
      %230 = vmatpush1.msra.mxu0 %v207
      %231 = vmatprep.subr.mxu0 0.0
      %232 = vmatpush1.msra.mxu0 %v208
      %233 = vmatprep.subr.mxu0 0.0
      %234 = vmatpush1.msra.mxu0 %v209
      %235 = vmatprep.subr.mxu0 0.0
      %236 = vmatpush1.msra.mxu0 %v210
      %237 = vmatprep.subr.mxu0 0.0
      %238 = vmatpush1.msra.mxu0 %v211
      %239 = vmatprep.subr.mxu0 0.0
      %240 = vmatpush1.msra.mxu0 %v212
      %241 = vmatprep.subr.mxu0 0.0
      %242 = vmatpush1.msra.mxu0 %v213
      %243 = vmatprep.subr.mxu0 0.0
      %244 = vmatpush1.msra.mxu0 %v214
      %245 = vmatprep.subr.mxu0 0.0
      %246 = vmatpush1.msra.mxu0 %v215
      %247 = vmatprep.subr.mxu0 0.0
      %248 = vmatpush1.msra.mxu0 %v216
      %249 = vmatprep.subr.mxu0 0.0
      %250 = vmatpush1.msra.mxu0 0.0
      %251 = vmatprep.subr.mxu0 0.0
      %252 = vmatpush1.msra.mxu0 0.0
      %253 = vmatprep.subr.mxu0 0.0
      %254 = vmatpush1.msra.mxu0 0.0
      %255 = vmatprep.subr.mxu0 0.0
      %256 = vmatpush1.msra.mxu0 0.0
      %257 = vmatprep.subr.mxu0 0.0
      %258 = vmatpush1.msra.mxu0 0.0
      %259 = vmatprep.subr.mxu0 0.0
      %260 = vmatpush1.msra.mxu0 0.0
      %261 = vmatprep.subr.mxu0 0.0
      %262 = vmatpush1.msra.mxu0 0.0
      %263 = vmatprep.subr.mxu0 0.0
      %264 = vmatpush1.msra.mxu0 0.0
      %265 = vmatprep.subr.mxu0 0.0
      %266 = vmatpush1.msra.mxu0 0.0
      %267 = vmatprep.subr.mxu0 0.0
      %268 = vmatpush1.msra.mxu0 0.0
      %269 = vmatprep.subr.mxu0 0.0
      %270 = vmatpush1.msra.mxu0 0.0
      %271 = vmatprep.subr.mxu0 0.0
      %272 = vmatpush1.msra.mxu0 0.0
      %273 = vmatprep.subr.mxu0 0.0
      %274 = vmatpush1.msra.mxu0 0.0
      %275 = vmatprep.subr.mxu0 0.0
      %276 = vmatpush1.msra.mxu0 0.0
      %277 = vmatprep.subr.mxu0 0.0
      %278 = vmatpush1.msra.mxu0 0.0
      %279 = vmatprep.subr.mxu0 0.0
      %280 = vmatpush1.msra.mxu0 0.0
      %281 = vmatprep.mubr.f32.mxu0 0.0
      %282 = vmatmul.mubr.f32.gmra.mrb[0].mxu0 %v185
      %v283 = vpop.f32.mrb[0].mxu0
      %v284 = vadd.f32 0.0, %v283
      %v285 = vpop.f32.mrb[0].mxu0
      %286 = vmatprep.mubr.f32.mxu0 0.0
      %287 = vmatmul.mubr.f32.gmra.mrb[0].mxu0 %v186
      %v288 = vpop.f32.mrb[0].mxu0
      %v289 = vadd.f32 0.0, %v288
      %v290 = vpop.f32.mrb[0].mxu0
      %291 = vmatprep.mubr.f32.mxu0 0.0
      %292 = vmatmul.mubr.f32.gmra.mrb[0].mxu0 %v187
      %v293 = vpop.f32.mrb[0].mxu0
      %v294 = vadd.f32 0.0, %v293
      %v295 = vpop.f32.mrb[0].mxu0
      %296 = vmatprep.mubr.f32.mxu0 0.0
      %297 = vmatmul.mubr.f32.gmra.mrb[0].mxu0 %v188
      %v298 = vpop.f32.mrb[0].mxu0
      %v299 = vadd.f32 0.0, %v298
      %v300 = vpop.f32.mrb[0].mxu0
      %301 = vmatprep.mubr.f32.mxu0 0.0
      %302 = vmatmul.mubr.f32.gmra.mrb[0].mxu0 %v189
      %v303 = vpop.f32.mrb[0].mxu0
      %v304 = vadd.f32 0.0, %v303
      %v305 = vpop.f32.mrb[0].mxu0
      %306 = vmatprep.mubr.f32.mxu0 0.0
      %307 = vmatmul.mubr.f32.gmra.mrb[0].mxu0 %v190
      %v308 = vpop.f32.mrb[0].mxu0
      %v309 = vadd.f32 0.0, %v308
      %v310 = vpop.f32.mrb[0].mxu0
      %311 = vmatprep.mubr.f32.mxu0 0.0
      %312 = vmatmul.mubr.f32.gmra.mrb[0].mxu0 %v191
      %v313 = vpop.f32.mrb[0].mxu0
      %v314 = vadd.f32 0.0, %v313
      %v315 = vpop.f32.mrb[0].mxu0
      %316 = vmatprep.mubr.f32.mxu0 0.0
      %317 = vmatmul.mubr.f32.gmra.mrb[0].mxu0 %v192
      %v318 = vpop.f32.mrb[0].mxu0
      %v319 = vadd.f32 0.0, %v318
      %v320 = vpop.f32.mrb[0].mxu0
      %321 = vmatprep.mubr.f32.mxu0 0.0
      %322 = vmatmul.mubr.f32.gmra.mrb[0].mxu0 %v193
      %v323 = vpop.f32.mrb[0].mxu0
      %v324 = vadd.f32 0.0, %v323
      %v325 = vpop.f32.mrb[0].mxu0
      %326 = vmatprep.mubr.f32.mxu0 0.0
      %327 = vmatmul.mubr.f32.gmra.mrb[0].mxu0 %v194
      %v328 = vpop.f32.mrb[0].mxu0
      %v329 = vadd.f32 0.0, %v328
      %v330 = vpop.f32.mrb[0].mxu0
      %331 = vmatprep.mubr.f32.mxu0 0.0
      %332 = vmatmul.mubr.f32.gmra.mrb[0].mxu0 %v195
      %v333 = vpop.f32.mrb[0].mxu0
      %v334 = vadd.f32 0.0, %v333
      %v335 = vpop.f32.mrb[0].mxu0
      %336 = vmatprep.mubr.f32.mxu0 0.0
      %337 = vmatmul.mubr.f32.gmra.mrb[0].mxu0 %v196
      %v338 = vpop.f32.mrb[0].mxu0
      %v339 = vadd.f32 0.0, %v338
      %v340 = vpop.f32.mrb[0].mxu0
      %341 = vmatprep.mubr.f32.mxu0 0.0
      %342 = vmatmul.mubr.f32.gmra.mrb[0].mxu0 %v197
      %v343 = vpop.f32.mrb[0].mxu0
      %v344 = vadd.f32 0.0, %v343
      %v345 = vpop.f32.mrb[0].mxu0
      %346 = vmatprep.mubr.f32.mxu0 0.0
      %347 = vmatmul.mubr.f32.gmra.mrb[0].mxu0 %v198
      %v348 = vpop.f32.mrb[0].mxu0
      %v349 = vadd.f32 0.0, %v348
      %v350 = vpop.f32.mrb[0].mxu0
      %351 = vmatprep.mubr.f32.mxu0 0.0
      %352 = vmatmul.mubr.f32.gmra.mrb[0].mxu0 %v199
      %v353 = vpop.f32.mrb[0].mxu0
      %v354 = vadd.f32 0.0, %v353
      %v355 = vpop.f32.mrb[0].mxu0
      %356 = vmatprep.mubr.f32.mxu0 0.0
      %357 = vmatmul.mubr.f32.gmra.mrb[0].mxu0 %v200
      %v358 = vpop.f32.mrb[0].mxu0
      %v359 = vadd.f32 0.0, %v358
      %v360 = vpop.f32.mrb[0].mxu0
      %361 = vdwg.mxu0
      %362 = vst [vmem:[%s179] sm:$0xff] %v284
      %363 = vst [vmem:[%s179 + $0x8] sm:$0xff] %v289
      %364 = vst [vmem:[%s179 + $0x10] sm:$0xff] %v294
      %365 = vst [vmem:[%s179 + $0x18] sm:$0xff] %v299
      %366 = vst [vmem:[%s179 + $0x20] sm:$0xff] %v304
      %367 = vst [vmem:[%s179 + $0x28] sm:$0xff] %v309
      %368 = vst [vmem:[%s179 + $0x30] sm:$0xff] %v314
      %369 = vst [vmem:[%s179 + $0x38] sm:$0xff] %v319
      %370 = vst [vmem:[%s179 + $0x40] sm:$0xff] %v324
      %371 = vst [vmem:[%s179 + $0x48] sm:$0xff] %v329
      %372 = vst [vmem:[%s179 + $0x50] sm:$0xff] %v334
      %373 = vst [vmem:[%s179 + $0x58] sm:$0xff] %v339
      %374 = vst [vmem:[%s179 + $0x60] sm:$0xff] %v344
      %375 = vst [vmem:[%s179 + $0x68] sm:$0xff] %v349
      %376 = vst [vmem:[%s179 + $0x70] sm:$0xff] %v354
      %377 = vst [vmem:[%s179 + $0x78] sm:$0xff] %v359
      %v378 = vadd.f32 %v284, %v289
      %v379 = vadd.f32 %v378, %v294
      %v380 = vadd.f32 %v379, %v299
      %v381 = vadd.f32 %v380, %v304
      %v382 = vadd.f32 %v381, %v309
      %v383 = vadd.f32 %v382, %v314
      %v384 = vadd.f32 %v383, %v319
      %v385 = vadd.f32 %v384, %v324
      %v386 = vadd.f32 %v385, %v329
      %v387 = vadd.f32 %v386, %v334
      %v388 = vadd.f32 %v387, %v339
      %v389 = vadd.f32 %v388, %v344
      %v390 = vadd.f32 %v389, %v349
      %v391 = vadd.f32 %v390, %v354
      %v392 = vadd.f32 %v391, %v359
      %v393 = vrot.slane %v392, 4
      %v394 = vadd.f32 %v392, %v393
      %v395 = vrot.slane %v394, 2
      %v396 = vadd.f32 %v394, %v395
      %v397 = vrot.slane %v396, 1
      %v398 = vadd.f32 %v396, %v397
      %v399 = vmul.f32 %v284, %v284
      %v400 = vmul.f32 %v289, %v289
      %v401 = vmul.f32 %v294, %v294
      %v402 = vmul.f32 %v299, %v299
      %v403 = vmul.f32 %v304, %v304
      %v404 = vmul.f32 %v309, %v309
      %v405 = vmul.f32 %v314, %v314
      %v406 = vmul.f32 %v319, %v319
      %v407 = vmul.f32 %v324, %v324
      %v408 = vmul.f32 %v329, %v329
      %v409 = vmul.f32 %v334, %v334
      %v410 = vmul.f32 %v339, %v339
      %v411 = vmul.f32 %v344, %v344
      %v412 = vmul.f32 %v349, %v349
      %v413 = vmul.f32 %v354, %v354
      %v414 = vmul.f32 %v359, %v359
      %v415 = vadd.f32 %v399, %v400
      %v416 = vadd.f32 %v415, %v401
      %v417 = vadd.f32 %v416, %v402
      %v418 = vadd.f32 %v417, %v403
      %v419 = vadd.f32 %v418, %v404
      %v420 = vadd.f32 %v419, %v405
      %v421 = vadd.f32 %v420, %v406
      %v422 = vadd.f32 %v421, %v407
      %v423 = vadd.f32 %v422, %v408
      %v424 = vadd.f32 %v423, %v409
      %v425 = vadd.f32 %v424, %v410
      %v426 = vadd.f32 %v425, %v411
      %v427 = vadd.f32 %v426, %v412
      %v428 = vadd.f32 %v427, %v413
      %v429 = vadd.f32 %v428, %v414
      %v430 = vrot.slane %v429, 4
      %v431 = vadd.f32 %v429, %v430
      %v432 = vrot.slane %v431, 2
      %v433 = vadd.f32 %v431, %v432
      %v434 = vrot.slane %v433, 1
      %v435 = vadd.f32 %v433, %v434
      %vm436 = vcmask 1040384
      %v437 = vsel %vm436, %v398, %v435
      %438 = vst [vmem:[%s184] sm:$0x3] %v437
      %s439 = smul.u32 16, %s15
      %p440 = scmp.lt.s32.totalorder %s439, 63
      %s441 = scalar_select %p440, %s439, 63
      %s442 = smul.addr %s441, 8
      %s443 = scalar_lea.vmem %s2, %s442
      %p444 = scmp.lt.s32.totalorder %s15, 3
      %s445 = scalar_select %p444, %s15, 3
      %s446 = smul.addr %s445, 2
      %s447 = scalar_lea.vmem %s3, %s446
      // Predicated region
      $region29: #{bottleneck_forward.5} parent=27 // pred_check
        %p448 = pneg %p80
      $region30: #{bottleneck_forward.5} parent=27 // pred_check_branch
        %450 = sbr.rel (%p448) target = $region32
      $region31: #{bottleneck_forward.5} parent=27 // pred_region
        %s451 = smul.u32 16, %s15
      $region32: #{bottleneck_forward.5} parent=27 // pred_fallthru
        _
      // Predicated region
      $region33: #{bottleneck_forward.5} parent=27 // pred_check
        %p452 = pneg %p106
      $region34: #{bottleneck_forward.5} parent=27 // pred_check_branch
        %454 = sbr.rel (%p452) target = $region36
      $region35: #{bottleneck_forward.5} parent=27 // pred_region
        _
      $region36: #{bottleneck_forward.5} parent=27 // pred_fallthru
        _
    $region28: #{bottleneck_forward.5} parent=5 // pred_fallthru
      _
    %p455 = scmp.le.s32.totalorder 2, %s10
    // Predicated region
    $region37: #{bottleneck_forward.5} parent=5 // pred_check
      %p456 = pneg %p455
    $region38: #{bottleneck_forward.5} parent=5 // pred_check_branch
      %458 = sbr.rel (%p456) target = $region40
    $region39: #{bottleneck_forward.5} parent=5 // pred_region
      %s459 = ssub.s32 %s10, 2
      // Predicated region
      $region41: #{bottleneck_forward.5} parent=39 // pred_check
        %p460 = pneg %p86
      $region42: #{bottleneck_forward.5} parent=39 // pred_check_branch
        %462 = sbr.rel (%p460) target = $region44
      $region43: #{bottleneck_forward.5} parent=39 // pred_region
        %s463 = smul.u32 16, %s16
        %p464 = scmp.lt.s32.totalorder %s463, 63
        %s465 = scalar_select %p464, %s463, 63
        %s466 = smul.addr %s465, 8
        %s467 = scalar_lea.vmem %s2, %s466
      $region44: #{bottleneck_forward.5} parent=39 // pred_fallthru
        _
      // Predicated region
      $region45: #{bottleneck_forward.5} parent=39 // pred_check
        %p468 = pneg %p112
      $region46: #{bottleneck_forward.5} parent=39 // pred_check_branch
        %470 = sbr.rel (%p468) target = $region48
      $region47: #{bottleneck_forward.5} parent=39 // pred_region
        %p471 = scmp.lt.s32.totalorder %s16, 3
        %s472 = scalar_select %p471, %s16, 3
        %s473 = smul.addr %s472, 2
        %s474 = scalar_lea.vmem %s3, %s473
      $region48: #{bottleneck_forward.5} parent=39 // pred_fallthru
        _
    $region40: #{bottleneck_forward.5} parent=5 // pred_fallthru
      _
  $region6: #{bottleneck_forward.5} parent=0 // loop_footer
    %s14 = sadd.s32 1, %s10
  $region7: #{bottleneck_forward.5} parent=0 // loop_footer_branch
    %9 = sbr.rel target = $region3
  $region8: #{bottleneck_forward.5} parent=0 // loop_exit
    _

// kernel: bottleneck_forward.7
$region0: #{bottleneck_forward.7}
  #allocation0 [shape = 'u32[]', space=smem, size = 0x4, offset = 0x4, fixed_abs, tag = 'smem constant byte address 0x4 - core index']
  #allocation1 [shape = 'u32[144,128]{1,0:T(1,128)}', space=vmem, size = 0x12000, scoped, tag = 'internal scratch']
  %s0 = inlined_call_operand.vmem [shape: f32[512,128], index: 0, kind: input, shape index: {}]
  %s1 = inlined_call_operand.vmem [shape: f32[1,128], index: 1, kind: input, shape index: {}]
  %s2 = inlined_call_operand.vmem [shape: f32[1,128], index: 2, kind: input, shape index: {}]
  %s3 = inlined_call_operand.vmem [shape: f32[128,128], index: 3, kind: input, shape index: {}]
  %s4 = inlined_call_operand.vmem [shape: f32[512,128], index: 4, kind: output, shape index: {0}]
  %s5 = inlined_call_operand.vmem [shape: f32[4,2,128], index: 5, kind: output, shape index: {1}]
  %6 = xla_tuple %s4, %s5
  %s7 = sld [smem:[#allocation0]]
  $region57: #{bottleneck_forward.7} parent=0
    _
  %s9 = ssub.s32 1, %s7
  %s10 = scalar_select 0, %s9, %s7
  loop: start=0, step=1, limit=6
  $region2: #{bottleneck_forward.7} parent=0 // loop_pre_header
    _
  $region3: #{bottleneck_forward.7} parent=0 // loop_header
    %s12 = sphi 0, %s16
    %p13 = scmp.ge.s32.totalorder %s12, 6
    %s22 = sphi 0, %s24
    %s25 = sphi 0, %s22
    %s26 = sphi 0, %s25
    %s42 = sphi 0, %s26
    %s46 = sphi 0, %s46
    %s48 = sphi 0, %s46
    %s49 = sphi 0, %s48
    %s63 = sphi 0, %s49
    %s67 = sphi 0, %s67
    %s69 = sphi 0, %s67
    %s70 = sphi 0, %s69
    %s84 = sphi 0, %s70
    %s88 = sphi 0, %s88
    %s90 = sphi 0, %s88
    %s91 = sphi 0, %s90
    %s105 = sphi 0, %s91
    %s111 = sphi 0, %s113
    %s114 = sphi 0, %s111
    %s115 = sphi 0, %s114
    %s131 = sphi 0, %s115
    %s137 = sphi 0, %s139
    %s140 = sphi 0, %s137
    %s141 = sphi 0, %s140
    %s157 = sphi 0, %s141
  $region4: #{bottleneck_forward.7} parent=0 // loop_header_branch
    %15 = sbr.rel (%p13) target = $region8
  $region5: #{bottleneck_forward.7} parent=0 // loop_body
    %s17 = ssub.s32 %s12, 1
    %s18 = ssub.s32 %s12, 2
    %s19 = sadd.s32 %s12, 1
    %s20 = ssub.s32 %s12, %s19
    %p21 = scmp.eq.s32.totalorder %s20, 0
    %s23 = sadd.s32 %s22, 1
    %s24 = scalar_select %p21, %s22, %s23
    %p27 = pneg %p21
    %p28 = scmp.eq.s32.totalorder %s12, 3
    %p29 = por %p27, %p28
    %p30 = scmp.ne.s32.totalorder %s22, %s25
    %p31 = scmp.eq.s32.totalorder %s12, 0
    %p32 = por %p30, %p31
    %p33 = scmp.ne.s32.totalorder %s22, %s25
    %p34 = scmp.eq.s32.totalorder %s17, 3
    %p35 = por %p33, %p34
    %p36 = scmp.ne.s32.totalorder %s25, %s26
    %p37 = scmp.eq.s32.totalorder %s17, 0
    %p38 = por %p36, %p37
    %p39 = scmp.ne.s32.totalorder %s25, %s26
    %p40 = scmp.eq.s32.totalorder %s18, 3
    %p41 = por %p39, %p40
    %p43 = scmp.ne.s32.totalorder %s26, %s42
    %p44 = scmp.eq.s32.totalorder %s18, 0
    %p45 = por %p43, %p44
    %s47 = sadd.s32 %s46, 1
    %p50 = scmp.eq.s32.totalorder %s12, 3
    %p51 = scmp.ne.s32.totalorder %s46, %s48
    %p52 = scmp.eq.s32.totalorder %s12, 0
    %p53 = por %p51, %p52
    %p54 = scmp.ne.s32.totalorder %s46, %s48
    %p55 = scmp.eq.s32.totalorder %s17, 3
    %p56 = por %p54, %p55
    %p57 = scmp.ne.s32.totalorder %s48, %s49
    %p58 = scmp.eq.s32.totalorder %s17, 0
    %p59 = por %p57, %p58
    %p60 = scmp.ne.s32.totalorder %s48, %s49
    %p61 = scmp.eq.s32.totalorder %s18, 3
    %p62 = por %p60, %p61
    %p64 = scmp.ne.s32.totalorder %s49, %s63
    %p65 = scmp.eq.s32.totalorder %s18, 0
    %p66 = por %p64, %p65
    %s68 = sadd.s32 %s67, 1
    %p71 = scmp.eq.s32.totalorder %s12, 3
    %p72 = scmp.ne.s32.totalorder %s67, %s69
    %p73 = scmp.eq.s32.totalorder %s12, 0
    %p74 = por %p72, %p73
    %p75 = scmp.ne.s32.totalorder %s67, %s69
    %p76 = scmp.eq.s32.totalorder %s17, 3
    %p77 = por %p75, %p76
    %p78 = scmp.ne.s32.totalorder %s69, %s70
    %p79 = scmp.eq.s32.totalorder %s17, 0
    %p80 = por %p78, %p79
    %p81 = scmp.ne.s32.totalorder %s69, %s70
    %p82 = scmp.eq.s32.totalorder %s18, 3
    %p83 = por %p81, %p82
    %p85 = scmp.ne.s32.totalorder %s70, %s84
    %p86 = scmp.eq.s32.totalorder %s18, 0
    %p87 = por %p85, %p86
    %s89 = sadd.s32 %s88, 1
    %p92 = scmp.eq.s32.totalorder %s12, 3
    %p93 = scmp.ne.s32.totalorder %s88, %s90
    %p94 = scmp.eq.s32.totalorder %s12, 0
    %p95 = por %p93, %p94
    %p96 = scmp.ne.s32.totalorder %s88, %s90
    %p97 = scmp.eq.s32.totalorder %s17, 3
    %p98 = por %p96, %p97
    %p99 = scmp.ne.s32.totalorder %s90, %s91
    %p100 = scmp.eq.s32.totalorder %s17, 0
    %p101 = por %p99, %p100
    %p102 = scmp.ne.s32.totalorder %s90, %s91
    %p103 = scmp.eq.s32.totalorder %s18, 3
    %p104 = por %p102, %p103
    %p106 = scmp.ne.s32.totalorder %s91, %s105
    %p107 = scmp.eq.s32.totalorder %s18, 0
    %p108 = por %p106, %p107
    %s109 = ssub.s32 %s12, %s19
    %p110 = scmp.eq.s32.totalorder %s109, 0
    %s112 = sadd.s32 %s111, 1
    %s113 = scalar_select %p110, %s111, %s112
    %p116 = pneg %p110
    %p117 = scmp.eq.s32.totalorder %s12, 3
    %p118 = por %p116, %p117
    %p119 = scmp.ne.s32.totalorder %s111, %s114
    %p120 = scmp.eq.s32.totalorder %s12, 0
    %p121 = por %p119, %p120
    %p122 = scmp.ne.s32.totalorder %s111, %s114
    %p123 = scmp.eq.s32.totalorder %s17, 3
    %p124 = por %p122, %p123
    %p125 = scmp.ne.s32.totalorder %s114, %s115
    %p126 = scmp.eq.s32.totalorder %s17, 0
    %p127 = por %p125, %p126
    %p128 = scmp.ne.s32.totalorder %s114, %s115
    %p129 = scmp.eq.s32.totalorder %s18, 3
    %p130 = por %p128, %p129
    %p132 = scmp.ne.s32.totalorder %s115, %s131
    %p133 = scmp.eq.s32.totalorder %s18, 0
    %p134 = por %p132, %p133
    %s135 = ssub.s32 %s12, %s19
    %p136 = scmp.eq.s32.totalorder %s135, 0
    %s138 = sadd.s32 %s137, 1
    %s139 = scalar_select %p136, %s137, %s138
    %p142 = pneg %p136
    %p143 = scmp.eq.s32.totalorder %s12, 3
    %p144 = por %p142, %p143
    %p145 = scmp.ne.s32.totalorder %s137, %s140
    %p146 = scmp.eq.s32.totalorder %s12, 0
    %p147 = por %p145, %p146
    %p148 = scmp.ne.s32.totalorder %s137, %s140
    %p149 = scmp.eq.s32.totalorder %s17, 3
    %p150 = por %p148, %p149
    %p151 = scmp.ne.s32.totalorder %s140, %s141
    %p152 = scmp.eq.s32.totalorder %s17, 0
    %p153 = por %p151, %p152
    %p154 = scmp.ne.s32.totalorder %s140, %s141
    %p155 = scmp.eq.s32.totalorder %s18, 3
    %p156 = por %p154, %p155
    %p158 = scmp.ne.s32.totalorder %s141, %s157
    %p159 = scmp.eq.s32.totalorder %s18, 0
    %p160 = por %p158, %p159
    %p161 = scmp.le.s32.totalorder 1, %s12
    %p162 = scmp.lt.s32.totalorder %s12, 5
    %p163 = pnand %p161, %p162
    %p164 = pneg %p163
    // Predicated region
    $region9: #{bottleneck_forward.7} parent=5 // pred_check
      _
    $region10: #{bottleneck_forward.7} parent=5 // pred_check_branch
      %166 = sbr.rel (%p163) target = $region12
    $region11: #{bottleneck_forward.7} parent=5 // pred_region
      %s167 = ssub.s32 %s12, 1
      // Predicated region
      $region13: #{bottleneck_forward.7} parent=11 // pred_check
        %p168 = pneg %p59
      $region14: #{bottleneck_forward.7} parent=11 // pred_check_branch
        %170 = sbr.rel (%p168) target = $region16
      $region15: #{bottleneck_forward.7} parent=11 // pred_region
        _
      $region16: #{bottleneck_forward.7} parent=11 // pred_fallthru
        _
      // Predicated region
      $region17: #{bottleneck_forward.7} parent=11 // pred_check
        %p171 = pneg %p80
      $region18: #{bottleneck_forward.7} parent=11 // pred_check_branch
        %173 = sbr.rel (%p171) target = $region20
      $region19: #{bottleneck_forward.7} parent=11 // pred_region
        _
      $region20: #{bottleneck_forward.7} parent=11 // pred_fallthru
        _
      // Predicated region
      $region21: #{bottleneck_forward.7} parent=11 // pred_check
        %p174 = pneg %p101
      $region22: #{bottleneck_forward.7} parent=11 // pred_check_branch
        %176 = sbr.rel (%p174) target = $region24
      $region23: #{bottleneck_forward.7} parent=11 // pred_region
        _
      $region24: #{bottleneck_forward.7} parent=11 // pred_fallthru
        _
    $region12: #{bottleneck_forward.7} parent=5 // pred_fallthru
      _
    %p177 = scmp.lt.s32.totalorder %s12, 4
    // Predicated region
    $region25: #{bottleneck_forward.7} parent=5 // pred_check
      %p178 = pneg %p177
    $region26: #{bottleneck_forward.7} parent=5 // pred_check_branch
      %180 = sbr.rel (%p178) target = $region28
    $region27: #{bottleneck_forward.7} parent=5 // pred_region
      // Predicated region
      $region29: #{bottleneck_forward.7} parent=27 // pred_check
        %p181 = pneg %p32
      $region30: #{bottleneck_forward.7} parent=27 // pred_check_branch
        %183 = sbr.rel (%p181) target = $region32
      $region31: #{bottleneck_forward.7} parent=27 // pred_region
        %s184 = smul.u32 16, %s12
        %p185 = scmp.lt.s32.totalorder %s184, 63
        %s186 = scalar_select %p185, %s184, 63
        %s187 = smul.addr %s186, 8
        %s188 = scalar_lea.vmem %s0, %s187
        %s189 = smul.u32 16, %s12
      $region32: #{bottleneck_forward.7} parent=27 // pred_fallthru
        _
    $region28: #{bottleneck_forward.7} parent=5 // pred_fallthru
      _
    %p190 = scmp.le.s32.totalorder 1, %s12
    %p191 = scmp.lt.s32.totalorder %s12, 5
    %p192 = pnand %p190, %p191
    %p193 = pneg %p192
    // Predicated region
    $region33: #{bottleneck_forward.7} parent=5 // pred_check
      _
    $region34: #{bottleneck_forward.7} parent=5 // pred_check_branch
      %195 = sbr.rel (%p192) target = $region36
    $region35: #{bottleneck_forward.7} parent=5 // pred_region
      %s196 = ssub.s32 %s12, 1
      %s197 = smul.u32 16, %s17
      %p198 = scmp.lt.s32.totalorder %s197, 63
      %s199 = scalar_select %p198, %s197, 63
      %s200 = smul.addr %s199, 8
      %s201 = scalar_lea.vmem %s0, %s200
      %p202 = pneg %p38
      %p203 = pneg %p35
      %p204 = pneg %p59
      %p205 = pneg %p56
      %p206 = pneg %p80
      %p207 = pneg %p77
      %p208 = pneg %p101
      %p209 = pneg %p98
      %p210 = pneg %p127
      %p211 = pneg %p124
      %s212 = smul.u32 16, %s17
      %p213 = scmp.lt.s32.totalorder %s212, 63
      %s214 = scalar_select %p213, %s212, 63
      %s215 = smul.addr %s214, 8
      %s216 = scalar_lea.vmem %s4, %s215
      %p217 = pneg %p153
      %p218 = pneg %p150
      %p219 = scmp.lt.s32.totalorder %s17, 3
      %s220 = scalar_select %p219, %s17, 3
      %s221 = smul.addr %s220, 2
      %s222 = scalar_lea.vmem %s5, %s221
      %s223 = smul.u32 16, %s17
      %p224 = scmp.lt.s32.totalorder %s223, 63
      %s225 = scalar_select %p224, %s223, 63
      %s226 = smul.addr %s225, 8
      %s227 = scalar_lea.vmem %s0, %s226
      %s228 = smul.u32 16, %s17
      %s229 = smul.u32 16, %s17
      %p230 = scmp.lt.s32.totalorder %s229, 63
      %s231 = scalar_select %p230, %s229, 63
      %s232 = smul.addr %s231, 8
      %s233 = scalar_lea.vmem %s4, %s232
      %s234 = smul.u32 16, %s17
      %p235 = scmp.lt.s32.totalorder %s17, 3
      %s236 = scalar_select %p235, %s17, 3
      %s237 = smul.addr %s236, 2
      %s238 = scalar_lea.vmem %s5, %s237
      %v239 = vld [vmem:[%s227] sm:$0xff]
      %v240 = vld [vmem:[%s227 + $0x8] sm:$0xff]
      %v241 = vld [vmem:[%s227 + $0x10] sm:$0xff]
      %v242 = vld [vmem:[%s227 + $0x18] sm:$0xff]
      %v243 = vld [vmem:[%s227 + $0x20] sm:$0xff]
      %v244 = vld [vmem:[%s227 + $0x28] sm:$0xff]
      %v245 = vld [vmem:[%s227 + $0x30] sm:$0xff]
      %v246 = vld [vmem:[%s227 + $0x38] sm:$0xff]
      %v247 = vld [vmem:[%s227 + $0x40] sm:$0xff]
      %v248 = vld [vmem:[%s227 + $0x48] sm:$0xff]
      %v249 = vld [vmem:[%s227 + $0x50] sm:$0xff]
      %v250 = vld [vmem:[%s227 + $0x58] sm:$0xff]
      %v251 = vld [vmem:[%s227 + $0x60] sm:$0xff]
      %v252 = vld [vmem:[%s227 + $0x68] sm:$0xff]
      %v253 = vld [vmem:[%s227 + $0x70] sm:$0xff]
      %v254 = vld [vmem:[%s227 + $0x78] sm:$0xff]
      %v255 = vld [vmem:[%s1] sm:$0x1]
      %v257 = vlaneseq
      %v258 = vshrl.u32 %v257, 7
      %v259 = vsub.s32 0, %v258
      %v260 = vrot.slane %v255, %v259
      %v262 = vmul.f32 %v239, %v260
      %v263 = vmul.f32 %v240, %v260
      %v264 = vmul.f32 %v241, %v260
      %v265 = vmul.f32 %v242, %v260
      %v266 = vmul.f32 %v243, %v260
      %v267 = vmul.f32 %v244, %v260
      %v268 = vmul.f32 %v245, %v260
      %v269 = vmul.f32 %v246, %v260
      %v270 = vmul.f32 %v247, %v260
      %v271 = vmul.f32 %v248, %v260
      %v272 = vmul.f32 %v249, %v260
      %v273 = vmul.f32 %v250, %v260
      %v274 = vmul.f32 %v251, %v260
      %v275 = vmul.f32 %v252, %v260
      %v276 = vmul.f32 %v253, %v260
      %v277 = vmul.f32 %v254, %v260
      %v278 = vld [vmem:[%s2] sm:$0x1]
      %v280 = vlaneseq
      %v281 = vshrl.u32 %v280, 7
      %v282 = vsub.s32 0, %v281
      %v283 = vrot.slane %v278, %v282
      %v285 = vadd.f32 %v262, %v283
      %v286 = vadd.f32 %v263, %v283
      %v287 = vadd.f32 %v264, %v283
      %v288 = vadd.f32 %v265, %v283
      %v289 = vadd.f32 %v266, %v283
      %v290 = vadd.f32 %v267, %v283
      %v291 = vadd.f32 %v268, %v283
      %v292 = vadd.f32 %v269, %v283
      %v293 = vadd.f32 %v270, %v283
      %v294 = vadd.f32 %v271, %v283
      %v295 = vadd.f32 %v272, %v283
      %v296 = vadd.f32 %v273, %v283
      %v297 = vadd.f32 %v274, %v283
      %v298 = vadd.f32 %v275, %v283
      %v299 = vadd.f32 %v276, %v283
      %v300 = vadd.f32 %v277, %v283
      %v301 = vmax.f32 %v285, 0.0
      %v302 = vmax.f32 %v286, 0.0
      %v303 = vmax.f32 %v287, 0.0
      %v304 = vmax.f32 %v288, 0.0
      %v305 = vmax.f32 %v289, 0.0
      %v306 = vmax.f32 %v290, 0.0
      %v307 = vmax.f32 %v291, 0.0
      %v308 = vmax.f32 %v292, 0.0
      %v309 = vmax.f32 %v293, 0.0
      %v310 = vmax.f32 %v294, 0.0
      %v311 = vmax.f32 %v295, 0.0
      %v312 = vmax.f32 %v296, 0.0
      %v313 = vmax.f32 %v297, 0.0
      %v314 = vmax.f32 %v298, 0.0
      %v315 = vmax.f32 %v299, 0.0
      %v316 = vmax.f32 %v300, 0.0
      %v317 = vld [vmem:[%s3] sm:$0xff]
      %v318 = vld [vmem:[%s3 + $0x8] sm:$0xff]
      %v319 = vld [vmem:[%s3 + $0x10] sm:$0xff]
      %v320 = vld [vmem:[%s3 + $0x18] sm:$0xff]
      %v321 = vld [vmem:[%s3 + $0x20] sm:$0xff]
      %v322 = vld [vmem:[%s3 + $0x28] sm:$0xff]
      %v323 = vld [vmem:[%s3 + $0x30] sm:$0xff]
      %v324 = vld [vmem:[%s3 + $0x38] sm:$0xff]
      %v325 = vld [vmem:[%s3 + $0x40] sm:$0xff]
      %v326 = vld [vmem:[%s3 + $0x48] sm:$0xff]
      %v327 = vld [vmem:[%s3 + $0x50] sm:$0xff]
      %v328 = vld [vmem:[%s3 + $0x58] sm:$0xff]
      %v329 = vld [vmem:[%s3 + $0x60] sm:$0xff]
      %v330 = vld [vmem:[%s3 + $0x68] sm:$0xff]
      %v331 = vld [vmem:[%s3 + $0x70] sm:$0xff]
      %v332 = vld [vmem:[%s3 + $0x78] sm:$0xff]
      %333 = vmatprep.subr.mxu0 0.0
      %334 = vmatpush1.msra.mxu0 %v317
      %335 = vmatprep.subr.mxu0 0.0
      %336 = vmatpush1.msra.mxu0 %v318
      %337 = vmatprep.subr.mxu0 0.0
      %338 = vmatpush1.msra.mxu0 %v319
      %339 = vmatprep.subr.mxu0 0.0
      %340 = vmatpush1.msra.mxu0 %v320
      %341 = vmatprep.subr.mxu0 0.0
      %342 = vmatpush1.msra.mxu0 %v321
      %343 = vmatprep.subr.mxu0 0.0
      %344 = vmatpush1.msra.mxu0 %v322
      %345 = vmatprep.subr.mxu0 0.0
      %346 = vmatpush1.msra.mxu0 %v323
      %347 = vmatprep.subr.mxu0 0.0
      %348 = vmatpush1.msra.mxu0 %v324
      %349 = vmatprep.subr.mxu0 0.0
      %350 = vmatpush1.msra.mxu0 %v325
      %351 = vmatprep.subr.mxu0 0.0
      %352 = vmatpush1.msra.mxu0 %v326
      %353 = vmatprep.subr.mxu0 0.0
      %354 = vmatpush1.msra.mxu0 %v327
      %355 = vmatprep.subr.mxu0 0.0
      %356 = vmatpush1.msra.mxu0 %v328
      %357 = vmatprep.subr.mxu0 0.0
      %358 = vmatpush1.msra.mxu0 %v329
      %359 = vmatprep.subr.mxu0 0.0
      %360 = vmatpush1.msra.mxu0 %v330
      %361 = vmatprep.subr.mxu0 0.0
      %362 = vmatpush1.msra.mxu0 %v331
      %363 = vmatprep.subr.mxu0 0.0
      %364 = vmatpush1.msra.mxu0 %v332
      %365 = vmatprep.subr.mxu0 0.0
      %366 = vmatpush1.msra.mxu0 0.0
      %367 = vmatprep.subr.mxu0 0.0
      %368 = vmatpush1.msra.mxu0 0.0
      %369 = vmatprep.subr.mxu0 0.0
      %370 = vmatpush1.msra.mxu0 0.0
      %371 = vmatprep.subr.mxu0 0.0
      %372 = vmatpush1.msra.mxu0 0.0
      %373 = vmatprep.subr.mxu0 0.0
      %374 = vmatpush1.msra.mxu0 0.0
      %375 = vmatprep.subr.mxu0 0.0
      %376 = vmatpush1.msra.mxu0 0.0
      %377 = vmatprep.subr.mxu0 0.0
      %378 = vmatpush1.msra.mxu0 0.0
      %379 = vmatprep.subr.mxu0 0.0
      %380 = vmatpush1.msra.mxu0 0.0
      %381 = vmatprep.subr.mxu0 0.0
      %382 = vmatpush1.msra.mxu0 0.0
      %383 = vmatprep.subr.mxu0 0.0
      %384 = vmatpush1.msra.mxu0 0.0
      %385 = vmatprep.subr.mxu0 0.0
      %386 = vmatpush1.msra.mxu0 0.0
      %387 = vmatprep.subr.mxu0 0.0
      %388 = vmatpush1.msra.mxu0 0.0
      %389 = vmatprep.subr.mxu0 0.0
      %390 = vmatpush1.msra.mxu0 0.0
      %391 = vmatprep.subr.mxu0 0.0
      %392 = vmatpush1.msra.mxu0 0.0
      %393 = vmatprep.subr.mxu0 0.0
      %394 = vmatpush1.msra.mxu0 0.0
      %395 = vmatprep.subr.mxu0 0.0
      %396 = vmatpush1.msra.mxu0 0.0
      %397 = vmatprep.mubr.f32.mxu0 0.0
      %398 = vmatmul.mubr.f32.gmra.mrb[0].mxu0 %v301
      %v399 = vpop.f32.mrb[0].mxu0
      %v400 = vadd.f32 0.0, %v399
      %v401 = vpop.f32.mrb[0].mxu0
      %402 = vmatprep.mubr.f32.mxu0 0.0
      %403 = vmatmul.mubr.f32.gmra.mrb[0].mxu0 %v302
      %v404 = vpop.f32.mrb[0].mxu0
      %v405 = vadd.f32 0.0, %v404
      %v406 = vpop.f32.mrb[0].mxu0
      %407 = vmatprep.mubr.f32.mxu0 0.0
      %408 = vmatmul.mubr.f32.gmra.mrb[0].mxu0 %v303
      %v409 = vpop.f32.mrb[0].mxu0
      %v410 = vadd.f32 0.0, %v409
      %v411 = vpop.f32.mrb[0].mxu0
      %412 = vmatprep.mubr.f32.mxu0 0.0
      %413 = vmatmul.mubr.f32.gmra.mrb[0].mxu0 %v304
      %v414 = vpop.f32.mrb[0].mxu0
      %v415 = vadd.f32 0.0, %v414
      %v416 = vpop.f32.mrb[0].mxu0
      %417 = vmatprep.mubr.f32.mxu0 0.0
      %418 = vmatmul.mubr.f32.gmra.mrb[0].mxu0 %v305
      %v419 = vpop.f32.mrb[0].mxu0
      %v420 = vadd.f32 0.0, %v419
      %v421 = vpop.f32.mrb[0].mxu0
      %422 = vmatprep.mubr.f32.mxu0 0.0
      %423 = vmatmul.mubr.f32.gmra.mrb[0].mxu0 %v306
      %v424 = vpop.f32.mrb[0].mxu0
      %v425 = vadd.f32 0.0, %v424
      %v426 = vpop.f32.mrb[0].mxu0
      %427 = vmatprep.mubr.f32.mxu0 0.0
      %428 = vmatmul.mubr.f32.gmra.mrb[0].mxu0 %v307
      %v429 = vpop.f32.mrb[0].mxu0
      %v430 = vadd.f32 0.0, %v429
      %v431 = vpop.f32.mrb[0].mxu0
      %432 = vmatprep.mubr.f32.mxu0 0.0
      %433 = vmatmul.mubr.f32.gmra.mrb[0].mxu0 %v308
      %v434 = vpop.f32.mrb[0].mxu0
      %v435 = vadd.f32 0.0, %v434
      %v436 = vpop.f32.mrb[0].mxu0
      %437 = vmatprep.mubr.f32.mxu0 0.0
      %438 = vmatmul.mubr.f32.gmra.mrb[0].mxu0 %v309
      %v439 = vpop.f32.mrb[0].mxu0
      %v440 = vadd.f32 0.0, %v439
      %v441 = vpop.f32.mrb[0].mxu0
      %442 = vmatprep.mubr.f32.mxu0 0.0
      %443 = vmatmul.mubr.f32.gmra.mrb[0].mxu0 %v310
      %v444 = vpop.f32.mrb[0].mxu0
      %v445 = vadd.f32 0.0, %v444
      %v446 = vpop.f32.mrb[0].mxu0
      %447 = vmatprep.mubr.f32.mxu0 0.0
      %448 = vmatmul.mubr.f32.gmra.mrb[0].mxu0 %v311
      %v449 = vpop.f32.mrb[0].mxu0
      %v450 = vadd.f32 0.0, %v449
      %v451 = vpop.f32.mrb[0].mxu0
      %452 = vmatprep.mubr.f32.mxu0 0.0
      %453 = vmatmul.mubr.f32.gmra.mrb[0].mxu0 %v312
      %v454 = vpop.f32.mrb[0].mxu0
      %v455 = vadd.f32 0.0, %v454
      %v456 = vpop.f32.mrb[0].mxu0
      %457 = vmatprep.mubr.f32.mxu0 0.0
      %458 = vmatmul.mubr.f32.gmra.mrb[0].mxu0 %v313
      %v459 = vpop.f32.mrb[0].mxu0
      %v460 = vadd.f32 0.0, %v459
      %v461 = vpop.f32.mrb[0].mxu0
      %462 = vmatprep.mubr.f32.mxu0 0.0
      %463 = vmatmul.mubr.f32.gmra.mrb[0].mxu0 %v314
      %v464 = vpop.f32.mrb[0].mxu0
      %v465 = vadd.f32 0.0, %v464
      %v466 = vpop.f32.mrb[0].mxu0
      %467 = vmatprep.mubr.f32.mxu0 0.0
      %468 = vmatmul.mubr.f32.gmra.mrb[0].mxu0 %v315
      %v469 = vpop.f32.mrb[0].mxu0
      %v470 = vadd.f32 0.0, %v469
      %v471 = vpop.f32.mrb[0].mxu0
      %472 = vmatprep.mubr.f32.mxu0 0.0
      %473 = vmatmul.mubr.f32.gmra.mrb[0].mxu0 %v316
      %v474 = vpop.f32.mrb[0].mxu0
      %v475 = vadd.f32 0.0, %v474
      %v476 = vpop.f32.mrb[0].mxu0
      %477 = vdwg.mxu0
      %478 = vst [vmem:[%s233] sm:$0xff] %v400
      %479 = vst [vmem:[%s233 + $0x8] sm:$0xff] %v405
      %480 = vst [vmem:[%s233 + $0x10] sm:$0xff] %v410
      %481 = vst [vmem:[%s233 + $0x18] sm:$0xff] %v415
      %482 = vst [vmem:[%s233 + $0x20] sm:$0xff] %v420
      %483 = vst [vmem:[%s233 + $0x28] sm:$0xff] %v425
      %484 = vst [vmem:[%s233 + $0x30] sm:$0xff] %v430
      %485 = vst [vmem:[%s233 + $0x38] sm:$0xff] %v435
      %486 = vst [vmem:[%s233 + $0x40] sm:$0xff] %v440
      %487 = vst [vmem:[%s233 + $0x48] sm:$0xff] %v445
      %488 = vst [vmem:[%s233 + $0x50] sm:$0xff] %v450
      %489 = vst [vmem:[%s233 + $0x58] sm:$0xff] %v455
      %490 = vst [vmem:[%s233 + $0x60] sm:$0xff] %v460
      %491 = vst [vmem:[%s233 + $0x68] sm:$0xff] %v465
      %492 = vst [vmem:[%s233 + $0x70] sm:$0xff] %v470
      %493 = vst [vmem:[%s233 + $0x78] sm:$0xff] %v475
      %v494 = vadd.f32 %v400, %v405
      %v495 = vadd.f32 %v494, %v410
      %v496 = vadd.f32 %v495, %v415
      %v497 = vadd.f32 %v496, %v420
      %v498 = vadd.f32 %v497, %v425
      %v499 = vadd.f32 %v498, %v430
      %v500 = vadd.f32 %v499, %v435
      %v501 = vadd.f32 %v500, %v440
      %v502 = vadd.f32 %v501, %v445
      %v503 = vadd.f32 %v502, %v450
      %v504 = vadd.f32 %v503, %v455
      %v505 = vadd.f32 %v504, %v460
      %v506 = vadd.f32 %v505, %v465
      %v507 = vadd.f32 %v506, %v470
      %v508 = vadd.f32 %v507, %v475
      %v509 = vrot.slane %v508, 4
      %v510 = vadd.f32 %v508, %v509
      %v511 = vrot.slane %v510, 2
      %v512 = vadd.f32 %v510, %v511
      %v513 = vrot.slane %v512, 1
      %v514 = vadd.f32 %v512, %v513
      %v515 = vmul.f32 %v400, %v400
      %v516 = vmul.f32 %v405, %v405
      %v517 = vmul.f32 %v410, %v410
      %v518 = vmul.f32 %v415, %v415
      %v519 = vmul.f32 %v420, %v420
      %v520 = vmul.f32 %v425, %v425
      %v521 = vmul.f32 %v430, %v430
      %v522 = vmul.f32 %v435, %v435
      %v523 = vmul.f32 %v440, %v440
      %v524 = vmul.f32 %v445, %v445
      %v525 = vmul.f32 %v450, %v450
      %v526 = vmul.f32 %v455, %v455
      %v527 = vmul.f32 %v460, %v460
      %v528 = vmul.f32 %v465, %v465
      %v529 = vmul.f32 %v470, %v470
      %v530 = vmul.f32 %v475, %v475
      %v531 = vadd.f32 %v515, %v516
      %v532 = vadd.f32 %v531, %v517
      %v533 = vadd.f32 %v532, %v518
      %v534 = vadd.f32 %v533, %v519
      %v535 = vadd.f32 %v534, %v520
      %v536 = vadd.f32 %v535, %v521
      %v537 = vadd.f32 %v536, %v522
      %v538 = vadd.f32 %v537, %v523
      %v539 = vadd.f32 %v538, %v524
      %v540 = vadd.f32 %v539, %v525
      %v541 = vadd.f32 %v540, %v526
      %v542 = vadd.f32 %v541, %v527
      %v543 = vadd.f32 %v542, %v528
      %v544 = vadd.f32 %v543, %v529
      %v545 = vadd.f32 %v544, %v530
      %v546 = vrot.slane %v545, 4
      %v547 = vadd.f32 %v545, %v546
      %v548 = vrot.slane %v547, 2
      %v549 = vadd.f32 %v547, %v548
      %v550 = vrot.slane %v549, 1
      %v551 = vadd.f32 %v549, %v550
      %vm552 = vcmask 1040384
      %v553 = vsel %vm552, %v514, %v551
      %554 = vst [vmem:[%s238] sm:$0x3] %v553
      %s555 = smul.u32 16, %s17
      %p556 = scmp.lt.s32.totalorder %s555, 63
      %s557 = scalar_select %p556, %s555, 63
      %s558 = smul.addr %s557, 8
      %s559 = scalar_lea.vmem %s4, %s558
      %p560 = scmp.lt.s32.totalorder %s17, 3
      %s561 = scalar_select %p560, %s17, 3
      %s562 = smul.addr %s561, 2
      %s563 = scalar_lea.vmem %s5, %s562
      // Predicated region
      $region37: #{bottleneck_forward.7} parent=35 // pred_check
        %p564 = pneg %p124
      $region38: #{bottleneck_forward.7} parent=35 // pred_check_branch
        %566 = sbr.rel (%p564) target = $region40
      $region39: #{bottleneck_forward.7} parent=35 // pred_region
        %s567 = smul.u32 16, %s17
      $region40: #{bottleneck_forward.7} parent=35 // pred_fallthru
        _
      // Predicated region
      $region41: #{bottleneck_forward.7} parent=35 // pred_check
        %p568 = pneg %p150
      $region42: #{bottleneck_forward.7} parent=35 // pred_check_branch
        %570 = sbr.rel (%p568) target = $region44
      $region43: #{bottleneck_forward.7} parent=35 // pred_region
        _
      $region44: #{bottleneck_forward.7} parent=35 // pred_fallthru
        _
    $region36: #{bottleneck_forward.7} parent=5 // pred_fallthru
      _
    %p571 = scmp.le.s32.totalorder 2, %s12
    // Predicated region
    $region45: #{bottleneck_forward.7} parent=5 // pred_check
      %p572 = pneg %p571
    $region46: #{bottleneck_forward.7} parent=5 // pred_check_branch
      %574 = sbr.rel (%p572) target = $region48
    $region47: #{bottleneck_forward.7} parent=5 // pred_region
      %s575 = ssub.s32 %s12, 2
      // Predicated region
      $region49: #{bottleneck_forward.7} parent=47 // pred_check
        %p576 = pneg %p130
      $region50: #{bottleneck_forward.7} parent=47 // pred_check_branch
        %578 = sbr.rel (%p576) target = $region52
      $region51: #{bottleneck_forward.7} parent=47 // pred_region
        %s579 = smul.u32 16, %s18
        %p580 = scmp.lt.s32.totalorder %s579, 63
        %s581 = scalar_select %p580, %s579, 63
        %s582 = smul.addr %s581, 8
        %s583 = scalar_lea.vmem %s4, %s582
      $region52: #{bottleneck_forward.7} parent=47 // pred_fallthru
        _
      // Predicated region
      $region53: #{bottleneck_forward.7} parent=47 // pred_check
        %p584 = pneg %p156
      $region54: #{bottleneck_forward.7} parent=47 // pred_check_branch
        %586 = sbr.rel (%p584) target = $region56
      $region55: #{bottleneck_forward.7} parent=47 // pred_region
        %p587 = scmp.lt.s32.totalorder %s18, 3
        %s588 = scalar_select %p587, %s18, 3
        %s589 = smul.addr %s588, 2
        %s590 = scalar_lea.vmem %s5, %s589
      $region56: #{bottleneck_forward.7} parent=47 // pred_fallthru
        _
    $region48: #{bottleneck_forward.7} parent=5 // pred_fallthru
      _
  $region6: #{bottleneck_forward.7} parent=0 // loop_footer
    %s16 = sadd.s32 1, %s12
  $region7: #{bottleneck_forward.7} parent=0 // loop_footer_branch
    %11 = sbr.rel target = $region3
  $region8: #{bottleneck_forward.7} parent=0 // loop_exit
    _

// kernel: bottleneck_forward.9
$region0: #{bottleneck_forward.9}
  #allocation0 [shape = 'u32[]', space=smem, size = 0x4, offset = 0x4, fixed_abs, tag = 'smem constant byte address 0x4 - core index']
  #allocation1 [shape = 'u32[144,128]{1,0:T(1,128)}', space=vmem, size = 0x12000, scoped, tag = 'internal scratch']
  %s0 = inlined_call_operand.vmem [shape: f32[512,128], index: 0, kind: input, shape index: {}]
  %s1 = inlined_call_operand.vmem [shape: f32[512,128], index: 1, kind: input, shape index: {}]
  %s2 = inlined_call_operand.vmem [shape: f32[1,128], index: 2, kind: input, shape index: {}]
  %s3 = inlined_call_operand.vmem [shape: f32[1,128], index: 3, kind: input, shape index: {}]
  %s4 = inlined_call_operand.vmem [shape: f32[1,128], index: 4, kind: input, shape index: {}]
  %s5 = inlined_call_operand.vmem [shape: f32[1,128], index: 5, kind: input, shape index: {}]
  %s6 = inlined_call_operand.vmem [shape: f32[512,128], index: 6, kind: output, shape index: {}]
  %s7 = sld [smem:[#allocation0]]
  $region57: #{bottleneck_forward.9} parent=0
    _
  %s9 = ssub.s32 1, %s7
  %s10 = scalar_select 0, %s9, %s7
  loop: start=0, step=1, limit=6
  $region2: #{bottleneck_forward.9} parent=0 // loop_pre_header
    _
  $region3: #{bottleneck_forward.9} parent=0 // loop_header
    %s12 = sphi 0, %s16
    %p13 = scmp.ge.s32.totalorder %s12, 6
    %s22 = sphi 0, %s24
    %s25 = sphi 0, %s22
    %s26 = sphi 0, %s25
    %s42 = sphi 0, %s26
    %s48 = sphi 0, %s50
    %s51 = sphi 0, %s48
    %s52 = sphi 0, %s51
    %s68 = sphi 0, %s52
    %s72 = sphi 0, %s72
    %s74 = sphi 0, %s72
    %s75 = sphi 0, %s74
    %s89 = sphi 0, %s75
    %s93 = sphi 0, %s93
    %s95 = sphi 0, %s93
    %s96 = sphi 0, %s95
    %s110 = sphi 0, %s96
    %s114 = sphi 0, %s114
    %s116 = sphi 0, %s114
    %s117 = sphi 0, %s116
    %s131 = sphi 0, %s117
    %s135 = sphi 0, %s135
    %s137 = sphi 0, %s135
    %s138 = sphi 0, %s137
    %s152 = sphi 0, %s138
    %s158 = sphi 0, %s160
    %s161 = sphi 0, %s158
    %s162 = sphi 0, %s161
    %s178 = sphi 0, %s162
  $region4: #{bottleneck_forward.9} parent=0 // loop_header_branch
    %15 = sbr.rel (%p13) target = $region8
  $region5: #{bottleneck_forward.9} parent=0 // loop_body
    %s17 = ssub.s32 %s12, 1
    %s18 = ssub.s32 %s12, 2
    %s19 = sadd.s32 %s12, 1
    %s20 = ssub.s32 %s12, %s19
    %p21 = scmp.eq.s32.totalorder %s20, 0
    %s23 = sadd.s32 %s22, 1
    %s24 = scalar_select %p21, %s22, %s23
    %p27 = pneg %p21
    %p28 = scmp.eq.s32.totalorder %s12, 3
    %p29 = por %p27, %p28
    %p30 = scmp.ne.s32.totalorder %s22, %s25
    %p31 = scmp.eq.s32.totalorder %s12, 0
    %p32 = por %p30, %p31
    %p33 = scmp.ne.s32.totalorder %s22, %s25
    %p34 = scmp.eq.s32.totalorder %s17, 3
    %p35 = por %p33, %p34
    %p36 = scmp.ne.s32.totalorder %s25, %s26
    %p37 = scmp.eq.s32.totalorder %s17, 0
    %p38 = por %p36, %p37
    %p39 = scmp.ne.s32.totalorder %s25, %s26
    %p40 = scmp.eq.s32.totalorder %s18, 3
    %p41 = por %p39, %p40
    %p43 = scmp.ne.s32.totalorder %s26, %s42
    %p44 = scmp.eq.s32.totalorder %s18, 0
    %p45 = por %p43, %p44
    %s46 = ssub.s32 %s12, %s19
    %p47 = scmp.eq.s32.totalorder %s46, 0
    %s49 = sadd.s32 %s48, 1
    %s50 = scalar_select %p47, %s48, %s49
    %p53 = pneg %p47
    %p54 = scmp.eq.s32.totalorder %s12, 3
    %p55 = por %p53, %p54
    %p56 = scmp.ne.s32.totalorder %s48, %s51
    %p57 = scmp.eq.s32.totalorder %s12, 0
    %p58 = por %p56, %p57
    %p59 = scmp.ne.s32.totalorder %s48, %s51
    %p60 = scmp.eq.s32.totalorder %s17, 3
    %p61 = por %p59, %p60
    %p62 = scmp.ne.s32.totalorder %s51, %s52
    %p63 = scmp.eq.s32.totalorder %s17, 0
    %p64 = por %p62, %p63
    %p65 = scmp.ne.s32.totalorder %s51, %s52
    %p66 = scmp.eq.s32.totalorder %s18, 3
    %p67 = por %p65, %p66
    %p69 = scmp.ne.s32.totalorder %s52, %s68
    %p70 = scmp.eq.s32.totalorder %s18, 0
    %p71 = por %p69, %p70
    %s73 = sadd.s32 %s72, 1
    %p76 = scmp.eq.s32.totalorder %s12, 3
    %p77 = scmp.ne.s32.totalorder %s72, %s74
    %p78 = scmp.eq.s32.totalorder %s12, 0
    %p79 = por %p77, %p78
    %p80 = scmp.ne.s32.totalorder %s72, %s74
    %p81 = scmp.eq.s32.totalorder %s17, 3
    %p82 = por %p80, %p81
    %p83 = scmp.ne.s32.totalorder %s74, %s75
    %p84 = scmp.eq.s32.totalorder %s17, 0
    %p85 = por %p83, %p84
    %p86 = scmp.ne.s32.totalorder %s74, %s75
    %p87 = scmp.eq.s32.totalorder %s18, 3
    %p88 = por %p86, %p87
    %p90 = scmp.ne.s32.totalorder %s75, %s89
    %p91 = scmp.eq.s32.totalorder %s18, 0
    %p92 = por %p90, %p91
    %s94 = sadd.s32 %s93, 1
    %p97 = scmp.eq.s32.totalorder %s12, 3
    %p98 = scmp.ne.s32.totalorder %s93, %s95
    %p99 = scmp.eq.s32.totalorder %s12, 0
    %p100 = por %p98, %p99
    %p101 = scmp.ne.s32.totalorder %s93, %s95
    %p102 = scmp.eq.s32.totalorder %s17, 3
    %p103 = por %p101, %p102
    %p104 = scmp.ne.s32.totalorder %s95, %s96
    %p105 = scmp.eq.s32.totalorder %s17, 0
    %p106 = por %p104, %p105
    %p107 = scmp.ne.s32.totalorder %s95, %s96
    %p108 = scmp.eq.s32.totalorder %s18, 3
    %p109 = por %p107, %p108
    %p111 = scmp.ne.s32.totalorder %s96, %s110
    %p112 = scmp.eq.s32.totalorder %s18, 0
    %p113 = por %p111, %p112
    %s115 = sadd.s32 %s114, 1
    %p118 = scmp.eq.s32.totalorder %s12, 3
    %p119 = scmp.ne.s32.totalorder %s114, %s116
    %p120 = scmp.eq.s32.totalorder %s12, 0
    %p121 = por %p119, %p120
    %p122 = scmp.ne.s32.totalorder %s114, %s116
    %p123 = scmp.eq.s32.totalorder %s17, 3
    %p124 = por %p122, %p123
    %p125 = scmp.ne.s32.totalorder %s116, %s117
    %p126 = scmp.eq.s32.totalorder %s17, 0
    %p127 = por %p125, %p126
    %p128 = scmp.ne.s32.totalorder %s116, %s117
    %p129 = scmp.eq.s32.totalorder %s18, 3
    %p130 = por %p128, %p129
    %p132 = scmp.ne.s32.totalorder %s117, %s131
    %p133 = scmp.eq.s32.totalorder %s18, 0
    %p134 = por %p132, %p133
    %s136 = sadd.s32 %s135, 1
    %p139 = scmp.eq.s32.totalorder %s12, 3
    %p140 = scmp.ne.s32.totalorder %s135, %s137
    %p141 = scmp.eq.s32.totalorder %s12, 0
    %p142 = por %p140, %p141
    %p143 = scmp.ne.s32.totalorder %s135, %s137
    %p144 = scmp.eq.s32.totalorder %s17, 3
    %p145 = por %p143, %p144
    %p146 = scmp.ne.s32.totalorder %s137, %s138
    %p147 = scmp.eq.s32.totalorder %s17, 0
    %p148 = por %p146, %p147
    %p149 = scmp.ne.s32.totalorder %s137, %s138
    %p150 = scmp.eq.s32.totalorder %s18, 3
    %p151 = por %p149, %p150
    %p153 = scmp.ne.s32.totalorder %s138, %s152
    %p154 = scmp.eq.s32.totalorder %s18, 0
    %p155 = por %p153, %p154
    %s156 = ssub.s32 %s12, %s19
    %p157 = scmp.eq.s32.totalorder %s156, 0
    %s159 = sadd.s32 %s158, 1
    %s160 = scalar_select %p157, %s158, %s159
    %p163 = pneg %p157
    %p164 = scmp.eq.s32.totalorder %s12, 3
    %p165 = por %p163, %p164
    %p166 = scmp.ne.s32.totalorder %s158, %s161
    %p167 = scmp.eq.s32.totalorder %s12, 0
    %p168 = por %p166, %p167
    %p169 = scmp.ne.s32.totalorder %s158, %s161
    %p170 = scmp.eq.s32.totalorder %s17, 3
    %p171 = por %p169, %p170
    %p172 = scmp.ne.s32.totalorder %s161, %s162
    %p173 = scmp.eq.s32.totalorder %s17, 0
    %p174 = por %p172, %p173
    %p175 = scmp.ne.s32.totalorder %s161, %s162
    %p176 = scmp.eq.s32.totalorder %s18, 3
    %p177 = por %p175, %p176
    %p179 = scmp.ne.s32.totalorder %s162, %s178
    %p180 = scmp.eq.s32.totalorder %s18, 0
    %p181 = por %p179, %p180
    %p182 = scmp.le.s32.totalorder 1, %s12
    %p183 = scmp.lt.s32.totalorder %s12, 5
    %p184 = pnand %p182, %p183
    %p185 = pneg %p184
    // Predicated region
    $region9: #{bottleneck_forward.9} parent=5 // pred_check
      _
    $region10: #{bottleneck_forward.9} parent=5 // pred_check_branch
      %187 = sbr.rel (%p184) target = $region12
    $region11: #{bottleneck_forward.9} parent=5 // pred_region
      %s188 = ssub.s32 %s12, 1
      // Predicated region
      $region13: #{bottleneck_forward.9} parent=11 // pred_check
        %p189 = pneg %p85
      $region14: #{bottleneck_forward.9} parent=11 // pred_check_branch
        %191 = sbr.rel (%p189) target = $region16
      $region15: #{bottleneck_forward.9} parent=11 // pred_region
        _
      $region16: #{bottleneck_forward.9} parent=11 // pred_fallthru
        _
      // Predicated region
      $region17: #{bottleneck_forward.9} parent=11 // pred_check
        %p192 = pneg %p106
      $region18: #{bottleneck_forward.9} parent=11 // pred_check_branch
        %194 = sbr.rel (%p192) target = $region20
      $region19: #{bottleneck_forward.9} parent=11 // pred_region
        _
      $region20: #{bottleneck_forward.9} parent=11 // pred_fallthru
        _
      // Predicated region
      $region21: #{bottleneck_forward.9} parent=11 // pred_check
        %p195 = pneg %p127
      $region22: #{bottleneck_forward.9} parent=11 // pred_check_branch
        %197 = sbr.rel (%p195) target = $region24
      $region23: #{bottleneck_forward.9} parent=11 // pred_region
        _
      $region24: #{bottleneck_forward.9} parent=11 // pred_fallthru
        _
      // Predicated region
      $region25: #{bottleneck_forward.9} parent=11 // pred_check
        %p198 = pneg %p148
      $region26: #{bottleneck_forward.9} parent=11 // pred_check_branch
        %200 = sbr.rel (%p198) target = $region28
      $region27: #{bottleneck_forward.9} parent=11 // pred_region
        _
      $region28: #{bottleneck_forward.9} parent=11 // pred_fallthru
        _
    $region12: #{bottleneck_forward.9} parent=5 // pred_fallthru
      _
    %p201 = scmp.lt.s32.totalorder %s12, 4
    // Predicated region
    $region29: #{bottleneck_forward.9} parent=5 // pred_check
      %p202 = pneg %p201
    $region30: #{bottleneck_forward.9} parent=5 // pred_check_branch
      %204 = sbr.rel (%p202) target = $region32
    $region31: #{bottleneck_forward.9} parent=5 // pred_region
      // Predicated region
      $region33: #{bottleneck_forward.9} parent=31 // pred_check
        %p205 = pneg %p32
      $region34: #{bottleneck_forward.9} parent=31 // pred_check_branch
        %207 = sbr.rel (%p205) target = $region36
      $region35: #{bottleneck_forward.9} parent=31 // pred_region
        %s208 = smul.u32 16, %s12
        %p209 = scmp.lt.s32.totalorder %s208, 63
        %s210 = scalar_select %p209, %s208, 63
        %s211 = smul.addr %s210, 8
        %s212 = scalar_lea.vmem %s0, %s211
        %s213 = smul.u32 16, %s12
      $region36: #{bottleneck_forward.9} parent=31 // pred_fallthru
        _
      // Predicated region
      $region37: #{bottleneck_forward.9} parent=31 // pred_check
        %p214 = pneg %p58
      $region38: #{bottleneck_forward.9} parent=31 // pred_check_branch
        %216 = sbr.rel (%p214) target = $region40
      $region39: #{bottleneck_forward.9} parent=31 // pred_region
        %s217 = smul.u32 16, %s12
        %p218 = scmp.lt.s32.totalorder %s217, 63
        %s219 = scalar_select %p218, %s217, 63
        %s220 = smul.addr %s219, 8
        %s221 = scalar_lea.vmem %s1, %s220
        %s222 = smul.u32 16, %s12
      $region40: #{bottleneck_forward.9} parent=31 // pred_fallthru
        _
    $region32: #{bottleneck_forward.9} parent=5 // pred_fallthru
      _
    %p223 = scmp.le.s32.totalorder 1, %s12
    %p224 = scmp.lt.s32.totalorder %s12, 5
    %p225 = pnand %p223, %p224
    %p226 = pneg %p225
    // Predicated region
    $region41: #{bottleneck_forward.9} parent=5 // pred_check
      _
    $region42: #{bottleneck_forward.9} parent=5 // pred_check_branch
      %228 = sbr.rel (%p225) target = $region44
    $region43: #{bottleneck_forward.9} parent=5 // pred_region
      %s229 = ssub.s32 %s12, 1
      %s230 = smul.u32 16, %s17
      %p231 = scmp.lt.s32.totalorder %s230, 63
      %s232 = scalar_select %p231, %s230, 63
      %s233 = smul.addr %s232, 8
      %s234 = scalar_lea.vmem %s0, %s233
      %p235 = pneg %p38
      %p236 = pneg %p35
      %s237 = smul.u32 16, %s17
      %p238 = scmp.lt.s32.totalorder %s237, 63
      %s239 = scalar_select %p238, %s237, 63
      %s240 = smul.addr %s239, 8
      %s241 = scalar_lea.vmem %s1, %s240
      %p242 = pneg %p64
      %p243 = pneg %p61
      %p244 = pneg %p85
      %p245 = pneg %p82
      %p246 = pneg %p106
      %p247 = pneg %p103
      %p248 = pneg %p127
      %p249 = pneg %p124
      %p250 = pneg %p148
      %p251 = pneg %p145
      %p252 = pneg %p174
      %p253 = pneg %p171
      %s254 = smul.u32 16, %s17
      %p255 = scmp.lt.s32.totalorder %s254, 63
      %s256 = scalar_select %p255, %s254, 63
      %s257 = smul.addr %s256, 8
      %s258 = scalar_lea.vmem %s6, %s257
      %s259 = smul.u32 16, %s17
      %p260 = scmp.lt.s32.totalorder %s259, 63
      %s261 = scalar_select %p260, %s259, 63
      %s262 = smul.addr %s261, 8
      %s263 = scalar_lea.vmem %s0, %s262
      %s264 = smul.u32 16, %s17
      %s265 = smul.u32 16, %s17
      %p266 = scmp.lt.s32.totalorder %s265, 63
      %s267 = scalar_select %p266, %s265, 63
      %s268 = smul.addr %s267, 8
      %s269 = scalar_lea.vmem %s1, %s268
      %s270 = smul.u32 16, %s17
      %s271 = smul.u32 16, %s17
      %p272 = scmp.lt.s32.totalorder %s271, 63
      %s273 = scalar_select %p272, %s271, 63
      %s274 = smul.addr %s273, 8
      %s275 = scalar_lea.vmem %s6, %s274
      %s276 = smul.u32 16, %s17
      %v277 = vld [vmem:[%s263] sm:$0xff]
      %v278 = vld [vmem:[%s263 + $0x8] sm:$0xff]
      %v279 = vld [vmem:[%s263 + $0x10] sm:$0xff]
      %v280 = vld [vmem:[%s263 + $0x18] sm:$0xff]
      %v281 = vld [vmem:[%s263 + $0x20] sm:$0xff]
      %v282 = vld [vmem:[%s263 + $0x28] sm:$0xff]
      %v283 = vld [vmem:[%s263 + $0x30] sm:$0xff]
      %v284 = vld [vmem:[%s263 + $0x38] sm:$0xff]
      %v285 = vld [vmem:[%s263 + $0x40] sm:$0xff]
      %v286 = vld [vmem:[%s263 + $0x48] sm:$0xff]
      %v287 = vld [vmem:[%s263 + $0x50] sm:$0xff]
      %v288 = vld [vmem:[%s263 + $0x58] sm:$0xff]
      %v289 = vld [vmem:[%s263 + $0x60] sm:$0xff]
      %v290 = vld [vmem:[%s263 + $0x68] sm:$0xff]
      %v291 = vld [vmem:[%s263 + $0x70] sm:$0xff]
      %v292 = vld [vmem:[%s263 + $0x78] sm:$0xff]
      %v293 = vld [vmem:[%s2] sm:$0x1]
      %v295 = vlaneseq
      %v296 = vshrl.u32 %v295, 7
      %v297 = vsub.s32 0, %v296
      %v298 = vrot.slane %v293, %v297
      %v300 = vmul.f32 %v277, %v298
      %v301 = vmul.f32 %v278, %v298
      %v302 = vmul.f32 %v279, %v298
      %v303 = vmul.f32 %v280, %v298
      %v304 = vmul.f32 %v281, %v298
      %v305 = vmul.f32 %v282, %v298
      %v306 = vmul.f32 %v283, %v298
      %v307 = vmul.f32 %v284, %v298
      %v308 = vmul.f32 %v285, %v298
      %v309 = vmul.f32 %v286, %v298
      %v310 = vmul.f32 %v287, %v298
      %v311 = vmul.f32 %v288, %v298
      %v312 = vmul.f32 %v289, %v298
      %v313 = vmul.f32 %v290, %v298
      %v314 = vmul.f32 %v291, %v298
      %v315 = vmul.f32 %v292, %v298
      %v316 = vld [vmem:[%s3] sm:$0x1]
      %v318 = vlaneseq
      %v319 = vshrl.u32 %v318, 7
      %v320 = vsub.s32 0, %v319
      %v321 = vrot.slane %v316, %v320
      %v323 = vadd.f32 %v300, %v321
      %v324 = vadd.f32 %v301, %v321
      %v325 = vadd.f32 %v302, %v321
      %v326 = vadd.f32 %v303, %v321
      %v327 = vadd.f32 %v304, %v321
      %v328 = vadd.f32 %v305, %v321
      %v329 = vadd.f32 %v306, %v321
      %v330 = vadd.f32 %v307, %v321
      %v331 = vadd.f32 %v308, %v321
      %v332 = vadd.f32 %v309, %v321
      %v333 = vadd.f32 %v310, %v321
      %v334 = vadd.f32 %v311, %v321
      %v335 = vadd.f32 %v312, %v321
      %v336 = vadd.f32 %v313, %v321
      %v337 = vadd.f32 %v314, %v321
      %v338 = vadd.f32 %v315, %v321
      %v339 = vld [vmem:[%s269] sm:$0xff]
      %v340 = vld [vmem:[%s269 + $0x8] sm:$0xff]
      %v341 = vld [vmem:[%s269 + $0x10] sm:$0xff]
      %v342 = vld [vmem:[%s269 + $0x18] sm:$0xff]
      %v343 = vld [vmem:[%s269 + $0x20] sm:$0xff]
      %v344 = vld [vmem:[%s269 + $0x28] sm:$0xff]
      %v345 = vld [vmem:[%s269 + $0x30] sm:$0xff]
      %v346 = vld [vmem:[%s269 + $0x38] sm:$0xff]
      %v347 = vld [vmem:[%s269 + $0x40] sm:$0xff]
      %v348 = vld [vmem:[%s269 + $0x48] sm:$0xff]
      %v349 = vld [vmem:[%s269 + $0x50] sm:$0xff]
      %v350 = vld [vmem:[%s269 + $0x58] sm:$0xff]
      %v351 = vld [vmem:[%s269 + $0x60] sm:$0xff]
      %v352 = vld [vmem:[%s269 + $0x68] sm:$0xff]
      %v353 = vld [vmem:[%s269 + $0x70] sm:$0xff]
      %v354 = vld [vmem:[%s269 + $0x78] sm:$0xff]
      %v355 = vld [vmem:[%s4] sm:$0x1]
      %v357 = vlaneseq
      %v358 = vshrl.u32 %v357, 7
      %v359 = vsub.s32 0, %v358
      %v360 = vrot.slane %v355, %v359
      %v362 = vmul.f32 %v339, %v360
      %v363 = vmul.f32 %v340, %v360
      %v364 = vmul.f32 %v341, %v360
      %v365 = vmul.f32 %v342, %v360
      %v366 = vmul.f32 %v343, %v360
      %v367 = vmul.f32 %v344, %v360
      %v368 = vmul.f32 %v345, %v360
      %v369 = vmul.f32 %v346, %v360
      %v370 = vmul.f32 %v347, %v360
      %v371 = vmul.f32 %v348, %v360
      %v372 = vmul.f32 %v349, %v360
      %v373 = vmul.f32 %v350, %v360
      %v374 = vmul.f32 %v351, %v360
      %v375 = vmul.f32 %v352, %v360
      %v376 = vmul.f32 %v353, %v360
      %v377 = vmul.f32 %v354, %v360
      %v378 = vadd.f32 %v323, %v362
      %v379 = vadd.f32 %v324, %v363
      %v380 = vadd.f32 %v325, %v364
      %v381 = vadd.f32 %v326, %v365
      %v382 = vadd.f32 %v327, %v366
      %v383 = vadd.f32 %v328, %v367
      %v384 = vadd.f32 %v329, %v368
      %v385 = vadd.f32 %v330, %v369
      %v386 = vadd.f32 %v331, %v370
      %v387 = vadd.f32 %v332, %v371
      %v388 = vadd.f32 %v333, %v372
      %v389 = vadd.f32 %v334, %v373
      %v390 = vadd.f32 %v335, %v374
      %v391 = vadd.f32 %v336, %v375
      %v392 = vadd.f32 %v337, %v376
      %v393 = vadd.f32 %v338, %v377
      %v394 = vld [vmem:[%s5] sm:$0x1]
      %v396 = vlaneseq
      %v397 = vshrl.u32 %v396, 7
      %v398 = vsub.s32 0, %v397
      %v399 = vrot.slane %v394, %v398
      %v401 = vadd.f32 %v378, %v399
      %v402 = vadd.f32 %v379, %v399
      %v403 = vadd.f32 %v380, %v399
      %v404 = vadd.f32 %v381, %v399
      %v405 = vadd.f32 %v382, %v399
      %v406 = vadd.f32 %v383, %v399
      %v407 = vadd.f32 %v384, %v399
      %v408 = vadd.f32 %v385, %v399
      %v409 = vadd.f32 %v386, %v399
      %v410 = vadd.f32 %v387, %v399
      %v411 = vadd.f32 %v388, %v399
      %v412 = vadd.f32 %v389, %v399
      %v413 = vadd.f32 %v390, %v399
      %v414 = vadd.f32 %v391, %v399
      %v415 = vadd.f32 %v392, %v399
      %v416 = vadd.f32 %v393, %v399
      %v417 = vmax.f32 %v401, 0.0
      %v418 = vmax.f32 %v402, 0.0
      %v419 = vmax.f32 %v403, 0.0
      %v420 = vmax.f32 %v404, 0.0
      %v421 = vmax.f32 %v405, 0.0
      %v422 = vmax.f32 %v406, 0.0
      %v423 = vmax.f32 %v407, 0.0
      %v424 = vmax.f32 %v408, 0.0
      %v425 = vmax.f32 %v409, 0.0
      %v426 = vmax.f32 %v410, 0.0
      %v427 = vmax.f32 %v411, 0.0
      %v428 = vmax.f32 %v412, 0.0
      %v429 = vmax.f32 %v413, 0.0
      %v430 = vmax.f32 %v414, 0.0
      %v431 = vmax.f32 %v415, 0.0
      %v432 = vmax.f32 %v416, 0.0
      %433 = vst [vmem:[%s275] sm:$0xff] %v417
      %434 = vst [vmem:[%s275 + $0x8] sm:$0xff] %v418
      %435 = vst [vmem:[%s275 + $0x10] sm:$0xff] %v419
      %436 = vst [vmem:[%s275 + $0x18] sm:$0xff] %v420
      %437 = vst [vmem:[%s275 + $0x20] sm:$0xff] %v421
      %438 = vst [vmem:[%s275 + $0x28] sm:$0xff] %v422
      %439 = vst [vmem:[%s275 + $0x30] sm:$0xff] %v423
      %440 = vst [vmem:[%s275 + $0x38] sm:$0xff] %v424
      %441 = vst [vmem:[%s275 + $0x40] sm:$0xff] %v425
      %442 = vst [vmem:[%s275 + $0x48] sm:$0xff] %v426
      %443 = vst [vmem:[%s275 + $0x50] sm:$0xff] %v427
      %444 = vst [vmem:[%s275 + $0x58] sm:$0xff] %v428
      %445 = vst [vmem:[%s275 + $0x60] sm:$0xff] %v429
      %446 = vst [vmem:[%s275 + $0x68] sm:$0xff] %v430
      %447 = vst [vmem:[%s275 + $0x70] sm:$0xff] %v431
      %448 = vst [vmem:[%s275 + $0x78] sm:$0xff] %v432
      %s449 = smul.u32 16, %s17
      %p450 = scmp.lt.s32.totalorder %s449, 63
      %s451 = scalar_select %p450, %s449, 63
      %s452 = smul.addr %s451, 8
      %s453 = scalar_lea.vmem %s6, %s452
      // Predicated region
      $region45: #{bottleneck_forward.9} parent=43 // pred_check
        %p454 = pneg %p171
      $region46: #{bottleneck_forward.9} parent=43 // pred_check_branch
        %456 = sbr.rel (%p454) target = $region48
      $region47: #{bottleneck_forward.9} parent=43 // pred_region
        %s457 = smul.u32 16, %s17
      $region48: #{bottleneck_forward.9} parent=43 // pred_fallthru
        _
    $region44: #{bottleneck_forward.9} parent=5 // pred_fallthru
      _
    %p458 = scmp.le.s32.totalorder 2, %s12
    // Predicated region
    $region49: #{bottleneck_forward.9} parent=5 // pred_check
      %p459 = pneg %p458
    $region50: #{bottleneck_forward.9} parent=5 // pred_check_branch
      %461 = sbr.rel (%p459) target = $region52
    $region51: #{bottleneck_forward.9} parent=5 // pred_region
      %s462 = ssub.s32 %s12, 2
      // Predicated region
      $region53: #{bottleneck_forward.9} parent=51 // pred_check
        %p463 = pneg %p177
      $region54: #{bottleneck_forward.9} parent=51 // pred_check_branch
        %465 = sbr.rel (%p463) target = $region56
      $region55: #{bottleneck_forward.9} parent=51 // pred_region
        %s466 = smul.u32 16, %s18
        %p467 = scmp.lt.s32.totalorder %s466, 63
        %s468 = scalar_select %p467, %s466, 63
        %s469 = smul.addr %s468, 8
        %s470 = scalar_lea.vmem %s6, %s469
      $region56: #{bottleneck_forward.9} parent=51 // pred_fallthru
        _
    $region52: #{bottleneck_forward.9} parent=5 // pred_fallthru
      _
  $region6: #{bottleneck_forward.9} parent=0 // loop_footer
    %s16 = sadd.s32 1, %s12
  $region7: #{bottleneck_forward.9} parent=0 // loop_footer_branch
    %11 = sbr.rel target = $region3
  $region8: #{bottleneck_forward.9} parent=0 // loop_exit
    _

// kernel: bottleneck_forward.6
$region0: #{bottleneck_forward.6}
  #allocation0 [shape = 'u32[]', space=smem, size = 0x4, offset = 0x4, fixed_abs, tag = 'smem constant byte address 0x4 - core index']
  #allocation1 [shape = 'u32[144,128]{1,0:T(1,128)}', space=vmem, size = 0x12000, scoped, tag = 'internal scratch']
  #allocation2 [shape = 'f32[18,18,128]{2,1,0:T(8,128)}', space=vmem, size = 0x36000, scoped, tag = 'scratch operand']
  %s0 = inlined_call_operand.vmem [shape: f32[2,16,16,128], index: 0, kind: input, shape index: {}]
  %s1 = inlined_call_operand.vmem [shape: f32[1,128], index: 1, kind: input, shape index: {}]
  %s2 = inlined_call_operand.vmem [shape: f32[1,128], index: 2, kind: input, shape index: {}]
  %s3 = inlined_call_operand.vmem [shape: f32[1152,128], index: 3, kind: input, shape index: {}]
  %s4 = inlined_call_operand.vmem [shape: f32[2,256,128], index: 4, kind: output, shape index: {0}]
  %s5 = inlined_call_operand.vmem [shape: f32[2,2,128], index: 5, kind: output, shape index: {1}]
  %6 = xla_tuple %s4, %s5
  %s7 = sld [smem:[#allocation0]]
  $region57: #{bottleneck_forward.6} parent=0
    _
  %s9 = ssub.s32 1, %s7
  %s10 = scalar_select 0, %s9, %s7
  loop: start=0, step=1, limit=4
  $region2: #{bottleneck_forward.6} parent=0 // loop_pre_header
    _
  $region3: #{bottleneck_forward.6} parent=0 // loop_header
    %s12 = sphi 0, %s16
    %p13 = scmp.ge.s32.totalorder %s12, 4
    %s22 = sphi 0, %s24
    %s25 = sphi 0, %s22
    %s26 = sphi 0, %s25
    %s42 = sphi 0, %s26
    %s46 = sphi 0, %s46
    %s48 = sphi 0, %s46
    %s49 = sphi 0, %s48
    %s63 = sphi 0, %s49
    %s67 = sphi 0, %s67
    %s69 = sphi 0, %s67
    %s70 = sphi 0, %s69
    %s84 = sphi 0, %s70
    %s88 = sphi 0, %s88
    %s90 = sphi 0, %s88
    %s91 = sphi 0, %s90
    %s105 = sphi 0, %s91
    %s111 = sphi 0, %s113
    %s114 = sphi 0, %s111
    %s115 = sphi 0, %s114
    %s131 = sphi 0, %s115
    %s137 = sphi 0, %s139
    %s140 = sphi 0, %s137
    %s141 = sphi 0, %s140
    %s157 = sphi 0, %s141
  $region4: #{bottleneck_forward.6} parent=0 // loop_header_branch
    %15 = sbr.rel (%p13) target = $region8
  $region5: #{bottleneck_forward.6} parent=0 // loop_body
    %s17 = ssub.s32 %s12, 1
    %s18 = ssub.s32 %s12, 2
    %s19 = sadd.s32 %s12, 1
    %s20 = ssub.s32 %s12, %s19
    %p21 = scmp.eq.s32.totalorder %s20, 0
    %s23 = sadd.s32 %s22, 1
    %s24 = scalar_select %p21, %s22, %s23
    %p27 = pneg %p21
    %p28 = scmp.eq.s32.totalorder %s12, 1
    %p29 = por %p27, %p28
    %p30 = scmp.ne.s32.totalorder %s22, %s25
    %p31 = scmp.eq.s32.totalorder %s12, 0
    %p32 = por %p30, %p31
    %p33 = scmp.ne.s32.totalorder %s22, %s25
    %p34 = scmp.eq.s32.totalorder %s17, 1
    %p35 = por %p33, %p34
    %p36 = scmp.ne.s32.totalorder %s25, %s26
    %p37 = scmp.eq.s32.totalorder %s17, 0
    %p38 = por %p36, %p37
    %p39 = scmp.ne.s32.totalorder %s25, %s26
    %p40 = scmp.eq.s32.totalorder %s18, 1
    %p41 = por %p39, %p40
    %p43 = scmp.ne.s32.totalorder %s26, %s42
    %p44 = scmp.eq.s32.totalorder %s18, 0
    %p45 = por %p43, %p44
    %s47 = sadd.s32 %s46, 1
    %p50 = scmp.eq.s32.totalorder %s12, 1
    %p51 = scmp.ne.s32.totalorder %s46, %s48
    %p52 = scmp.eq.s32.totalorder %s12, 0
    %p53 = por %p51, %p52
    %p54 = scmp.ne.s32.totalorder %s46, %s48
    %p55 = scmp.eq.s32.totalorder %s17, 1
    %p56 = por %p54, %p55
    %p57 = scmp.ne.s32.totalorder %s48, %s49
    %p58 = scmp.eq.s32.totalorder %s17, 0
    %p59 = por %p57, %p58
    %p60 = scmp.ne.s32.totalorder %s48, %s49
    %p61 = scmp.eq.s32.totalorder %s18, 1
    %p62 = por %p60, %p61
    %p64 = scmp.ne.s32.totalorder %s49, %s63
    %p65 = scmp.eq.s32.totalorder %s18, 0
    %p66 = por %p64, %p65
    %s68 = sadd.s32 %s67, 1
    %p71 = scmp.eq.s32.totalorder %s12, 1
    %p72 = scmp.ne.s32.totalorder %s67, %s69
    %p73 = scmp.eq.s32.totalorder %s12, 0
    %p74 = por %p72, %p73
    %p75 = scmp.ne.s32.totalorder %s67, %s69
    %p76 = scmp.eq.s32.totalorder %s17, 1
    %p77 = por %p75, %p76
    %p78 = scmp.ne.s32.totalorder %s69, %s70
    %p79 = scmp.eq.s32.totalorder %s17, 0
    %p80 = por %p78, %p79
    %p81 = scmp.ne.s32.totalorder %s69, %s70
    %p82 = scmp.eq.s32.totalorder %s18, 1
    %p83 = por %p81, %p82
    %p85 = scmp.ne.s32.totalorder %s70, %s84
    %p86 = scmp.eq.s32.totalorder %s18, 0
    %p87 = por %p85, %p86
    %s89 = sadd.s32 %s88, 1
    %p92 = scmp.eq.s32.totalorder %s12, 1
    %p93 = scmp.ne.s32.totalorder %s88, %s90
    %p94 = scmp.eq.s32.totalorder %s12, 0
    %p95 = por %p93, %p94
    %p96 = scmp.ne.s32.totalorder %s88, %s90
    %p97 = scmp.eq.s32.totalorder %s17, 1
    %p98 = por %p96, %p97
    %p99 = scmp.ne.s32.totalorder %s90, %s91
    %p100 = scmp.eq.s32.totalorder %s17, 0
    %p101 = por %p99, %p100
    %p102 = scmp.ne.s32.totalorder %s90, %s91
    %p103 = scmp.eq.s32.totalorder %s18, 1
    %p104 = por %p102, %p103
    %p106 = scmp.ne.s32.totalorder %s91, %s105
    %p107 = scmp.eq.s32.totalorder %s18, 0
    %p108 = por %p106, %p107
    %s109 = ssub.s32 %s12, %s19
    %p110 = scmp.eq.s32.totalorder %s109, 0
    %s112 = sadd.s32 %s111, 1
    %s113 = scalar_select %p110, %s111, %s112
    %p116 = pneg %p110
    %p117 = scmp.eq.s32.totalorder %s12, 1
    %p118 = por %p116, %p117
    %p119 = scmp.ne.s32.totalorder %s111, %s114
    %p120 = scmp.eq.s32.totalorder %s12, 0
    %p121 = por %p119, %p120
    %p122 = scmp.ne.s32.totalorder %s111, %s114
    %p123 = scmp.eq.s32.totalorder %s17, 1
    %p124 = por %p122, %p123
    %p125 = scmp.ne.s32.totalorder %s114, %s115
    %p126 = scmp.eq.s32.totalorder %s17, 0
    %p127 = por %p125, %p126
    %p128 = scmp.ne.s32.totalorder %s114, %s115
    %p129 = scmp.eq.s32.totalorder %s18, 1
    %p130 = por %p128, %p129
    %p132 = scmp.ne.s32.totalorder %s115, %s131
    %p133 = scmp.eq.s32.totalorder %s18, 0
    %p134 = por %p132, %p133
    %s135 = ssub.s32 %s12, %s19
    %p136 = scmp.eq.s32.totalorder %s135, 0
    %s138 = sadd.s32 %s137, 1
    %s139 = scalar_select %p136, %s137, %s138
    %p142 = pneg %p136
    %p143 = scmp.eq.s32.totalorder %s12, 1
    %p144 = por %p142, %p143
    %p145 = scmp.ne.s32.totalorder %s137, %s140
    %p146 = scmp.eq.s32.totalorder %s12, 0
    %p147 = por %p145, %p146
    %p148 = scmp.ne.s32.totalorder %s137, %s140
    %p149 = scmp.eq.s32.totalorder %s17, 1
    %p150 = por %p148, %p149
    %p151 = scmp.ne.s32.totalorder %s140, %s141
    %p152 = scmp.eq.s32.totalorder %s17, 0
    %p153 = por %p151, %p152
    %p154 = scmp.ne.s32.totalorder %s140, %s141
    %p155 = scmp.eq.s32.totalorder %s18, 1
    %p156 = por %p154, %p155
    %p158 = scmp.ne.s32.totalorder %s141, %s157
    %p159 = scmp.eq.s32.totalorder %s18, 0
    %p160 = por %p158, %p159
    %p161 = scmp.le.s32.totalorder 1, %s12
    %p162 = scmp.lt.s32.totalorder %s12, 3
    %p163 = pnand %p161, %p162
    %p164 = pneg %p163
    // Predicated region
    $region9: #{bottleneck_forward.6} parent=5 // pred_check
      _
    $region10: #{bottleneck_forward.6} parent=5 // pred_check_branch
      %166 = sbr.rel (%p163) target = $region12
    $region11: #{bottleneck_forward.6} parent=5 // pred_region
      %s167 = ssub.s32 %s12, 1
      // Predicated region
      $region13: #{bottleneck_forward.6} parent=11 // pred_check
        %p168 = pneg %p59
      $region14: #{bottleneck_forward.6} parent=11 // pred_check_branch
        %170 = sbr.rel (%p168) target = $region16
      $region15: #{bottleneck_forward.6} parent=11 // pred_region
        _
      $region16: #{bottleneck_forward.6} parent=11 // pred_fallthru
        _
      // Predicated region
      $region17: #{bottleneck_forward.6} parent=11 // pred_check
        %p171 = pneg %p80
      $region18: #{bottleneck_forward.6} parent=11 // pred_check_branch
        %173 = sbr.rel (%p171) target = $region20
      $region19: #{bottleneck_forward.6} parent=11 // pred_region
        _
      $region20: #{bottleneck_forward.6} parent=11 // pred_fallthru
        _
      // Predicated region
      $region21: #{bottleneck_forward.6} parent=11 // pred_check
        %p174 = pneg %p101
      $region22: #{bottleneck_forward.6} parent=11 // pred_check_branch
        %176 = sbr.rel (%p174) target = $region24
      $region23: #{bottleneck_forward.6} parent=11 // pred_region
        _
      $region24: #{bottleneck_forward.6} parent=11 // pred_fallthru
        _
    $region12: #{bottleneck_forward.6} parent=5 // pred_fallthru
      _
    %p177 = scmp.lt.s32.totalorder %s12, 2
    // Predicated region
    $region25: #{bottleneck_forward.6} parent=5 // pred_check
      %p178 = pneg %p177
    $region26: #{bottleneck_forward.6} parent=5 // pred_check_branch
      %180 = sbr.rel (%p178) target = $region28
    $region27: #{bottleneck_forward.6} parent=5 // pred_region
      // Predicated region
      $region29: #{bottleneck_forward.6} parent=27 // pred_check
        %p181 = pneg %p32
      $region30: #{bottleneck_forward.6} parent=27 // pred_check_branch
        %183 = sbr.rel (%p181) target = $region32
      $region31: #{bottleneck_forward.6} parent=27 // pred_region
        %p184 = scmp.lt.s32.totalorder %s12, 1
        %s185 = scalar_select %p184, %s12, 1
        %s186 = smul.addr %s185, 32
        %s187 = smul.addr %s186, 8
        %s188 = scalar_lea.vmem %s0, %s187
      $region32: #{bottleneck_forward.6} parent=27 // pred_fallthru
        _
    $region28: #{bottleneck_forward.6} parent=5 // pred_fallthru
      _
    %p189 = scmp.le.s32.totalorder 1, %s12
    %p190 = scmp.lt.s32.totalorder %s12, 3
    %p191 = pnand %p189, %p190
    %p192 = pneg %p191
    // Predicated region
    $region33: #{bottleneck_forward.6} parent=5 // pred_check
      _
    $region34: #{bottleneck_forward.6} parent=5 // pred_check_branch
      %194 = sbr.rel (%p191) target = $region36
    $region35: #{bottleneck_forward.6} parent=5 // pred_region
      %s195 = ssub.s32 %s12, 1
      %p196 = scmp.lt.s32.totalorder %s17, 1
      %s197 = scalar_select %p196, %s17, 1
      %s198 = smul.addr %s197, 32
      %s199 = smul.addr %s198, 8
      %s200 = scalar_lea.vmem %s0, %s199
      %p201 = pneg %p38
      %p202 = pneg %p35
      %p203 = pneg %p59
      %p204 = pneg %p56
      %p205 = pneg %p80
      %p206 = pneg %p77
      %p207 = pneg %p101
      %p208 = pneg %p98
      %p209 = pneg %p127
      %p210 = pneg %p124
      %p211 = scmp.lt.s32.totalorder %s17, 1
      %s212 = scalar_select %p211, %s17, 1
      %s213 = smul.addr %s212, 32
      %s214 = smul.addr %s213, 8
      %s215 = scalar_lea.vmem %s4, %s214
      %p216 = pneg %p153
      %p217 = pneg %p150
      %p218 = scmp.lt.s32.totalorder %s17, 1
      %s219 = scalar_select %p218, %s17, 1
      %s220 = smul.addr %s219, 2
      %s221 = scalar_lea.vmem %s5, %s220
      %p222 = scmp.lt.s32.totalorder %s17, 1
      %s223 = scalar_select %p222, %s17, 1
      %s224 = smul.addr %s223, 32
      %s225 = smul.addr %s224, 8
      %s226 = scalar_lea.vmem %s0, %s225
      %p227 = scmp.lt.s32.totalorder %s17, 1
      %s228 = scalar_select %p227, %s17, 1
      %s229 = smul.addr %s228, 32
      %s230 = smul.addr %s229, 8
      %s231 = scalar_lea.vmem %s4, %s230
      %p232 = scmp.lt.s32.totalorder %s17, 1
      %s233 = scalar_select %p232, %s17, 1
      %s234 = smul.addr %s233, 2
      %s235 = scalar_lea.vmem %s5, %s234
      %v236 = vld [vmem:[%s226] sm:$0xff]
      %v237 = vld [vmem:[%s226 + $0x8] sm:$0xff]
      %v238 = vld [vmem:[%s226 + $0x10] sm:$0xff]
      %v239 = vld [vmem:[%s226 + $0x18] sm:$0xff]
      %v240 = vld [vmem:[%s226 + $0x20] sm:$0xff]
      %v241 = vld [vmem:[%s226 + $0x28] sm:$0xff]
      %v242 = vld [vmem:[%s226 + $0x30] sm:$0xff]
      %v243 = vld [vmem:[%s226 + $0x38] sm:$0xff]
      %v244 = vld [vmem:[%s226 + $0x40] sm:$0xff]
      %v245 = vld [vmem:[%s226 + $0x48] sm:$0xff]
      %v246 = vld [vmem:[%s226 + $0x50] sm:$0xff]
      %v247 = vld [vmem:[%s226 + $0x58] sm:$0xff]
      %v248 = vld [vmem:[%s226 + $0x60] sm:$0xff]
      %v249 = vld [vmem:[%s226 + $0x68] sm:$0xff]
      %v250 = vld [vmem:[%s226 + $0x70] sm:$0xff]
      %v251 = vld [vmem:[%s226 + $0x78] sm:$0xff]
      %v252 = vld [vmem:[%s226 + $0x80] sm:$0xff]
      %v253 = vld [vmem:[%s226 + $0x88] sm:$0xff]
      %v254 = vld [vmem:[%s226 + $0x90] sm:$0xff]
      %v255 = vld [vmem:[%s226 + $0x98] sm:$0xff]
      %v256 = vld [vmem:[%s226 + $0xa0] sm:$0xff]
      %v257 = vld [vmem:[%s226 + $0xa8] sm:$0xff]
      %v258 = vld [vmem:[%s226 + $0xb0] sm:$0xff]
      %v259 = vld [vmem:[%s226 + $0xb8] sm:$0xff]
      %v260 = vld [vmem:[%s226 + $0xc0] sm:$0xff]
      %v261 = vld [vmem:[%s226 + $0xc8] sm:$0xff]
      %v262 = vld [vmem:[%s226 + $0xd0] sm:$0xff]
      %v263 = vld [vmem:[%s226 + $0xd8] sm:$0xff]
      %v264 = vld [vmem:[%s226 + $0xe0] sm:$0xff]
      %v265 = vld [vmem:[%s226 + $0xe8] sm:$0xff]
      %v266 = vld [vmem:[%s226 + $0xf0] sm:$0xff]
      %v267 = vld [vmem:[%s226 + $0xf8] sm:$0xff]
      %v268 = vld [vmem:[%s1] sm:$0x1]
      %v270 = vlaneseq
      %v271 = vshrl.u32 %v270, 7
      %v272 = vsub.s32 0, %v271
      %v273 = vrot.slane %v268, %v272
      %v275 = vmul.f32 %v236, %v273
      %v276 = vmul.f32 %v237, %v273
      %v277 = vmul.f32 %v238, %v273
      %v278 = vmul.f32 %v239, %v273
      %v279 = vmul.f32 %v240, %v273
      %v280 = vmul.f32 %v241, %v273
      %v281 = vmul.f32 %v242, %v273
      %v282 = vmul.f32 %v243, %v273
      %v283 = vmul.f32 %v244, %v273
      %v284 = vmul.f32 %v245, %v273
      %v285 = vmul.f32 %v246, %v273
      %v286 = vmul.f32 %v247, %v273
      %v287 = vmul.f32 %v248, %v273
      %v288 = vmul.f32 %v249, %v273
      %v289 = vmul.f32 %v250, %v273
      %v290 = vmul.f32 %v251, %v273
      %v291 = vmul.f32 %v252, %v273
      %v292 = vmul.f32 %v253, %v273
      %v293 = vmul.f32 %v254, %v273
      %v294 = vmul.f32 %v255, %v273
      %v295 = vmul.f32 %v256, %v273
      %v296 = vmul.f32 %v257, %v273
      %v297 = vmul.f32 %v258, %v273
      %v298 = vmul.f32 %v259, %v273
      %v299 = vmul.f32 %v260, %v273
      %v300 = vmul.f32 %v261, %v273
      %v301 = vmul.f32 %v262, %v273
      %v302 = vmul.f32 %v263, %v273
      %v303 = vmul.f32 %v264, %v273
      %v304 = vmul.f32 %v265, %v273
      %v305 = vmul.f32 %v266, %v273
      %v306 = vmul.f32 %v267, %v273
      %v307 = vld [vmem:[%s2] sm:$0x1]
      %v309 = vlaneseq
      %v310 = vshrl.u32 %v309, 7
      %v311 = vsub.s32 0, %v310
      %v312 = vrot.slane %v307, %v311
      %v314 = vadd.f32 %v275, %v312
      %v315 = vadd.f32 %v276, %v312
      %v316 = vadd.f32 %v277, %v312
      %v317 = vadd.f32 %v278, %v312
      %v318 = vadd.f32 %v279, %v312
      %v319 = vadd.f32 %v280, %v312
      %v320 = vadd.f32 %v281, %v312
      %v321 = vadd.f32 %v282, %v312
      %v322 = vadd.f32 %v283, %v312
      %v323 = vadd.f32 %v284, %v312
      %v324 = vadd.f32 %v285, %v312
      %v325 = vadd.f32 %v286, %v312
      %v326 = vadd.f32 %v287, %v312
      %v327 = vadd.f32 %v288, %v312
      %v328 = vadd.f32 %v289, %v312
      %v329 = vadd.f32 %v290, %v312
      %v330 = vadd.f32 %v291, %v312
      %v331 = vadd.f32 %v292, %v312
      %v332 = vadd.f32 %v293, %v312
      %v333 = vadd.f32 %v294, %v312
      %v334 = vadd.f32 %v295, %v312
      %v335 = vadd.f32 %v296, %v312
      %v336 = vadd.f32 %v297, %v312
      %v337 = vadd.f32 %v298, %v312
      %v338 = vadd.f32 %v299, %v312
      %v339 = vadd.f32 %v300, %v312
      %v340 = vadd.f32 %v301, %v312
      %v341 = vadd.f32 %v302, %v312
      %v342 = vadd.f32 %v303, %v312
      %v343 = vadd.f32 %v304, %v312
      %v344 = vadd.f32 %v305, %v312
      %v345 = vadd.f32 %v306, %v312
      %v346 = vmax.f32 %v314, 0.0
      %v347 = vmax.f32 %v315, 0.0
      %v348 = vmax.f32 %v316, 0.0
      %v349 = vmax.f32 %v317, 0.0
      %v350 = vmax.f32 %v318, 0.0
      %v351 = vmax.f32 %v319, 0.0
      %v352 = vmax.f32 %v320, 0.0
      %v353 = vmax.f32 %v321, 0.0
      %v354 = vmax.f32 %v322, 0.0
      %v355 = vmax.f32 %v323, 0.0
      %v356 = vmax.f32 %v324, 0.0
      %v357 = vmax.f32 %v325, 0.0
      %v358 = vmax.f32 %v326, 0.0
      %v359 = vmax.f32 %v327, 0.0
      %v360 = vmax.f32 %v328, 0.0
      %v361 = vmax.f32 %v329, 0.0
      %v362 = vmax.f32 %v330, 0.0
      %v363 = vmax.f32 %v331, 0.0
      %v364 = vmax.f32 %v332, 0.0
      %v365 = vmax.f32 %v333, 0.0
      %v366 = vmax.f32 %v334, 0.0
      %v367 = vmax.f32 %v335, 0.0
      %v368 = vmax.f32 %v336, 0.0
      %v369 = vmax.f32 %v337, 0.0
      %v370 = vmax.f32 %v338, 0.0
      %v371 = vmax.f32 %v339, 0.0
      %v372 = vmax.f32 %v340, 0.0
      %v373 = vmax.f32 %v341, 0.0
      %v374 = vmax.f32 %v342, 0.0
      %v375 = vmax.f32 %v343, 0.0
      %v376 = vmax.f32 %v344, 0.0
      %v377 = vmax.f32 %v345, 0.0
      %378 = vst [vmem:[#allocation2] sm:$0xff] 0.0
      %379 = vst [vmem:[#allocation2 + $0x8] sm:$0xff] 0.0
      %380 = vst [vmem:[#allocation2 + $0x10] sm:$0x3] 0.0
      %s381 = scalar_lea.vmem [#allocation2], 408
      %382 = vst [vmem:[%s381] sm:$0xff] 0.0
      %383 = vst [vmem:[%s381 + $0x8] sm:$0xff] 0.0
      %384 = vst [vmem:[%s381 + $0x10] sm:$0x3] 0.0
      %s385 = scalar_lea.vmem [#allocation2], 24
      %386 = vst [vmem:[%s385] sm:$0x1] 0.0
      %387 = vst [vmem:[%s385 + $0x18] sm:$0x1] 0.0
      %388 = vst [vmem:[%s385 + $0x30] sm:$0x1] 0.0
      %389 = vst [vmem:[%s385 + $0x48] sm:$0x1] 0.0
      %390 = vst [vmem:[%s385 + $0x60] sm:$0x1] 0.0
      %391 = vst [vmem:[%s385 + $0x78] sm:$0x1] 0.0
      %392 = vst [vmem:[%s385 + $0x90] sm:$0x1] 0.0
      %393 = vst [vmem:[%s385 + $0xa8] sm:$0x1] 0.0
      %394 = vst [vmem:[%s385 + $0xc0] sm:$0x1] 0.0
      %395 = vst [vmem:[%s385 + $0xd8] sm:$0x1] 0.0
      %396 = vst [vmem:[%s385 + $0xf0] sm:$0x1] 0.0
      %397 = vst [vmem:[%s385 + $0x108] sm:$0x1] 0.0
      %398 = vst [vmem:[%s385 + $0x120] sm:$0x1] 0.0
      %399 = vst [vmem:[%s385 + $0x138] sm:$0x1] 0.0
      %400 = vst [vmem:[%s385 + $0x150] sm:$0x1] 0.0
      %401 = vst [vmem:[%s385 + $0x168] sm:$0x1] 0.0
      %402 = vst [vmem:[%s385 + $0x11] sm:$0x1] 0.0
      %403 = vst [vmem:[%s385 + $0x29] sm:$0x1] 0.0
      %404 = vst [vmem:[%s385 + $0x41] sm:$0x1] 0.0
      %405 = vst [vmem:[%s385 + $0x59] sm:$0x1] 0.0
      %406 = vst [vmem:[%s385 + $0x71] sm:$0x1] 0.0
      %407 = vst [vmem:[%s385 + $0x89] sm:$0x1] 0.0
      %408 = vst [vmem:[%s385 + $0xa1] sm:$0x1] 0.0
      %409 = vst [vmem:[%s385 + $0xb9] sm:$0x1] 0.0
      %410 = vst [vmem:[%s385 + $0xd1] sm:$0x1] 0.0
      %411 = vst [vmem:[%s385 + $0xe9] sm:$0x1] 0.0
      %412 = vst [vmem:[%s385 + $0x101] sm:$0x1] 0.0
      %413 = vst [vmem:[%s385 + $0x119] sm:$0x1] 0.0
      %414 = vst [vmem:[%s385 + $0x131] sm:$0x1] 0.0
      %415 = vst [vmem:[%s385 + $0x149] sm:$0x1] 0.0
      %416 = vst [vmem:[%s385 + $0x161] sm:$0x1] 0.0
      %417 = vst [vmem:[%s385 + $0x179] sm:$0x1] 0.0
      %418 = vst [vmem:[%s385 + $0x1] sm:$0xff] %v346
      %419 = vst [vmem:[%s385 + $0x9] sm:$0xff] %v347
      %420 = vst [vmem:[%s385 + $0x19] sm:$0xff] %v348
      %421 = vst [vmem:[%s385 + $0x21] sm:$0xff] %v349
      %422 = vst [vmem:[%s385 + $0x31] sm:$0xff] %v350
      %423 = vst [vmem:[%s385 + $0x39] sm:$0xff] %v351
      %424 = vst [vmem:[%s385 + $0x49] sm:$0xff] %v352
      %425 = vst [vmem:[%s385 + $0x51] sm:$0xff] %v353
      %426 = vst [vmem:[%s385 + $0x61] sm:$0xff] %v354
      %427 = vst [vmem:[%s385 + $0x69] sm:$0xff] %v355
      %428 = vst [vmem:[%s385 + $0x79] sm:$0xff] %v356
      %429 = vst [vmem:[%s385 + $0x81] sm:$0xff] %v357
      %430 = vst [vmem:[%s385 + $0x91] sm:$0xff] %v358
      %431 = vst [vmem:[%s385 + $0x99] sm:$0xff] %v359
      %432 = vst [vmem:[%s385 + $0xa9] sm:$0xff] %v360
      %433 = vst [vmem:[%s385 + $0xb1] sm:$0xff] %v361
      %434 = vst [vmem:[%s385 + $0xc1] sm:$0xff] %v362
      %435 = vst [vmem:[%s385 + $0xc9] sm:$0xff] %v363
      %436 = vst [vmem:[%s385 + $0xd9] sm:$0xff] %v364
      %437 = vst [vmem:[%s385 + $0xe1] sm:$0xff] %v365
      %438 = vst [vmem:[%s385 + $0xf1] sm:$0xff] %v366
      %439 = vst [vmem:[%s385 + $0xf9] sm:$0xff] %v367
      %440 = vst [vmem:[%s385 + $0x109] sm:$0xff] %v368
      %441 = vst [vmem:[%s385 + $0x111] sm:$0xff] %v369
      %442 = vst [vmem:[%s385 + $0x121] sm:$0xff] %v370
      %443 = vst [vmem:[%s385 + $0x129] sm:$0xff] %v371
      %444 = vst [vmem:[%s385 + $0x139] sm:$0xff] %v372
      %445 = vst [vmem:[%s385 + $0x141] sm:$0xff] %v373
      %446 = vst [vmem:[%s385 + $0x151] sm:$0xff] %v374
      %447 = vst [vmem:[%s385 + $0x159] sm:$0xff] %v375
      %448 = vst [vmem:[%s385 + $0x169] sm:$0xff] %v376
      %449 = vst [vmem:[%s385 + $0x171] sm:$0xff] %v377
      %v450 = vld [vmem:[#allocation2] sm:$0xff]
      %v451 = vld [vmem:[#allocation2 + $0x8] sm:$0xff]
      %v452 = vld [vmem:[#allocation2 + $0x18] sm:$0xff]
      %v453 = vld [vmem:[#allocation2 + $0x20] sm:$0xff]
      %v454 = vld [vmem:[#allocation2 + $0x30] sm:$0xff]
      %v455 = vld [vmem:[#allocation2 + $0x38] sm:$0xff]
      %v456 = vld [vmem:[#allocation2 + $0x48] sm:$0xff]
      %v457 = vld [vmem:[#allocation2 + $0x50] sm:$0xff]
      %v458 = vld [vmem:[#allocation2 + $0x60] sm:$0xff]
      %v459 = vld [vmem:[#allocation2 + $0x68] sm:$0xff]
      %v460 = vld [vmem:[#allocation2 + $0x78] sm:$0xff]
      %v461 = vld [vmem:[#allocation2 + $0x80] sm:$0xff]
      %v462 = vld [vmem:[#allocation2 + $0x90] sm:$0xff]
      %v463 = vld [vmem:[#allocation2 + $0x98] sm:$0xff]
      %v464 = vld [vmem:[#allocation2 + $0xa8] sm:$0xff]
      %v465 = vld [vmem:[#allocation2 + $0xb0] sm:$0xff]
      %v466 = vld [vmem:[#allocation2 + $0xc0] sm:$0xff]
      %v467 = vld [vmem:[#allocation2 + $0xc8] sm:$0xff]
      %v468 = vld [vmem:[#allocation2 + $0xd8] sm:$0xff]
      %v469 = vld [vmem:[#allocation2 + $0xe0] sm:$0xff]
      %v470 = vld [vmem:[#allocation2 + $0xf0] sm:$0xff]
      %v471 = vld [vmem:[#allocation2 + $0xf8] sm:$0xff]
      %v472 = vld [vmem:[#allocation2 + $0x108] sm:$0xff]
      %v473 = vld [vmem:[#allocation2 + $0x110] sm:$0xff]
      %v474 = vld [vmem:[#allocation2 + $0x120] sm:$0xff]
      %v475 = vld [vmem:[#allocation2 + $0x128] sm:$0xff]
      %v476 = vld [vmem:[#allocation2 + $0x138] sm:$0xff]
      %v477 = vld [vmem:[#allocation2 + $0x140] sm:$0xff]
      %v478 = vld [vmem:[#allocation2 + $0x150] sm:$0xff]
      %v479 = vld [vmem:[#allocation2 + $0x158] sm:$0xff]
      %v480 = vld [vmem:[#allocation2 + $0x168] sm:$0xff]
      %v481 = vld [vmem:[#allocation2 + $0x170] sm:$0xff]
      %v482 = vld [vmem:[#allocation2 + $0x1] sm:$0xff]
      %v483 = vld [vmem:[#allocation2 + $0x9] sm:$0xff]
      %v484 = vld [vmem:[#allocation2 + $0x19] sm:$0xff]
      %v485 = vld [vmem:[#allocation2 + $0x21] sm:$0xff]
      %v486 = vld [vmem:[#allocation2 + $0x31] sm:$0xff]
      %v487 = vld [vmem:[#allocation2 + $0x39] sm:$0xff]
      %v488 = vld [vmem:[#allocation2 + $0x49] sm:$0xff]
      %v489 = vld [vmem:[#allocation2 + $0x51] sm:$0xff]
      %v490 = vld [vmem:[#allocation2 + $0x61] sm:$0xff]
      %v491 = vld [vmem:[#allocation2 + $0x69] sm:$0xff]
      %v492 = vld [vmem:[#allocation2 + $0x79] sm:$0xff]
      %v493 = vld [vmem:[#allocation2 + $0x81] sm:$0xff]
      %v494 = vld [vmem:[#allocation2 + $0x91] sm:$0xff]
      %v495 = vld [vmem:[#allocation2 + $0x99] sm:$0xff]
      %v496 = vld [vmem:[#allocation2 + $0xa9] sm:$0xff]
      %v497 = vld [vmem:[#allocation2 + $0xb1] sm:$0xff]
      %v498 = vld [vmem:[#allocation2 + $0xc1] sm:$0xff]
      %v499 = vld [vmem:[#allocation2 + $0xc9] sm:$0xff]
      %v500 = vld [vmem:[#allocation2 + $0xd9] sm:$0xff]
      %v501 = vld [vmem:[#allocation2 + $0xe1] sm:$0xff]
      %v502 = vld [vmem:[#allocation2 + $0xf1] sm:$0xff]
      %v503 = vld [vmem:[#allocation2 + $0xf9] sm:$0xff]
      %v504 = vld [vmem:[#allocation2 + $0x109] sm:$0xff]
      %v505 = vld [vmem:[#allocation2 + $0x111] sm:$0xff]
      %v506 = vld [vmem:[#allocation2 + $0x121] sm:$0xff]
      %v507 = vld [vmem:[#allocation2 + $0x129] sm:$0xff]
      %v508 = vld [vmem:[#allocation2 + $0x139] sm:$0xff]
      %v509 = vld [vmem:[#allocation2 + $0x141] sm:$0xff]
      %v510 = vld [vmem:[#allocation2 + $0x151] sm:$0xff]
      %v511 = vld [vmem:[#allocation2 + $0x159] sm:$0xff]
      %v512 = vld [vmem:[#allocation2 + $0x169] sm:$0xff]
      %v513 = vld [vmem:[#allocation2 + $0x171] sm:$0xff]
      %v514 = vld [vmem:[#allocation2 + $0x2] sm:$0xff]
      %v515 = vld [vmem:[#allocation2 + $0xa] sm:$0xff]
      %v516 = vld [vmem:[#allocation2 + $0x1a] sm:$0xff]
      %v517 = vld [vmem:[#allocation2 + $0x22] sm:$0xff]
      %v518 = vld [vmem:[#allocation2 + $0x32] sm:$0xff]
      %v519 = vld [vmem:[#allocation2 + $0x3a] sm:$0xff]
      %v520 = vld [vmem:[#allocation2 + $0x4a] sm:$0xff]
      %v521 = vld [vmem:[#allocation2 + $0x52] sm:$0xff]
      %v522 = vld [vmem:[#allocation2 + $0x62] sm:$0xff]
      %v523 = vld [vmem:[#allocation2 + $0x6a] sm:$0xff]
      %v524 = vld [vmem:[#allocation2 + $0x7a] sm:$0xff]
      %v525 = vld [vmem:[#allocation2 + $0x82] sm:$0xff]
      %v526 = vld [vmem:[#allocation2 + $0x92] sm:$0xff]
      %v527 = vld [vmem:[#allocation2 + $0x9a] sm:$0xff]
      %v528 = vld [vmem:[#allocation2 + $0xaa] sm:$0xff]
      %v529 = vld [vmem:[#allocation2 + $0xb2] sm:$0xff]
      %v530 = vld [vmem:[#allocation2 + $0xc2] sm:$0xff]
      %v531 = vld [vmem:[#allocation2 + $0xca] sm:$0xff]
      %v532 = vld [vmem:[#allocation2 + $0xda] sm:$0xff]
      %v533 = vld [vmem:[#allocation2 + $0xe2] sm:$0xff]
      %v534 = vld [vmem:[#allocation2 + $0xf2] sm:$0xff]
      %v535 = vld [vmem:[#allocation2 + $0xfa] sm:$0xff]
      %v536 = vld [vmem:[#allocation2 + $0x10a] sm:$0xff]
      %v537 = vld [vmem:[#allocation2 + $0x112] sm:$0xff]
      %v538 = vld [vmem:[#allocation2 + $0x122] sm:$0xff]
      %v539 = vld [vmem:[#allocation2 + $0x12a] sm:$0xff]
      %v540 = vld [vmem:[#allocation2 + $0x13a] sm:$0xff]
      %v541 = vld [vmem:[#allocation2 + $0x142] sm:$0xff]
      %v542 = vld [vmem:[#allocation2 + $0x152] sm:$0xff]
      %v543 = vld [vmem:[#allocation2 + $0x15a] sm:$0xff]
      %v544 = vld [vmem:[#allocation2 + $0x16a] sm:$0xff]
      %v545 = vld [vmem:[#allocation2 + $0x172] sm:$0xff]
      %v546 = vld [vmem:[%s385] sm:$0xff]
      %v547 = vld [vmem:[%s385 + $0x8] sm:$0xff]
      %v548 = vld [vmem:[%s385 + $0x18] sm:$0xff]
      %v549 = vld [vmem:[%s385 + $0x20] sm:$0xff]
      %v550 = vld [vmem:[%s385 + $0x30] sm:$0xff]
      %v551 = vld [vmem:[%s385 + $0x38] sm:$0xff]
      %v552 = vld [vmem:[%s385 + $0x48] sm:$0xff]
      %v553 = vld [vmem:[%s385 + $0x50] sm:$0xff]
      %v554 = vld [vmem:[%s385 + $0x60] sm:$0xff]
      %v555 = vld [vmem:[%s385 + $0x68] sm:$0xff]
      %v556 = vld [vmem:[%s385 + $0x78] sm:$0xff]
      %v557 = vld [vmem:[%s385 + $0x80] sm:$0xff]
      %v558 = vld [vmem:[%s385 + $0x90] sm:$0xff]
      %v559 = vld [vmem:[%s385 + $0x98] sm:$0xff]
      %v560 = vld [vmem:[%s385 + $0xa8] sm:$0xff]
      %v561 = vld [vmem:[%s385 + $0xb0] sm:$0xff]
      %v562 = vld [vmem:[%s385 + $0xc0] sm:$0xff]
      %v563 = vld [vmem:[%s385 + $0xc8] sm:$0xff]
      %v564 = vld [vmem:[%s385 + $0xd8] sm:$0xff]
      %v565 = vld [vmem:[%s385 + $0xe0] sm:$0xff]
      %v566 = vld [vmem:[%s385 + $0xf0] sm:$0xff]
      %v567 = vld [vmem:[%s385 + $0xf8] sm:$0xff]
      %v568 = vld [vmem:[%s385 + $0x108] sm:$0xff]
      %v569 = vld [vmem:[%s385 + $0x110] sm:$0xff]
      %v570 = vld [vmem:[%s385 + $0x120] sm:$0xff]
      %v571 = vld [vmem:[%s385 + $0x128] sm:$0xff]
      %v572 = vld [vmem:[%s385 + $0x138] sm:$0xff]
      %v573 = vld [vmem:[%s385 + $0x140] sm:$0xff]
      %v574 = vld [vmem:[%s385 + $0x150] sm:$0xff]
      %v575 = vld [vmem:[%s385 + $0x158] sm:$0xff]
      %v576 = vld [vmem:[%s385 + $0x168] sm:$0xff]
      %v577 = vld [vmem:[%s385 + $0x170] sm:$0xff]
      %v578 = vld [vmem:[%s385 + $0x1] sm:$0xff]
      %v579 = vld [vmem:[%s385 + $0x9] sm:$0xff]
      %v580 = vld [vmem:[%s385 + $0x19] sm:$0xff]
      %v581 = vld [vmem:[%s385 + $0x21] sm:$0xff]
      %v582 = vld [vmem:[%s385 + $0x31] sm:$0xff]
      %v583 = vld [vmem:[%s385 + $0x39] sm:$0xff]
      %v584 = vld [vmem:[%s385 + $0x49] sm:$0xff]
      %v585 = vld [vmem:[%s385 + $0x51] sm:$0xff]
      %v586 = vld [vmem:[%s385 + $0x61] sm:$0xff]
      %v587 = vld [vmem:[%s385 + $0x69] sm:$0xff]
      %v588 = vld [vmem:[%s385 + $0x79] sm:$0xff]
      %v589 = vld [vmem:[%s385 + $0x81] sm:$0xff]
      %v590 = vld [vmem:[%s385 + $0x91] sm:$0xff]
      %v591 = vld [vmem:[%s385 + $0x99] sm:$0xff]
      %v592 = vld [vmem:[%s385 + $0xa9] sm:$0xff]
      %v593 = vld [vmem:[%s385 + $0xb1] sm:$0xff]
      %v594 = vld [vmem:[%s385 + $0xc1] sm:$0xff]
      %v595 = vld [vmem:[%s385 + $0xc9] sm:$0xff]
      %v596 = vld [vmem:[%s385 + $0xd9] sm:$0xff]
      %v597 = vld [vmem:[%s385 + $0xe1] sm:$0xff]
      %v598 = vld [vmem:[%s385 + $0xf1] sm:$0xff]
      %v599 = vld [vmem:[%s385 + $0xf9] sm:$0xff]
      %v600 = vld [vmem:[%s385 + $0x109] sm:$0xff]
      %v601 = vld [vmem:[%s385 + $0x111] sm:$0xff]
      %v602 = vld [vmem:[%s385 + $0x121] sm:$0xff]
      %v603 = vld [vmem:[%s385 + $0x129] sm:$0xff]
      %v604 = vld [vmem:[%s385 + $0x139] sm:$0xff]
      %v605 = vld [vmem:[%s385 + $0x141] sm:$0xff]
      %v606 = vld [vmem:[%s385 + $0x151] sm:$0xff]
      %v607 = vld [vmem:[%s385 + $0x159] sm:$0xff]
      %v608 = vld [vmem:[%s385 + $0x169] sm:$0xff]
      %v609 = vld [vmem:[%s385 + $0x171] sm:$0xff]
      %v610 = vld [vmem:[%s385 + $0x2] sm:$0xff]
      %v611 = vld [vmem:[%s385 + $0xa] sm:$0xff]
      %v612 = vld [vmem:[%s385 + $0x1a] sm:$0xff]
      %v613 = vld [vmem:[%s385 + $0x22] sm:$0xff]
      %v614 = vld [vmem:[%s385 + $0x32] sm:$0xff]
      %v615 = vld [vmem:[%s385 + $0x3a] sm:$0xff]
      %v616 = vld [vmem:[%s385 + $0x4a] sm:$0xff]
      %v617 = vld [vmem:[%s385 + $0x52] sm:$0xff]
      %v618 = vld [vmem:[%s385 + $0x62] sm:$0xff]
      %v619 = vld [vmem:[%s385 + $0x6a] sm:$0xff]
      %v620 = vld [vmem:[%s385 + $0x7a] sm:$0xff]
      %v621 = vld [vmem:[%s385 + $0x82] sm:$0xff]
      %v622 = vld [vmem:[%s385 + $0x92] sm:$0xff]
      %v623 = vld [vmem:[%s385 + $0x9a] sm:$0xff]
      %v624 = vld [vmem:[%s385 + $0xaa] sm:$0xff]
      %v625 = vld [vmem:[%s385 + $0xb2] sm:$0xff]
      %v626 = vld [vmem:[%s385 + $0xc2] sm:$0xff]
      %v627 = vld [vmem:[%s385 + $0xca] sm:$0xff]
      %v628 = vld [vmem:[%s385 + $0xda] sm:$0xff]
      %v629 = vld [vmem:[%s385 + $0xe2] sm:$0xff]
      %v630 = vld [vmem:[%s385 + $0xf2] sm:$0xff]
      %v631 = vld [vmem:[%s385 + $0xfa] sm:$0xff]
      %v632 = vld [vmem:[%s385 + $0x10a] sm:$0xff]
      %v633 = vld [vmem:[%s385 + $0x112] sm:$0xff]
      %v634 = vld [vmem:[%s385 + $0x122] sm:$0xff]
      %v635 = vld [vmem:[%s385 + $0x12a] sm:$0xff]
      %v636 = vld [vmem:[%s385 + $0x13a] sm:$0xff]
      %v637 = vld [vmem:[%s385 + $0x142] sm:$0xff]
      %v638 = vld [vmem:[%s385 + $0x152] sm:$0xff]
      %v639 = vld [vmem:[%s385 + $0x15a] sm:$0xff]
      %v640 = vld [vmem:[%s385 + $0x16a] sm:$0xff]
      %v641 = vld [vmem:[%s385 + $0x172] sm:$0xff]
      %s642 = scalar_lea.vmem [#allocation2], 48
      %v643 = vld [vmem:[%s642] sm:$0xff]
      %v644 = vld [vmem:[%s642 + $0x8] sm:$0xff]
      %v645 = vld [vmem:[%s642 + $0x18] sm:$0xff]
      %v646 = vld [vmem:[%s642 + $0x20] sm:$0xff]
      %v647 = vld [vmem:[%s642 + $0x30] sm:$0xff]
      %v648 = vld [vmem:[%s642 + $0x38] sm:$0xff]
      %v649 = vld [vmem:[%s642 + $0x48] sm:$0xff]
      %v650 = vld [vmem:[%s642 + $0x50] sm:$0xff]
      %v651 = vld [vmem:[%s642 + $0x60] sm:$0xff]
      %v652 = vld [vmem:[%s642 + $0x68] sm:$0xff]
      %v653 = vld [vmem:[%s642 + $0x78] sm:$0xff]
      %v654 = vld [vmem:[%s642 + $0x80] sm:$0xff]
      %v655 = vld [vmem:[%s642 + $0x90] sm:$0xff]
      %v656 = vld [vmem:[%s642 + $0x98] sm:$0xff]
      %v657 = vld [vmem:[%s642 + $0xa8] sm:$0xff]
      %v658 = vld [vmem:[%s642 + $0xb0] sm:$0xff]
      %v659 = vld [vmem:[%s642 + $0xc0] sm:$0xff]
      %v660 = vld [vmem:[%s642 + $0xc8] sm:$0xff]
      %v661 = vld [vmem:[%s642 + $0xd8] sm:$0xff]
      %v662 = vld [vmem:[%s642 + $0xe0] sm:$0xff]
      %v663 = vld [vmem:[%s642 + $0xf0] sm:$0xff]
      %v664 = vld [vmem:[%s642 + $0xf8] sm:$0xff]
      %v665 = vld [vmem:[%s642 + $0x108] sm:$0xff]
      %v666 = vld [vmem:[%s642 + $0x110] sm:$0xff]
      %v667 = vld [vmem:[%s642 + $0x120] sm:$0xff]
      %v668 = vld [vmem:[%s642 + $0x128] sm:$0xff]
      %v669 = vld [vmem:[%s642 + $0x138] sm:$0xff]
      %v670 = vld [vmem:[%s642 + $0x140] sm:$0xff]
      %v671 = vld [vmem:[%s642 + $0x150] sm:$0xff]
      %v672 = vld [vmem:[%s642 + $0x158] sm:$0xff]
      %v673 = vld [vmem:[%s642 + $0x168] sm:$0xff]
      %v674 = vld [vmem:[%s642 + $0x170] sm:$0xff]
      %v675 = vld [vmem:[%s642 + $0x1] sm:$0xff]
      %v676 = vld [vmem:[%s642 + $0x9] sm:$0xff]
      %v677 = vld [vmem:[%s642 + $0x19] sm:$0xff]
      %v678 = vld [vmem:[%s642 + $0x21] sm:$0xff]
      %v679 = vld [vmem:[%s642 + $0x31] sm:$0xff]
      %v680 = vld [vmem:[%s642 + $0x39] sm:$0xff]
      %v681 = vld [vmem:[%s642 + $0x49] sm:$0xff]
      %v682 = vld [vmem:[%s642 + $0x51] sm:$0xff]
      %v683 = vld [vmem:[%s642 + $0x61] sm:$0xff]
      %v684 = vld [vmem:[%s642 + $0x69] sm:$0xff]
      %v685 = vld [vmem:[%s642 + $0x79] sm:$0xff]
      %v686 = vld [vmem:[%s642 + $0x81] sm:$0xff]
      %v687 = vld [vmem:[%s642 + $0x91] sm:$0xff]
      %v688 = vld [vmem:[%s642 + $0x99] sm:$0xff]
      %v689 = vld [vmem:[%s642 + $0xa9] sm:$0xff]
      %v690 = vld [vmem:[%s642 + $0xb1] sm:$0xff]
      %v691 = vld [vmem:[%s642 + $0xc1] sm:$0xff]
      %v692 = vld [vmem:[%s642 + $0xc9] sm:$0xff]
      %v693 = vld [vmem:[%s642 + $0xd9] sm:$0xff]
      %v694 = vld [vmem:[%s642 + $0xe1] sm:$0xff]
      %v695 = vld [vmem:[%s642 + $0xf1] sm:$0xff]
      %v696 = vld [vmem:[%s642 + $0xf9] sm:$0xff]
      %v697 = vld [vmem:[%s642 + $0x109] sm:$0xff]
      %v698 = vld [vmem:[%s642 + $0x111] sm:$0xff]
      %v699 = vld [vmem:[%s642 + $0x121] sm:$0xff]
      %v700 = vld [vmem:[%s642 + $0x129] sm:$0xff]
      %v701 = vld [vmem:[%s642 + $0x139] sm:$0xff]
      %v702 = vld [vmem:[%s642 + $0x141] sm:$0xff]
      %v703 = vld [vmem:[%s642 + $0x151] sm:$0xff]
      %v704 = vld [vmem:[%s642 + $0x159] sm:$0xff]
      %v705 = vld [vmem:[%s642 + $0x169] sm:$0xff]
      %v706 = vld [vmem:[%s642 + $0x171] sm:$0xff]
      %v707 = vld [vmem:[%s642 + $0x2] sm:$0xff]
      %v708 = vld [vmem:[%s642 + $0xa] sm:$0xff]
      %v709 = vld [vmem:[%s642 + $0x1a] sm:$0xff]
      %v710 = vld [vmem:[%s642 + $0x22] sm:$0xff]
      %v711 = vld [vmem:[%s642 + $0x32] sm:$0xff]
      %v712 = vld [vmem:[%s642 + $0x3a] sm:$0xff]
      %v713 = vld [vmem:[%s642 + $0x4a] sm:$0xff]
      %v714 = vld [vmem:[%s642 + $0x52] sm:$0xff]
      %v715 = vld [vmem:[%s642 + $0x62] sm:$0xff]
      %v716 = vld [vmem:[%s642 + $0x6a] sm:$0xff]
      %v717 = vld [vmem:[%s642 + $0x7a] sm:$0xff]
      %v718 = vld [vmem:[%s642 + $0x82] sm:$0xff]
      %v719 = vld [vmem:[%s642 + $0x92] sm:$0xff]
      %v720 = vld [vmem:[%s642 + $0x9a] sm:$0xff]
      %v721 = vld [vmem:[%s642 + $0xaa] sm:$0xff]
      %v722 = vld [vmem:[%s642 + $0xb2] sm:$0xff]
      %v723 = vld [vmem:[%s642 + $0xc2] sm:$0xff]
      %v724 = vld [vmem:[%s642 + $0xca] sm:$0xff]
      %v725 = vld [vmem:[%s642 + $0xda] sm:$0xff]
      %v726 = vld [vmem:[%s642 + $0xe2] sm:$0xff]
      %v727 = vld [vmem:[%s642 + $0xf2] sm:$0xff]
      %v728 = vld [vmem:[%s642 + $0xfa] sm:$0xff]
      %v729 = vld [vmem:[%s642 + $0x10a] sm:$0xff]
      %v730 = vld [vmem:[%s642 + $0x112] sm:$0xff]
      %v731 = vld [vmem:[%s642 + $0x122] sm:$0xff]
      %v732 = vld [vmem:[%s642 + $0x12a] sm:$0xff]
      %v733 = vld [vmem:[%s642 + $0x13a] sm:$0xff]
      %v734 = vld [vmem:[%s642 + $0x142] sm:$0xff]
      %v735 = vld [vmem:[%s642 + $0x152] sm:$0xff]
      %v736 = vld [vmem:[%s642 + $0x15a] sm:$0xff]
      %v737 = vld [vmem:[%s642 + $0x16a] sm:$0xff]
      %v738 = vld [vmem:[%s642 + $0x172] sm:$0xff]
      %v739 = vld [vmem:[%s3] sm:$0xff]
      %v740 = vld [vmem:[%s3 + $0x8] sm:$0xff]
      %v741 = vld [vmem:[%s3 + $0x10] sm:$0xff]
      %v742 = vld [vmem:[%s3 + $0x18] sm:$0xff]
      %v743 = vld [vmem:[%s3 + $0x20] sm:$0xff]
      %v744 = vld [vmem:[%s3 + $0x28] sm:$0xff]
      %v745 = vld [vmem:[%s3 + $0x30] sm:$0xff]
      %v746 = vld [vmem:[%s3 + $0x38] sm:$0xff]
      %v747 = vld [vmem:[%s3 + $0x40] sm:$0xff]
      %v748 = vld [vmem:[%s3 + $0x48] sm:$0xff]
      %v749 = vld [vmem:[%s3 + $0x50] sm:$0xff]
      %v750 = vld [vmem:[%s3 + $0x58] sm:$0xff]
      %v751 = vld [vmem:[%s3 + $0x60] sm:$0xff]
      %v752 = vld [vmem:[%s3 + $0x68] sm:$0xff]
      %v753 = vld [vmem:[%s3 + $0x70] sm:$0xff]
      %v754 = vld [vmem:[%s3 + $0x78] sm:$0xff]
      %v755 = vld [vmem:[%s3 + $0x80] sm:$0xff]
      %v756 = vld [vmem:[%s3 + $0x88] sm:$0xff]
      %v757 = vld [vmem:[%s3 + $0x90] sm:$0xff]
      %v758 = vld [vmem:[%s3 + $0x98] sm:$0xff]
      %v759 = vld [vmem:[%s3 + $0xa0] sm:$0xff]
      %v760 = vld [vmem:[%s3 + $0xa8] sm:$0xff]
      %v761 = vld [vmem:[%s3 + $0xb0] sm:$0xff]
      %v762 = vld [vmem:[%s3 + $0xb8] sm:$0xff]
      %v763 = vld [vmem:[%s3 + $0xc0] sm:$0xff]
      %v764 = vld [vmem:[%s3 + $0xc8] sm:$0xff]
      %v765 = vld [vmem:[%s3 + $0xd0] sm:$0xff]
      %v766 = vld [vmem:[%s3 + $0xd8] sm:$0xff]
      %v767 = vld [vmem:[%s3 + $0xe0] sm:$0xff]
      %v768 = vld [vmem:[%s3 + $0xe8] sm:$0xff]
      %v769 = vld [vmem:[%s3 + $0xf0] sm:$0xff]
      %v770 = vld [vmem:[%s3 + $0xf8] sm:$0xff]
      %v771 = vld [vmem:[%s3 + $0x100] sm:$0xff]
      %v772 = vld [vmem:[%s3 + $0x108] sm:$0xff]
      %v773 = vld [vmem:[%s3 + $0x110] sm:$0xff]
      %v774 = vld [vmem:[%s3 + $0x118] sm:$0xff]
      %v775 = vld [vmem:[%s3 + $0x120] sm:$0xff]
      %v776 = vld [vmem:[%s3 + $0x128] sm:$0xff]
      %v777 = vld [vmem:[%s3 + $0x130] sm:$0xff]
      %v778 = vld [vmem:[%s3 + $0x138] sm:$0xff]
      %v779 = vld [vmem:[%s3 + $0x140] sm:$0xff]
      %v780 = vld [vmem:[%s3 + $0x148] sm:$0xff]
      %v781 = vld [vmem:[%s3 + $0x150] sm:$0xff]
      %v782 = vld [vmem:[%s3 + $0x158] sm:$0xff]
      %v783 = vld [vmem:[%s3 + $0x160] sm:$0xff]
      %v784 = vld [vmem:[%s3 + $0x168] sm:$0xff]
      %v785 = vld [vmem:[%s3 + $0x170] sm:$0xff]
      %v786 = vld [vmem:[%s3 + $0x178] sm:$0xff]
      %v787 = vld [vmem:[%s3 + $0x180] sm:$0xff]
      %v788 = vld [vmem:[%s3 + $0x188] sm:$0xff]
      %v789 = vld [vmem:[%s3 + $0x190] sm:$0xff]
      %v790 = vld [vmem:[%s3 + $0x198] sm:$0xff]
      %v791 = vld [vmem:[%s3 + $0x1a0] sm:$0xff]
      %v792 = vld [vmem:[%s3 + $0x1a8] sm:$0xff]
      %v793 = vld [vmem:[%s3 + $0x1b0] sm:$0xff]
      %v794 = vld [vmem:[%s3 + $0x1b8] sm:$0xff]
      %v795 = vld [vmem:[%s3 + $0x1c0] sm:$0xff]
      %v796 = vld [vmem:[%s3 + $0x1c8] sm:$0xff]
      %v797 = vld [vmem:[%s3 + $0x1d0] sm:$0xff]
      %v798 = vld [vmem:[%s3 + $0x1d8] sm:$0xff]
      %v799 = vld [vmem:[%s3 + $0x1e0] sm:$0xff]
      %v800 = vld [vmem:[%s3 + $0x1e8] sm:$0xff]
      %v801 = vld [vmem:[%s3 + $0x1f0] sm:$0xff]
      %v802 = vld [vmem:[%s3 + $0x1f8] sm:$0xff]
      %v803 = vld [vmem:[%s3 + $0x200] sm:$0xff]
      %v804 = vld [vmem:[%s3 + $0x208] sm:$0xff]
      %v805 = vld [vmem:[%s3 + $0x210] sm:$0xff]
      %v806 = vld [vmem:[%s3 + $0x218] sm:$0xff]
      %v807 = vld [vmem:[%s3 + $0x220] sm:$0xff]
      %v808 = vld [vmem:[%s3 + $0x228] sm:$0xff]
      %v809 = vld [vmem:[%s3 + $0x230] sm:$0xff]
      %v810 = vld [vmem:[%s3 + $0x238] sm:$0xff]
      %v811 = vld [vmem:[%s3 + $0x240] sm:$0xff]
      %v812 = vld [vmem:[%s3 + $0x248] sm:$0xff]
      %v813 = vld [vmem:[%s3 + $0x250] sm:$0xff]
      %v814 = vld [vmem:[%s3 + $0x258] sm:$0xff]
      %v815 = vld [vmem:[%s3 + $0x260] sm:$0xff]
      %v816 = vld [vmem:[%s3 + $0x268] sm:$0xff]
      %v817 = vld [vmem:[%s3 + $0x270] sm:$0xff]
      %v818 = vld [vmem:[%s3 + $0x278] sm:$0xff]
      %v819 = vld [vmem:[%s3 + $0x280] sm:$0xff]
      %v820 = vld [vmem:[%s3 + $0x288] sm:$0xff]
      %v821 = vld [vmem:[%s3 + $0x290] sm:$0xff]
      %v822 = vld [vmem:[%s3 + $0x298] sm:$0xff]
      %v823 = vld [vmem:[%s3 + $0x2a0] sm:$0xff]
      %v824 = vld [vmem:[%s3 + $0x2a8] sm:$0xff]
      %v825 = vld [vmem:[%s3 + $0x2b0] sm:$0xff]
      %v826 = vld [vmem:[%s3 + $0x2b8] sm:$0xff]
      %v827 = vld [vmem:[%s3 + $0x2c0] sm:$0xff]
      %v828 = vld [vmem:[%s3 + $0x2c8] sm:$0xff]
      %v829 = vld [vmem:[%s3 + $0x2d0] sm:$0xff]
      %v830 = vld [vmem:[%s3 + $0x2d8] sm:$0xff]
      %v831 = vld [vmem:[%s3 + $0x2e0] sm:$0xff]
      %v832 = vld [vmem:[%s3 + $0x2e8] sm:$0xff]
      %v833 = vld [vmem:[%s3 + $0x2f0] sm:$0xff]
      %v834 = vld [vmem:[%s3 + $0x2f8] sm:$0xff]
      %v835 = vld [vmem:[%s3 + $0x300] sm:$0xff]
      %v836 = vld [vmem:[%s3 + $0x308] sm:$0xff]
      %v837 = vld [vmem:[%s3 + $0x310] sm:$0xff]
      %v838 = vld [vmem:[%s3 + $0x318] sm:$0xff]
      %v839 = vld [vmem:[%s3 + $0x320] sm:$0xff]
      %v840 = vld [vmem:[%s3 + $0x328] sm:$0xff]
      %v841 = vld [vmem:[%s3 + $0x330] sm:$0xff]
      %v842 = vld [vmem:[%s3 + $0x338] sm:$0xff]
      %v843 = vld [vmem:[%s3 + $0x340] sm:$0xff]
      %v844 = vld [vmem:[%s3 + $0x348] sm:$0xff]
      %v845 = vld [vmem:[%s3 + $0x350] sm:$0xff]
      %v846 = vld [vmem:[%s3 + $0x358] sm:$0xff]
      %v847 = vld [vmem:[%s3 + $0x360] sm:$0xff]
      %v848 = vld [vmem:[%s3 + $0x368] sm:$0xff]
      %v849 = vld [vmem:[%s3 + $0x370] sm:$0xff]
      %v850 = vld [vmem:[%s3 + $0x378] sm:$0xff]
      %v851 = vld [vmem:[%s3 + $0x380] sm:$0xff]
      %v852 = vld [vmem:[%s3 + $0x388] sm:$0xff]
      %v853 = vld [vmem:[%s3 + $0x390] sm:$0xff]
      %v854 = vld [vmem:[%s3 + $0x398] sm:$0xff]
      %v855 = vld [vmem:[%s3 + $0x3a0] sm:$0xff]
      %v856 = vld [vmem:[%s3 + $0x3a8] sm:$0xff]
      %v857 = vld [vmem:[%s3 + $0x3b0] sm:$0xff]
      %v858 = vld [vmem:[%s3 + $0x3b8] sm:$0xff]
      %v859 = vld [vmem:[%s3 + $0x3c0] sm:$0xff]
      %v860 = vld [vmem:[%s3 + $0x3c8] sm:$0xff]
      %v861 = vld [vmem:[%s3 + $0x3d0] sm:$0xff]
      %v862 = vld [vmem:[%s3 + $0x3d8] sm:$0xff]
      %v863 = vld [vmem:[%s3 + $0x3e0] sm:$0xff]
      %v864 = vld [vmem:[%s3 + $0x3e8] sm:$0xff]
      %v865 = vld [vmem:[%s3 + $0x3f0] sm:$0xff]
      %v866 = vld [vmem:[%s3 + $0x3f8] sm:$0xff]
      %v867 = vld [vmem:[%s3 + $0x400] sm:$0xff]
      %v868 = vld [vmem:[%s3 + $0x408] sm:$0xff]
      %v869 = vld [vmem:[%s3 + $0x410] sm:$0xff]
      %v870 = vld [vmem:[%s3 + $0x418] sm:$0xff]
      %v871 = vld [vmem:[%s3 + $0x420] sm:$0xff]
      %v872 = vld [vmem:[%s3 + $0x428] sm:$0xff]
      %v873 = vld [vmem:[%s3 + $0x430] sm:$0xff]
      %v874 = vld [vmem:[%s3 + $0x438] sm:$0xff]
      %v875 = vld [vmem:[%s3 + $0x440] sm:$0xff]
      %v876 = vld [vmem:[%s3 + $0x448] sm:$0xff]
      %v877 = vld [vmem:[%s3 + $0x450] sm:$0xff]
      %v878 = vld [vmem:[%s3 + $0x458] sm:$0xff]
      %v879 = vld [vmem:[%s3 + $0x460] sm:$0xff]
      %v880 = vld [vmem:[%s3 + $0x468] sm:$0xff]
      %v881 = vld [vmem:[%s3 + $0x470] sm:$0xff]
      %v882 = vld [vmem:[%s3 + $0x478] sm:$0xff]
      %883 = vmatprep.subr.mxu0 0.0
      %884 = vmatpush1.msra.mxu0 %v739
      %885 = vmatprep.subr.mxu0 0.0
      %886 = vmatpush1.msra.mxu0 %v740
      %887 = vmatprep.subr.mxu0 0.0
      %888 = vmatpush1.msra.mxu0 %v741
      %889 = vmatprep.subr.mxu0 0.0
      %890 = vmatpush1.msra.mxu0 %v742
      %891 = vmatprep.subr.mxu0 0.0
      %892 = vmatpush1.msra.mxu0 %v743
      %893 = vmatprep.subr.mxu0 0.0
      %894 = vmatpush1.msra.mxu0 %v744
      %895 = vmatprep.subr.mxu0 0.0
      %896 = vmatpush1.msra.mxu0 %v745
      %897 = vmatprep.subr.mxu0 0.0
      %898 = vmatpush1.msra.mxu0 %v746
      %899 = vmatprep.subr.mxu0 0.0
      %900 = vmatpush1.msra.mxu0 %v747
      %901 = vmatprep.subr.mxu0 0.0
      %902 = vmatpush1.msra.mxu0 %v748
      %903 = vmatprep.subr.mxu0 0.0
      %904 = vmatpush1.msra.mxu0 %v749
      %905 = vmatprep.subr.mxu0 0.0
      %906 = vmatpush1.msra.mxu0 %v750
      %907 = vmatprep.subr.mxu0 0.0
      %908 = vmatpush1.msra.mxu0 %v751
      %909 = vmatprep.subr.mxu0 0.0
      %910 = vmatpush1.msra.mxu0 %v752
      %911 = vmatprep.subr.mxu0 0.0
      %912 = vmatpush1.msra.mxu0 %v753
      %913 = vmatprep.subr.mxu0 0.0
      %914 = vmatpush1.msra.mxu0 %v754
      %915 = vmatprep.subr.mxu0 0.0
      %916 = vmatpush1.msra.mxu0 %v755
      %917 = vmatprep.subr.mxu0 0.0
      %918 = vmatpush1.msra.mxu0 %v756
      %919 = vmatprep.subr.mxu0 0.0
      %920 = vmatpush1.msra.mxu0 %v757
      %921 = vmatprep.subr.mxu0 0.0
      %922 = vmatpush1.msra.mxu0 %v758
      %923 = vmatprep.subr.mxu0 0.0
      %924 = vmatpush1.msra.mxu0 %v759
      %925 = vmatprep.subr.mxu0 0.0
      %926 = vmatpush1.msra.mxu0 %v760
      %927 = vmatprep.subr.mxu0 0.0
      %928 = vmatpush1.msra.mxu0 %v761
      %929 = vmatprep.subr.mxu0 0.0
      %930 = vmatpush1.msra.mxu0 %v762
      %931 = vmatprep.subr.mxu0 0.0
      %932 = vmatpush1.msra.mxu0 %v763
      %933 = vmatprep.subr.mxu0 0.0
      %934 = vmatpush1.msra.mxu0 %v764
      %935 = vmatprep.subr.mxu0 0.0
      %936 = vmatpush1.msra.mxu0 %v765
      %937 = vmatprep.subr.mxu0 0.0
      %938 = vmatpush1.msra.mxu0 %v766
      %939 = vmatprep.subr.mxu0 0.0
      %940 = vmatpush1.msra.mxu0 %v767
      %941 = vmatprep.subr.mxu0 0.0
      %942 = vmatpush1.msra.mxu0 %v768
      %943 = vmatprep.subr.mxu0 0.0
      %944 = vmatpush1.msra.mxu0 %v769
      %945 = vmatprep.subr.mxu0 0.0
      %946 = vmatpush1.msra.mxu0 %v770
      %947 = vmatprep.mubr.f32.mxu0 %v482
      %948 = vmatmul.mubr.f32.gmra.mrb[0].mxu0 %v450
      %v949 = vpop.f32.mrb[0].mxu0
      %v950 = vadd.f32 0.0, %v949
      %v951 = vpop.f32.mrb[0].mxu0
      %952 = vmatprep.mubr.f32.mxu0 %v483
      %953 = vmatmul.mubr.f32.gmra.mrb[0].mxu0 %v451
      %v954 = vpop.f32.mrb[0].mxu0
      %v955 = vadd.f32 0.0, %v954
      %v956 = vpop.f32.mrb[0].mxu0
      %957 = vmatprep.mubr.f32.mxu0 %v484
      %958 = vmatmul.mubr.f32.gmra.mrb[0].mxu0 %v452
      %v959 = vpop.f32.mrb[0].mxu0
      %v960 = vadd.f32 0.0, %v959
      %v961 = vpop.f32.mrb[0].mxu0
      %962 = vmatprep.mubr.f32.mxu0 %v485
      %963 = vmatmul.mubr.f32.gmra.mrb[0].mxu0 %v453
      %v964 = vpop.f32.mrb[0].mxu0
      %v965 = vadd.f32 0.0, %v964
      %v966 = vpop.f32.mrb[0].mxu0
      %967 = vmatprep.mubr.f32.mxu0 %v486
      %968 = vmatmul.mubr.f32.gmra.mrb[0].mxu0 %v454
      %v969 = vpop.f32.mrb[0].mxu0
      %v970 = vadd.f32 0.0, %v969
      %v971 = vpop.f32.mrb[0].mxu0
      %972 = vmatprep.mubr.f32.mxu0 %v487
      %973 = vmatmul.mubr.f32.gmra.mrb[0].mxu0 %v455
      %v974 = vpop.f32.mrb[0].mxu0
      %v975 = vadd.f32 0.0, %v974
      %v976 = vpop.f32.mrb[0].mxu0
      %977 = vmatprep.mubr.f32.mxu0 %v488
      %978 = vmatmul.mubr.f32.gmra.mrb[0].mxu0 %v456
      %v979 = vpop.f32.mrb[0].mxu0
      %v980 = vadd.f32 0.0, %v979
      %v981 = vpop.f32.mrb[0].mxu0
      %982 = vmatprep.mubr.f32.mxu0 %v489
      %983 = vmatmul.mubr.f32.gmra.mrb[0].mxu0 %v457
      %v984 = vpop.f32.mrb[0].mxu0
      %v985 = vadd.f32 0.0, %v984
      %v986 = vpop.f32.mrb[0].mxu0
      %987 = vmatprep.mubr.f32.mxu0 %v490
      %988 = vmatmul.mubr.f32.gmra.mrb[0].mxu0 %v458
      %v989 = vpop.f32.mrb[0].mxu0
      %v990 = vadd.f32 0.0, %v989
      %v991 = vpop.f32.mrb[0].mxu0
      %992 = vmatprep.mubr.f32.mxu0 %v491
      %993 = vmatmul.mubr.f32.gmra.mrb[0].mxu0 %v459
      %v994 = vpop.f32.mrb[0].mxu0
      %v995 = vadd.f32 0.0, %v994
      %v996 = vpop.f32.mrb[0].mxu0
      %997 = vmatprep.mubr.f32.mxu0 %v492
      %998 = vmatmul.mubr.f32.gmra.mrb[0].mxu0 %v460
      %v999 = vpop.f32.mrb[0].mxu0
      %v1000 = vadd.f32 0.0, %v999
      %v1001 = vpop.f32.mrb[0].mxu0
      %1002 = vmatprep.mubr.f32.mxu0 %v493
      %1003 = vmatmul.mubr.f32.gmra.mrb[0].mxu0 %v461
      %v1004 = vpop.f32.mrb[0].mxu0
      %v1005 = vadd.f32 0.0, %v1004
      %v1006 = vpop.f32.mrb[0].mxu0
      %1007 = vmatprep.mubr.f32.mxu0 %v494
      %1008 = vmatmul.mubr.f32.gmra.mrb[0].mxu0 %v462
      %v1009 = vpop.f32.mrb[0].mxu0
      %v1010 = vadd.f32 0.0, %v1009
      %v1011 = vpop.f32.mrb[0].mxu0
      %1012 = vmatprep.mubr.f32.mxu0 %v495
      %1013 = vmatmul.mubr.f32.gmra.mrb[0].mxu0 %v463
      %v1014 = vpop.f32.mrb[0].mxu0
      %v1015 = vadd.f32 0.0, %v1014
      %v1016 = vpop.f32.mrb[0].mxu0
      %1017 = vmatprep.mubr.f32.mxu0 %v496
      %1018 = vmatmul.mubr.f32.gmra.mrb[0].mxu0 %v464
      %v1019 = vpop.f32.mrb[0].mxu0
      %v1020 = vadd.f32 0.0, %v1019
      %v1021 = vpop.f32.mrb[0].mxu0
      %1022 = vmatprep.mubr.f32.mxu0 %v497
      %1023 = vmatmul.mubr.f32.gmra.mrb[0].mxu0 %v465
      %v1024 = vpop.f32.mrb[0].mxu0
      %v1025 = vadd.f32 0.0, %v1024
      %v1026 = vpop.f32.mrb[0].mxu0
      %1027 = vmatprep.mubr.f32.mxu0 %v498
      %1028 = vmatmul.mubr.f32.gmra.mrb[0].mxu0 %v466
      %v1029 = vpop.f32.mrb[0].mxu0
      %v1030 = vadd.f32 0.0, %v1029
      %v1031 = vpop.f32.mrb[0].mxu0
      %1032 = vmatprep.mubr.f32.mxu0 %v499
      %1033 = vmatmul.mubr.f32.gmra.mrb[0].mxu0 %v467
      %v1034 = vpop.f32.mrb[0].mxu0
      %v1035 = vadd.f32 0.0, %v1034
      %v1036 = vpop.f32.mrb[0].mxu0
      %1037 = vmatprep.mubr.f32.mxu0 %v500
      %1038 = vmatmul.mubr.f32.gmra.mrb[0].mxu0 %v468
      %v1039 = vpop.f32.mrb[0].mxu0
      %v1040 = vadd.f32 0.0, %v1039
      %v1041 = vpop.f32.mrb[0].mxu0
      %1042 = vmatprep.mubr.f32.mxu0 %v501
      %1043 = vmatmul.mubr.f32.gmra.mrb[0].mxu0 %v469
      %v1044 = vpop.f32.mrb[0].mxu0
      %v1045 = vadd.f32 0.0, %v1044
      %v1046 = vpop.f32.mrb[0].mxu0
      %1047 = vmatprep.mubr.f32.mxu0 %v502
      %1048 = vmatmul.mubr.f32.gmra.mrb[0].mxu0 %v470
      %v1049 = vpop.f32.mrb[0].mxu0
      %v1050 = vadd.f32 0.0, %v1049
      %v1051 = vpop.f32.mrb[0].mxu0
      %1052 = vmatprep.mubr.f32.mxu0 %v503
      %1053 = vmatmul.mubr.f32.gmra.mrb[0].mxu0 %v471
      %v1054 = vpop.f32.mrb[0].mxu0
      %v1055 = vadd.f32 0.0, %v1054
      %v1056 = vpop.f32.mrb[0].mxu0
      %1057 = vmatprep.mubr.f32.mxu0 %v504
      %1058 = vmatmul.mubr.f32.gmra.mrb[0].mxu0 %v472
      %v1059 = vpop.f32.mrb[0].mxu0
      %v1060 = vadd.f32 0.0, %v1059
      %v1061 = vpop.f32.mrb[0].mxu0
      %1062 = vmatprep.mubr.f32.mxu0 %v505
      %1063 = vmatmul.mubr.f32.gmra.mrb[0].mxu0 %v473
      %v1064 = vpop.f32.mrb[0].mxu0
      %v1065 = vadd.f32 0.0, %v1064
      %v1066 = vpop.f32.mrb[0].mxu0
      %1067 = vmatprep.mubr.f32.mxu0 %v506
      %1068 = vmatmul.mubr.f32.gmra.mrb[0].mxu0 %v474
      %v1069 = vpop.f32.mrb[0].mxu0
      %v1070 = vadd.f32 0.0, %v1069
      %v1071 = vpop.f32.mrb[0].mxu0
      %1072 = vmatprep.mubr.f32.mxu0 %v507
      %1073 = vmatmul.mubr.f32.gmra.mrb[0].mxu0 %v475
      %v1074 = vpop.f32.mrb[0].mxu0
      %v1075 = vadd.f32 0.0, %v1074
      %v1076 = vpop.f32.mrb[0].mxu0
      %1077 = vmatprep.mubr.f32.mxu0 %v508
      %1078 = vmatmul.mubr.f32.gmra.mrb[0].mxu0 %v476
      %v1079 = vpop.f32.mrb[0].mxu0
      %v1080 = vadd.f32 0.0, %v1079
      %v1081 = vpop.f32.mrb[0].mxu0
      %1082 = vmatprep.mubr.f32.mxu0 %v509
      %1083 = vmatmul.mubr.f32.gmra.mrb[0].mxu0 %v477
      %v1084 = vpop.f32.mrb[0].mxu0
      %v1085 = vadd.f32 0.0, %v1084
      %v1086 = vpop.f32.mrb[0].mxu0
      %1087 = vmatprep.mubr.f32.mxu0 %v510
      %1088 = vmatmul.mubr.f32.gmra.mrb[0].mxu0 %v478
      %v1089 = vpop.f32.mrb[0].mxu0
      %v1090 = vadd.f32 0.0, %v1089
      %v1091 = vpop.f32.mrb[0].mxu0
      %1092 = vmatprep.mubr.f32.mxu0 %v511
      %1093 = vmatmul.mubr.f32.gmra.mrb[0].mxu0 %v479
      %v1094 = vpop.f32.mrb[0].mxu0
      %v1095 = vadd.f32 0.0, %v1094
      %v1096 = vpop.f32.mrb[0].mxu0
      %1097 = vmatprep.mubr.f32.mxu0 %v512
      %1098 = vmatmul.mubr.f32.gmra.mrb[0].mxu0 %v480
      %v1099 = vpop.f32.mrb[0].mxu0
      %v1100 = vadd.f32 0.0, %v1099
      %v1101 = vpop.f32.mrb[0].mxu0
      %1102 = vmatprep.mubr.f32.mxu0 %v513
      %1103 = vmatmul.mubr.f32.gmra.mrb[0].mxu0 %v481
      %v1104 = vpop.f32.mrb[0].mxu0
      %v1105 = vadd.f32 0.0, %v1104
      %v1106 = vpop.f32.mrb[0].mxu0
      %1107 = vdwg.mxu0
      %1108 = vmatprep.subr.mxu0 0.0
      %1109 = vmatpush1.msra.mxu0 %v771
      %1110 = vmatprep.subr.mxu0 0.0
      %1111 = vmatpush1.msra.mxu0 %v772
      %1112 = vmatprep.subr.mxu0 0.0
      %1113 = vmatpush1.msra.mxu0 %v773
      %1114 = vmatprep.subr.mxu0 0.0
      %1115 = vmatpush1.msra.mxu0 %v774
      %1116 = vmatprep.subr.mxu0 0.0
      %1117 = vmatpush1.msra.mxu0 %v775
      %1118 = vmatprep.subr.mxu0 0.0
      %1119 = vmatpush1.msra.mxu0 %v776
      %1120 = vmatprep.subr.mxu0 0.0
      %1121 = vmatpush1.msra.mxu0 %v777
      %1122 = vmatprep.subr.mxu0 0.0
      %1123 = vmatpush1.msra.mxu0 %v778
      %1124 = vmatprep.subr.mxu0 0.0
      %1125 = vmatpush1.msra.mxu0 %v779
      %1126 = vmatprep.subr.mxu0 0.0
      %1127 = vmatpush1.msra.mxu0 %v780
      %1128 = vmatprep.subr.mxu0 0.0
      %1129 = vmatpush1.msra.mxu0 %v781
      %1130 = vmatprep.subr.mxu0 0.0
      %1131 = vmatpush1.msra.mxu0 %v782
      %1132 = vmatprep.subr.mxu0 0.0
      %1133 = vmatpush1.msra.mxu0 %v783
      %1134 = vmatprep.subr.mxu0 0.0
      %1135 = vmatpush1.msra.mxu0 %v784
      %1136 = vmatprep.subr.mxu0 0.0
      %1137 = vmatpush1.msra.mxu0 %v785
      %1138 = vmatprep.subr.mxu0 0.0
      %1139 = vmatpush1.msra.mxu0 %v786
      %1140 = vmatprep.subr.mxu0 0.0
      %1141 = vmatpush1.msra.mxu0 %v787
      %1142 = vmatprep.subr.mxu0 0.0
      %1143 = vmatpush1.msra.mxu0 %v788
      %1144 = vmatprep.subr.mxu0 0.0
      %1145 = vmatpush1.msra.mxu0 %v789
      %1146 = vmatprep.subr.mxu0 0.0
      %1147 = vmatpush1.msra.mxu0 %v790
      %1148 = vmatprep.subr.mxu0 0.0
      %1149 = vmatpush1.msra.mxu0 %v791
      %1150 = vmatprep.subr.mxu0 0.0
      %1151 = vmatpush1.msra.mxu0 %v792
      %1152 = vmatprep.subr.mxu0 0.0
      %1153 = vmatpush1.msra.mxu0 %v793
      %1154 = vmatprep.subr.mxu0 0.0
      %1155 = vmatpush1.msra.mxu0 %v794
      %1156 = vmatprep.subr.mxu0 0.0
      %1157 = vmatpush1.msra.mxu0 %v795
      %1158 = vmatprep.subr.mxu0 0.0
      %1159 = vmatpush1.msra.mxu0 %v796
      %1160 = vmatprep.subr.mxu0 0.0
      %1161 = vmatpush1.msra.mxu0 %v797
      %1162 = vmatprep.subr.mxu0 0.0
      %1163 = vmatpush1.msra.mxu0 %v798
      %1164 = vmatprep.subr.mxu0 0.0
      %1165 = vmatpush1.msra.mxu0 %v799
      %1166 = vmatprep.subr.mxu0 0.0
      %1167 = vmatpush1.msra.mxu0 %v800
      %1168 = vmatprep.subr.mxu0 0.0
      %1169 = vmatpush1.msra.mxu0 %v801
      %1170 = vmatprep.subr.mxu0 0.0
      %1171 = vmatpush1.msra.mxu0 %v802
      %1172 = vmatprep.mubr.f32.mxu0 %v546
      %1173 = vmatmul.mubr.f32.gmra.mrb[0].mxu0 %v514
      %v1174 = vpop.f32.mrb[0].mxu0
      %v1175 = vadd.f32 %v950, %v1174
      %v1176 = vpop.f32.mrb[0].mxu0
      %1177 = vmatprep.mubr.f32.mxu0 %v547
      %1178 = vmatmul.mubr.f32.gmra.mrb[0].mxu0 %v515
      %v1179 = vpop.f32.mrb[0].mxu0
      %v1180 = vadd.f32 %v955, %v1179
      %v1181 = vpop.f32.mrb[0].mxu0
      %1182 = vmatprep.mubr.f32.mxu0 %v548
      %1183 = vmatmul.mubr.f32.gmra.mrb[0].mxu0 %v516
      %v1184 = vpop.f32.mrb[0].mxu0
      %v1185 = vadd.f32 %v960, %v1184
      %v1186 = vpop.f32.mrb[0].mxu0
      %1187 = vmatprep.mubr.f32.mxu0 %v549
      %1188 = vmatmul.mubr.f32.gmra.mrb[0].mxu0 %v517
      %v1189 = vpop.f32.mrb[0].mxu0
      %v1190 = vadd.f32 %v965, %v1189
      %v1191 = vpop.f32.mrb[0].mxu0
      %1192 = vmatprep.mubr.f32.mxu0 %v550
      %1193 = vmatmul.mubr.f32.gmra.mrb[0].mxu0 %v518
      %v1194 = vpop.f32.mrb[0].mxu0
      %v1195 = vadd.f32 %v970, %v1194
      %v1196 = vpop.f32.mrb[0].mxu0
      %1197 = vmatprep.mubr.f32.mxu0 %v551
      %1198 = vmatmul.mubr.f32.gmra.mrb[0].mxu0 %v519
      %v1199 = vpop.f32.mrb[0].mxu0
      %v1200 = vadd.f32 %v975, %v1199
      %v1201 = vpop.f32.mrb[0].mxu0
      %1202 = vmatprep.mubr.f32.mxu0 %v552
      %1203 = vmatmul.mubr.f32.gmra.mrb[0].mxu0 %v520
      %v1204 = vpop.f32.mrb[0].mxu0
      %v1205 = vadd.f32 %v980, %v1204
      %v1206 = vpop.f32.mrb[0].mxu0
      %1207 = vmatprep.mubr.f32.mxu0 %v553
      %1208 = vmatmul.mubr.f32.gmra.mrb[0].mxu0 %v521
      %v1209 = vpop.f32.mrb[0].mxu0
      %v1210 = vadd.f32 %v985, %v1209
      %v1211 = vpop.f32.mrb[0].mxu0
      %1212 = vmatprep.mubr.f32.mxu0 %v554
      %1213 = vmatmul.mubr.f32.gmra.mrb[0].mxu0 %v522
      %v1214 = vpop.f32.mrb[0].mxu0
      %v1215 = vadd.f32 %v990, %v1214
      %v1216 = vpop.f32.mrb[0].mxu0
      %1217 = vmatprep.mubr.f32.mxu0 %v555
      %1218 = vmatmul.mubr.f32.gmra.mrb[0].mxu0 %v523
      %v1219 = vpop.f32.mrb[0].mxu0
      %v1220 = vadd.f32 %v995, %v1219
      %v1221 = vpop.f32.mrb[0].mxu0
      %1222 = vmatprep.mubr.f32.mxu0 %v556
      %1223 = vmatmul.mubr.f32.gmra.mrb[0].mxu0 %v524
      %v1224 = vpop.f32.mrb[0].mxu0
      %v1225 = vadd.f32 %v1000, %v1224
      %v1226 = vpop.f32.mrb[0].mxu0
      %1227 = vmatprep.mubr.f32.mxu0 %v557
      %1228 = vmatmul.mubr.f32.gmra.mrb[0].mxu0 %v525
      %v1229 = vpop.f32.mrb[0].mxu0
      %v1230 = vadd.f32 %v1005, %v1229
      %v1231 = vpop.f32.mrb[0].mxu0
      %1232 = vmatprep.mubr.f32.mxu0 %v558
      %1233 = vmatmul.mubr.f32.gmra.mrb[0].mxu0 %v526
      %v1234 = vpop.f32.mrb[0].mxu0
      %v1235 = vadd.f32 %v1010, %v1234
      %v1236 = vpop.f32.mrb[0].mxu0
      %1237 = vmatprep.mubr.f32.mxu0 %v559
      %1238 = vmatmul.mubr.f32.gmra.mrb[0].mxu0 %v527
      %v1239 = vpop.f32.mrb[0].mxu0
      %v1240 = vadd.f32 %v1015, %v1239
      %v1241 = vpop.f32.mrb[0].mxu0
      %1242 = vmatprep.mubr.f32.mxu0 %v560
      %1243 = vmatmul.mubr.f32.gmra.mrb[0].mxu0 %v528
      %v1244 = vpop.f32.mrb[0].mxu0
      %v1245 = vadd.f32 %v1020, %v1244
      %v1246 = vpop.f32.mrb[0].mxu0
      %1247 = vmatprep.mubr.f32.mxu0 %v561
      %1248 = vmatmul.mubr.f32.gmra.mrb[0].mxu0 %v529
      %v1249 = vpop.f32.mrb[0].mxu0
      %v1250 = vadd.f32 %v1025, %v1249
      %v1251 = vpop.f32.mrb[0].mxu0
      %1252 = vmatprep.mubr.f32.mxu0 %v562
      %1253 = vmatmul.mubr.f32.gmra.mrb[0].mxu0 %v530
      %v1254 = vpop.f32.mrb[0].mxu0
      %v1255 = vadd.f32 %v1030, %v1254
      %v1256 = vpop.f32.mrb[0].mxu0
      %1257 = vmatprep.mubr.f32.mxu0 %v563
      %1258 = vmatmul.mubr.f32.gmra.mrb[0].mxu0 %v531
      %v1259 = vpop.f32.mrb[0].mxu0
      %v1260 = vadd.f32 %v1035, %v1259
      %v1261 = vpop.f32.mrb[0].mxu0
      %1262 = vmatprep.mubr.f32.mxu0 %v564
      %1263 = vmatmul.mubr.f32.gmra.mrb[0].mxu0 %v532
      %v1264 = vpop.f32.mrb[0].mxu0
      %v1265 = vadd.f32 %v1040, %v1264
      %v1266 = vpop.f32.mrb[0].mxu0
      %1267 = vmatprep.mubr.f32.mxu0 %v565
      %1268 = vmatmul.mubr.f32.gmra.mrb[0].mxu0 %v533
      %v1269 = vpop.f32.mrb[0].mxu0
      %v1270 = vadd.f32 %v1045, %v1269
      %v1271 = vpop.f32.mrb[0].mxu0
      %1272 = vmatprep.mubr.f32.mxu0 %v566
      %1273 = vmatmul.mubr.f32.gmra.mrb[0].mxu0 %v534
      %v1274 = vpop.f32.mrb[0].mxu0
      %v1275 = vadd.f32 %v1050, %v1274
      %v1276 = vpop.f32.mrb[0].mxu0
      %1277 = vmatprep.mubr.f32.mxu0 %v567
      %1278 = vmatmul.mubr.f32.gmra.mrb[0].mxu0 %v535
      %v1279 = vpop.f32.mrb[0].mxu0
      %v1280 = vadd.f32 %v1055, %v1279
      %v1281 = vpop.f32.mrb[0].mxu0
      %1282 = vmatprep.mubr.f32.mxu0 %v568
      %1283 = vmatmul.mubr.f32.gmra.mrb[0].mxu0 %v536
      %v1284 = vpop.f32.mrb[0].mxu0
      %v1285 = vadd.f32 %v1060, %v1284
      %v1286 = vpop.f32.mrb[0].mxu0
      %1287 = vmatprep.mubr.f32.mxu0 %v569
      %1288 = vmatmul.mubr.f32.gmra.mrb[0].mxu0 %v537
      %v1289 = vpop.f32.mrb[0].mxu0
      %v1290 = vadd.f32 %v1065, %v1289
      %v1291 = vpop.f32.mrb[0].mxu0
      %1292 = vmatprep.mubr.f32.mxu0 %v570
      %1293 = vmatmul.mubr.f32.gmra.mrb[0].mxu0 %v538
      %v1294 = vpop.f32.mrb[0].mxu0
      %v1295 = vadd.f32 %v1070, %v1294
      %v1296 = vpop.f32.mrb[0].mxu0
      %1297 = vmatprep.mubr.f32.mxu0 %v571
      %1298 = vmatmul.mubr.f32.gmra.mrb[0].mxu0 %v539
      %v1299 = vpop.f32.mrb[0].mxu0
      %v1300 = vadd.f32 %v1075, %v1299
      %v1301 = vpop.f32.mrb[0].mxu0
      %1302 = vmatprep.mubr.f32.mxu0 %v572
      %1303 = vmatmul.mubr.f32.gmra.mrb[0].mxu0 %v540
      %v1304 = vpop.f32.mrb[0].mxu0
      %v1305 = vadd.f32 %v1080, %v1304
      %v1306 = vpop.f32.mrb[0].mxu0
      %1307 = vmatprep.mubr.f32.mxu0 %v573
      %1308 = vmatmul.mubr.f32.gmra.mrb[0].mxu0 %v541
      %v1309 = vpop.f32.mrb[0].mxu0
      %v1310 = vadd.f32 %v1085, %v1309
      %v1311 = vpop.f32.mrb[0].mxu0
      %1312 = vmatprep.mubr.f32.mxu0 %v574
      %1313 = vmatmul.mubr.f32.gmra.mrb[0].mxu0 %v542
      %v1314 = vpop.f32.mrb[0].mxu0
      %v1315 = vadd.f32 %v1090, %v1314
      %v1316 = vpop.f32.mrb[0].mxu0
      %1317 = vmatprep.mubr.f32.mxu0 %v575
      %1318 = vmatmul.mubr.f32.gmra.mrb[0].mxu0 %v543
      %v1319 = vpop.f32.mrb[0].mxu0
      %v1320 = vadd.f32 %v1095, %v1319
      %v1321 = vpop.f32.mrb[0].mxu0
      %1322 = vmatprep.mubr.f32.mxu0 %v576
      %1323 = vmatmul.mubr.f32.gmra.mrb[0].mxu0 %v544
      %v1324 = vpop.f32.mrb[0].mxu0
      %v1325 = vadd.f32 %v1100, %v1324
      %v1326 = vpop.f32.mrb[0].mxu0
      %1327 = vmatprep.mubr.f32.mxu0 %v577
      %1328 = vmatmul.mubr.f32.gmra.mrb[0].mxu0 %v545
      %v1329 = vpop.f32.mrb[0].mxu0
      %v1330 = vadd.f32 %v1105, %v1329
      %v1331 = vpop.f32.mrb[0].mxu0
      %1332 = vdwg.mxu0
      %1333 = vmatprep.subr.mxu0 0.0
      %1334 = vmatpush1.msra.mxu0 %v803
      %1335 = vmatprep.subr.mxu0 0.0
      %1336 = vmatpush1.msra.mxu0 %v804
      %1337 = vmatprep.subr.mxu0 0.0
      %1338 = vmatpush1.msra.mxu0 %v805
      %1339 = vmatprep.subr.mxu0 0.0
      %1340 = vmatpush1.msra.mxu0 %v806
      %1341 = vmatprep.subr.mxu0 0.0
      %1342 = vmatpush1.msra.mxu0 %v807
      %1343 = vmatprep.subr.mxu0 0.0
      %1344 = vmatpush1.msra.mxu0 %v808
      %1345 = vmatprep.subr.mxu0 0.0
      %1346 = vmatpush1.msra.mxu0 %v809
      %1347 = vmatprep.subr.mxu0 0.0
      %1348 = vmatpush1.msra.mxu0 %v810
      %1349 = vmatprep.subr.mxu0 0.0
      %1350 = vmatpush1.msra.mxu0 %v811
      %1351 = vmatprep.subr.mxu0 0.0
      %1352 = vmatpush1.msra.mxu0 %v812
      %1353 = vmatprep.subr.mxu0 0.0
      %1354 = vmatpush1.msra.mxu0 %v813
      %1355 = vmatprep.subr.mxu0 0.0
      %1356 = vmatpush1.msra.mxu0 %v814
      %1357 = vmatprep.subr.mxu0 0.0
      %1358 = vmatpush1.msra.mxu0 %v815
      %1359 = vmatprep.subr.mxu0 0.0
      %1360 = vmatpush1.msra.mxu0 %v816
      %1361 = vmatprep.subr.mxu0 0.0
      %1362 = vmatpush1.msra.mxu0 %v817
      %1363 = vmatprep.subr.mxu0 0.0
      %1364 = vmatpush1.msra.mxu0 %v818
      %1365 = vmatprep.subr.mxu0 0.0
      %1366 = vmatpush1.msra.mxu0 %v819
      %1367 = vmatprep.subr.mxu0 0.0
      %1368 = vmatpush1.msra.mxu0 %v820
      %1369 = vmatprep.subr.mxu0 0.0
      %1370 = vmatpush1.msra.mxu0 %v821
      %1371 = vmatprep.subr.mxu0 0.0
      %1372 = vmatpush1.msra.mxu0 %v822
      %1373 = vmatprep.subr.mxu0 0.0
      %1374 = vmatpush1.msra.mxu0 %v823
      %1375 = vmatprep.subr.mxu0 0.0
      %1376 = vmatpush1.msra.mxu0 %v824
      %1377 = vmatprep.subr.mxu0 0.0
      %1378 = vmatpush1.msra.mxu0 %v825
      %1379 = vmatprep.subr.mxu0 0.0
      %1380 = vmatpush1.msra.mxu0 %v826
      %1381 = vmatprep.subr.mxu0 0.0
      %1382 = vmatpush1.msra.mxu0 %v827
      %1383 = vmatprep.subr.mxu0 0.0
      %1384 = vmatpush1.msra.mxu0 %v828
      %1385 = vmatprep.subr.mxu0 0.0
      %1386 = vmatpush1.msra.mxu0 %v829
      %1387 = vmatprep.subr.mxu0 0.0
      %1388 = vmatpush1.msra.mxu0 %v830
      %1389 = vmatprep.subr.mxu0 0.0
      %1390 = vmatpush1.msra.mxu0 %v831
      %1391 = vmatprep.subr.mxu0 0.0
      %1392 = vmatpush1.msra.mxu0 %v832
      %1393 = vmatprep.subr.mxu0 0.0
      %1394 = vmatpush1.msra.mxu0 %v833
      %1395 = vmatprep.subr.mxu0 0.0
      %1396 = vmatpush1.msra.mxu0 %v834
      %1397 = vmatprep.mubr.f32.mxu0 %v610
      %1398 = vmatmul.mubr.f32.gmra.mrb[0].mxu0 %v578
      %v1399 = vpop.f32.mrb[0].mxu0
      %v1400 = vadd.f32 %v1175, %v1399
      %v1401 = vpop.f32.mrb[0].mxu0
      %1402 = vmatprep.mubr.f32.mxu0 %v611
      %1403 = vmatmul.mubr.f32.gmra.mrb[0].mxu0 %v579
      %v1404 = vpop.f32.mrb[0].mxu0
      %v1405 = vadd.f32 %v1180, %v1404
      %v1406 = vpop.f32.mrb[0].mxu0
      %1407 = vmatprep.mubr.f32.mxu0 %v612
      %1408 = vmatmul.mubr.f32.gmra.mrb[0].mxu0 %v580
      %v1409 = vpop.f32.mrb[0].mxu0
      %v1410 = vadd.f32 %v1185, %v1409
      %v1411 = vpop.f32.mrb[0].mxu0
      %1412 = vmatprep.mubr.f32.mxu0 %v613
      %1413 = vmatmul.mubr.f32.gmra.mrb[0].mxu0 %v581
      %v1414 = vpop.f32.mrb[0].mxu0
      %v1415 = vadd.f32 %v1190, %v1414
      %v1416 = vpop.f32.mrb[0].mxu0
      %1417 = vmatprep.mubr.f32.mxu0 %v614
      %1418 = vmatmul.mubr.f32.gmra.mrb[0].mxu0 %v582
      %v1419 = vpop.f32.mrb[0].mxu0
      %v1420 = vadd.f32 %v1195, %v1419
      %v1421 = vpop.f32.mrb[0].mxu0
      %1422 = vmatprep.mubr.f32.mxu0 %v615
      %1423 = vmatmul.mubr.f32.gmra.mrb[0].mxu0 %v583
      %v1424 = vpop.f32.mrb[0].mxu0
      %v1425 = vadd.f32 %v1200, %v1424
      %v1426 = vpop.f32.mrb[0].mxu0
      %1427 = vmatprep.mubr.f32.mxu0 %v616
      %1428 = vmatmul.mubr.f32.gmra.mrb[0].mxu0 %v584
      %v1429 = vpop.f32.mrb[0].mxu0
      %v1430 = vadd.f32 %v1205, %v1429
      %v1431 = vpop.f32.mrb[0].mxu0
      %1432 = vmatprep.mubr.f32.mxu0 %v617
      %1433 = vmatmul.mubr.f32.gmra.mrb[0].mxu0 %v585
      %v1434 = vpop.f32.mrb[0].mxu0
      %v1435 = vadd.f32 %v1210, %v1434
      %v1436 = vpop.f32.mrb[0].mxu0
      %1437 = vmatprep.mubr.f32.mxu0 %v618
      %1438 = vmatmul.mubr.f32.gmra.mrb[0].mxu0 %v586
      %v1439 = vpop.f32.mrb[0].mxu0
      %v1440 = vadd.f32 %v1215, %v1439
      %v1441 = vpop.f32.mrb[0].mxu0
      %1442 = vmatprep.mubr.f32.mxu0 %v619
      %1443 = vmatmul.mubr.f32.gmra.mrb[0].mxu0 %v587
      %v1444 = vpop.f32.mrb[0].mxu0
      %v1445 = vadd.f32 %v1220, %v1444
      %v1446 = vpop.f32.mrb[0].mxu0
      %1447 = vmatprep.mubr.f32.mxu0 %v620
      %1448 = vmatmul.mubr.f32.gmra.mrb[0].mxu0 %v588
      %v1449 = vpop.f32.mrb[0].mxu0
      %v1450 = vadd.f32 %v1225, %v1449
      %v1451 = vpop.f32.mrb[0].mxu0
      %1452 = vmatprep.mubr.f32.mxu0 %v621
      %1453 = vmatmul.mubr.f32.gmra.mrb[0].mxu0 %v589
      %v1454 = vpop.f32.mrb[0].mxu0
      %v1455 = vadd.f32 %v1230, %v1454
      %v1456 = vpop.f32.mrb[0].mxu0
      %1457 = vmatprep.mubr.f32.mxu0 %v622
      %1458 = vmatmul.mubr.f32.gmra.mrb[0].mxu0 %v590
      %v1459 = vpop.f32.mrb[0].mxu0
      %v1460 = vadd.f32 %v1235, %v1459
      %v1461 = vpop.f32.mrb[0].mxu0
      %1462 = vmatprep.mubr.f32.mxu0 %v623
      %1463 = vmatmul.mubr.f32.gmra.mrb[0].mxu0 %v591
      %v1464 = vpop.f32.mrb[0].mxu0
      %v1465 = vadd.f32 %v1240, %v1464
      %v1466 = vpop.f32.mrb[0].mxu0
      %1467 = vmatprep.mubr.f32.mxu0 %v624
      %1468 = vmatmul.mubr.f32.gmra.mrb[0].mxu0 %v592
      %v1469 = vpop.f32.mrb[0].mxu0
      %v1470 = vadd.f32 %v1245, %v1469
      %v1471 = vpop.f32.mrb[0].mxu0
      %1472 = vmatprep.mubr.f32.mxu0 %v625
      %1473 = vmatmul.mubr.f32.gmra.mrb[0].mxu0 %v593
      %v1474 = vpop.f32.mrb[0].mxu0
      %v1475 = vadd.f32 %v1250, %v1474
      %v1476 = vpop.f32.mrb[0].mxu0
      %1477 = vmatprep.mubr.f32.mxu0 %v626
      %1478 = vmatmul.mubr.f32.gmra.mrb[0].mxu0 %v594
      %v1479 = vpop.f32.mrb[0].mxu0
      %v1480 = vadd.f32 %v1255, %v1479
      %v1481 = vpop.f32.mrb[0].mxu0
      %1482 = vmatprep.mubr.f32.mxu0 %v627
      %1483 = vmatmul.mubr.f32.gmra.mrb[0].mxu0 %v595
      %v1484 = vpop.f32.mrb[0].mxu0
      %v1485 = vadd.f32 %v1260, %v1484
      %v1486 = vpop.f32.mrb[0].mxu0
      %1487 = vmatprep.mubr.f32.mxu0 %v628
      %1488 = vmatmul.mubr.f32.gmra.mrb[0].mxu0 %v596
      %v1489 = vpop.f32.mrb[0].mxu0
      %v1490 = vadd.f32 %v1265, %v1489
      %v1491 = vpop.f32.mrb[0].mxu0
      %1492 = vmatprep.mubr.f32.mxu0 %v629
      %1493 = vmatmul.mubr.f32.gmra.mrb[0].mxu0 %v597
      %v1494 = vpop.f32.mrb[0].mxu0
      %v1495 = vadd.f32 %v1270, %v1494
      %v1496 = vpop.f32.mrb[0].mxu0
      %1497 = vmatprep.mubr.f32.mxu0 %v630
      %1498 = vmatmul.mubr.f32.gmra.mrb[0].mxu0 %v598
      %v1499 = vpop.f32.mrb[0].mxu0
      %v1500 = vadd.f32 %v1275, %v1499
      %v1501 = vpop.f32.mrb[0].mxu0
      %1502 = vmatprep.mubr.f32.mxu0 %v631
      %1503 = vmatmul.mubr.f32.gmra.mrb[0].mxu0 %v599
      %v1504 = vpop.f32.mrb[0].mxu0
      %v1505 = vadd.f32 %v1280, %v1504
      %v1506 = vpop.f32.mrb[0].mxu0
      %1507 = vmatprep.mubr.f32.mxu0 %v632
      %1508 = vmatmul.mubr.f32.gmra.mrb[0].mxu0 %v600
      %v1509 = vpop.f32.mrb[0].mxu0
      %v1510 = vadd.f32 %v1285, %v1509
      %v1511 = vpop.f32.mrb[0].mxu0
      %1512 = vmatprep.mubr.f32.mxu0 %v633
      %1513 = vmatmul.mubr.f32.gmra.mrb[0].mxu0 %v601
      %v1514 = vpop.f32.mrb[0].mxu0
      %v1515 = vadd.f32 %v1290, %v1514
      %v1516 = vpop.f32.mrb[0].mxu0
      %1517 = vmatprep.mubr.f32.mxu0 %v634
      %1518 = vmatmul.mubr.f32.gmra.mrb[0].mxu0 %v602
      %v1519 = vpop.f32.mrb[0].mxu0
      %v1520 = vadd.f32 %v1295, %v1519
      %v1521 = vpop.f32.mrb[0].mxu0
      %1522 = vmatprep.mubr.f32.mxu0 %v635
      %1523 = vmatmul.mubr.f32.gmra.mrb[0].mxu0 %v603
      %v1524 = vpop.f32.mrb[0].mxu0
      %v1525 = vadd.f32 %v1300, %v1524
      %v1526 = vpop.f32.mrb[0].mxu0
      %1527 = vmatprep.mubr.f32.mxu0 %v636
      %1528 = vmatmul.mubr.f32.gmra.mrb[0].mxu0 %v604
      %v1529 = vpop.f32.mrb[0].mxu0
      %v1530 = vadd.f32 %v1305, %v1529
      %v1531 = vpop.f32.mrb[0].mxu0
      %1532 = vmatprep.mubr.f32.mxu0 %v637
      %1533 = vmatmul.mubr.f32.gmra.mrb[0].mxu0 %v605
      %v1534 = vpop.f32.mrb[0].mxu0
      %v1535 = vadd.f32 %v1310, %v1534
      %v1536 = vpop.f32.mrb[0].mxu0
      %1537 = vmatprep.mubr.f32.mxu0 %v638
      %1538 = vmatmul.mubr.f32.gmra.mrb[0].mxu0 %v606
      %v1539 = vpop.f32.mrb[0].mxu0
      %v1540 = vadd.f32 %v1315, %v1539
      %v1541 = vpop.f32.mrb[0].mxu0
      %1542 = vmatprep.mubr.f32.mxu0 %v639
      %1543 = vmatmul.mubr.f32.gmra.mrb[0].mxu0 %v607
      %v1544 = vpop.f32.mrb[0].mxu0
      %v1545 = vadd.f32 %v1320, %v1544
      %v1546 = vpop.f32.mrb[0].mxu0
      %1547 = vmatprep.mubr.f32.mxu0 %v640
      %1548 = vmatmul.mubr.f32.gmra.mrb[0].mxu0 %v608
      %v1549 = vpop.f32.mrb[0].mxu0
      %v1550 = vadd.f32 %v1325, %v1549
      %v1551 = vpop.f32.mrb[0].mxu0
      %1552 = vmatprep.mubr.f32.mxu0 %v641
      %1553 = vmatmul.mubr.f32.gmra.mrb[0].mxu0 %v609
      %v1554 = vpop.f32.mrb[0].mxu0
      %v1555 = vadd.f32 %v1330, %v1554
      %v1556 = vpop.f32.mrb[0].mxu0
      %1557 = vdwg.mxu0
      %1558 = vmatprep.subr.mxu0 0.0
      %1559 = vmatpush1.msra.mxu0 %v835
      %1560 = vmatprep.subr.mxu0 0.0
      %1561 = vmatpush1.msra.mxu0 %v836
      %1562 = vmatprep.subr.mxu0 0.0
      %1563 = vmatpush1.msra.mxu0 %v837
      %1564 = vmatprep.subr.mxu0 0.0
      %1565 = vmatpush1.msra.mxu0 %v838
      %1566 = vmatprep.subr.mxu0 0.0
      %1567 = vmatpush1.msra.mxu0 %v839
      %1568 = vmatprep.subr.mxu0 0.0
      %1569 = vmatpush1.msra.mxu0 %v840
      %1570 = vmatprep.subr.mxu0 0.0
      %1571 = vmatpush1.msra.mxu0 %v841
      %1572 = vmatprep.subr.mxu0 0.0
      %1573 = vmatpush1.msra.mxu0 %v842
      %1574 = vmatprep.subr.mxu0 0.0
      %1575 = vmatpush1.msra.mxu0 %v843
      %1576 = vmatprep.subr.mxu0 0.0
      %1577 = vmatpush1.msra.mxu0 %v844
      %1578 = vmatprep.subr.mxu0 0.0
      %1579 = vmatpush1.msra.mxu0 %v845
      %1580 = vmatprep.subr.mxu0 0.0
      %1581 = vmatpush1.msra.mxu0 %v846
      %1582 = vmatprep.subr.mxu0 0.0
      %1583 = vmatpush1.msra.mxu0 %v847
      %1584 = vmatprep.subr.mxu0 0.0
      %1585 = vmatpush1.msra.mxu0 %v848
      %1586 = vmatprep.subr.mxu0 0.0
      %1587 = vmatpush1.msra.mxu0 %v849
      %1588 = vmatprep.subr.mxu0 0.0
      %1589 = vmatpush1.msra.mxu0 %v850
      %1590 = vmatprep.subr.mxu0 0.0
      %1591 = vmatpush1.msra.mxu0 %v851
      %1592 = vmatprep.subr.mxu0 0.0
      %1593 = vmatpush1.msra.mxu0 %v852
      %1594 = vmatprep.subr.mxu0 0.0
      %1595 = vmatpush1.msra.mxu0 %v853
      %1596 = vmatprep.subr.mxu0 0.0
      %1597 = vmatpush1.msra.mxu0 %v854
      %1598 = vmatprep.subr.mxu0 0.0
      %1599 = vmatpush1.msra.mxu0 %v855
      %1600 = vmatprep.subr.mxu0 0.0
      %1601 = vmatpush1.msra.mxu0 %v856
      %1602 = vmatprep.subr.mxu0 0.0
      %1603 = vmatpush1.msra.mxu0 %v857
      %1604 = vmatprep.subr.mxu0 0.0
      %1605 = vmatpush1.msra.mxu0 %v858
      %1606 = vmatprep.subr.mxu0 0.0
      %1607 = vmatpush1.msra.mxu0 %v859
      %1608 = vmatprep.subr.mxu0 0.0
      %1609 = vmatpush1.msra.mxu0 %v860
      %1610 = vmatprep.subr.mxu0 0.0
      %1611 = vmatpush1.msra.mxu0 %v861
      %1612 = vmatprep.subr.mxu0 0.0
      %1613 = vmatpush1.msra.mxu0 %v862
      %1614 = vmatprep.subr.mxu0 0.0
      %1615 = vmatpush1.msra.mxu0 %v863
      %1616 = vmatprep.subr.mxu0 0.0
      %1617 = vmatpush1.msra.mxu0 %v864
      %1618 = vmatprep.subr.mxu0 0.0
      %1619 = vmatpush1.msra.mxu0 %v865
      %1620 = vmatprep.subr.mxu0 0.0
      %1621 = vmatpush1.msra.mxu0 %v866
      %1622 = vmatprep.mubr.f32.mxu0 %v675
      %1623 = vmatmul.mubr.f32.gmra.mrb[0].mxu0 %v643
      %v1624 = vpop.f32.mrb[0].mxu0
      %v1625 = vadd.f32 %v1400, %v1624
      %v1626 = vpop.f32.mrb[0].mxu0
      %1627 = vmatprep.mubr.f32.mxu0 %v676
      %1628 = vmatmul.mubr.f32.gmra.mrb[0].mxu0 %v644
      %v1629 = vpop.f32.mrb[0].mxu0
      %v1630 = vadd.f32 %v1405, %v1629
      %v1631 = vpop.f32.mrb[0].mxu0
      %1632 = vmatprep.mubr.f32.mxu0 %v677
      %1633 = vmatmul.mubr.f32.gmra.mrb[0].mxu0 %v645
      %v1634 = vpop.f32.mrb[0].mxu0
      %v1635 = vadd.f32 %v1410, %v1634
      %v1636 = vpop.f32.mrb[0].mxu0
      %1637 = vmatprep.mubr.f32.mxu0 %v678
      %1638 = vmatmul.mubr.f32.gmra.mrb[0].mxu0 %v646
      %v1639 = vpop.f32.mrb[0].mxu0
      %v1640 = vadd.f32 %v1415, %v1639
      %v1641 = vpop.f32.mrb[0].mxu0
      %1642 = vmatprep.mubr.f32.mxu0 %v679
      %1643 = vmatmul.mubr.f32.gmra.mrb[0].mxu0 %v647
      %v1644 = vpop.f32.mrb[0].mxu0
      %v1645 = vadd.f32 %v1420, %v1644
      %v1646 = vpop.f32.mrb[0].mxu0
      %1647 = vmatprep.mubr.f32.mxu0 %v680
      %1648 = vmatmul.mubr.f32.gmra.mrb[0].mxu0 %v648
      %v1649 = vpop.f32.mrb[0].mxu0
      %v1650 = vadd.f32 %v1425, %v1649
      %v1651 = vpop.f32.mrb[0].mxu0
      %1652 = vmatprep.mubr.f32.mxu0 %v681
      %1653 = vmatmul.mubr.f32.gmra.mrb[0].mxu0 %v649
      %v1654 = vpop.f32.mrb[0].mxu0
      %v1655 = vadd.f32 %v1430, %v1654
      %v1656 = vpop.f32.mrb[0].mxu0
      %1657 = vmatprep.mubr.f32.mxu0 %v682
      %1658 = vmatmul.mubr.f32.gmra.mrb[0].mxu0 %v650
      %v1659 = vpop.f32.mrb[0].mxu0
      %v1660 = vadd.f32 %v1435, %v1659
      %v1661 = vpop.f32.mrb[0].mxu0
      %1662 = vmatprep.mubr.f32.mxu0 %v683
      %1663 = vmatmul.mubr.f32.gmra.mrb[0].mxu0 %v651
      %v1664 = vpop.f32.mrb[0].mxu0
      %v1665 = vadd.f32 %v1440, %v1664
      %v1666 = vpop.f32.mrb[0].mxu0
      %1667 = vmatprep.mubr.f32.mxu0 %v684
      %1668 = vmatmul.mubr.f32.gmra.mrb[0].mxu0 %v652
      %v1669 = vpop.f32.mrb[0].mxu0
      %v1670 = vadd.f32 %v1445, %v1669
      %v1671 = vpop.f32.mrb[0].mxu0
      %1672 = vmatprep.mubr.f32.mxu0 %v685
      %1673 = vmatmul.mubr.f32.gmra.mrb[0].mxu0 %v653
      %v1674 = vpop.f32.mrb[0].mxu0
      %v1675 = vadd.f32 %v1450, %v1674
      %v1676 = vpop.f32.mrb[0].mxu0
      %1677 = vmatprep.mubr.f32.mxu0 %v686
      %1678 = vmatmul.mubr.f32.gmra.mrb[0].mxu0 %v654
      %v1679 = vpop.f32.mrb[0].mxu0
      %v1680 = vadd.f32 %v1455, %v1679
      %v1681 = vpop.f32.mrb[0].mxu0
      %1682 = vmatprep.mubr.f32.mxu0 %v687
      %1683 = vmatmul.mubr.f32.gmra.mrb[0].mxu0 %v655
      %v1684 = vpop.f32.mrb[0].mxu0
      %v1685 = vadd.f32 %v1460, %v1684
      %v1686 = vpop.f32.mrb[0].mxu0
      %1687 = vmatprep.mubr.f32.mxu0 %v688
      %1688 = vmatmul.mubr.f32.gmra.mrb[0].mxu0 %v656
      %v1689 = vpop.f32.mrb[0].mxu0
      %v1690 = vadd.f32 %v1465, %v1689
      %v1691 = vpop.f32.mrb[0].mxu0
      %1692 = vmatprep.mubr.f32.mxu0 %v689
      %1693 = vmatmul.mubr.f32.gmra.mrb[0].mxu0 %v657
      %v1694 = vpop.f32.mrb[0].mxu0
      %v1695 = vadd.f32 %v1470, %v1694
      %v1696 = vpop.f32.mrb[0].mxu0
      %1697 = vmatprep.mubr.f32.mxu0 %v690
      %1698 = vmatmul.mubr.f32.gmra.mrb[0].mxu0 %v658
      %v1699 = vpop.f32.mrb[0].mxu0
      %v1700 = vadd.f32 %v1475, %v1699
      %v1701 = vpop.f32.mrb[0].mxu0
      %1702 = vmatprep.mubr.f32.mxu0 %v691
      %1703 = vmatmul.mubr.f32.gmra.mrb[0].mxu0 %v659
      %v1704 = vpop.f32.mrb[0].mxu0
      %v1705 = vadd.f32 %v1480, %v1704
      %v1706 = vpop.f32.mrb[0].mxu0
      %1707 = vmatprep.mubr.f32.mxu0 %v692
      %1708 = vmatmul.mubr.f32.gmra.mrb[0].mxu0 %v660
      %v1709 = vpop.f32.mrb[0].mxu0
      %v1710 = vadd.f32 %v1485, %v1709
      %v1711 = vpop.f32.mrb[0].mxu0
      %1712 = vmatprep.mubr.f32.mxu0 %v693
      %1713 = vmatmul.mubr.f32.gmra.mrb[0].mxu0 %v661
      %v1714 = vpop.f32.mrb[0].mxu0
      %v1715 = vadd.f32 %v1490, %v1714
      %v1716 = vpop.f32.mrb[0].mxu0
      %1717 = vmatprep.mubr.f32.mxu0 %v694
      %1718 = vmatmul.mubr.f32.gmra.mrb[0].mxu0 %v662
      %v1719 = vpop.f32.mrb[0].mxu0
      %v1720 = vadd.f32 %v1495, %v1719
      %v1721 = vpop.f32.mrb[0].mxu0
      %1722 = vmatprep.mubr.f32.mxu0 %v695
      %1723 = vmatmul.mubr.f32.gmra.mrb[0].mxu0 %v663
      %v1724 = vpop.f32.mrb[0].mxu0
      %v1725 = vadd.f32 %v1500, %v1724
      %v1726 = vpop.f32.mrb[0].mxu0
      %1727 = vmatprep.mubr.f32.mxu0 %v696
      %1728 = vmatmul.mubr.f32.gmra.mrb[0].mxu0 %v664
      %v1729 = vpop.f32.mrb[0].mxu0
      %v1730 = vadd.f32 %v1505, %v1729
      %v1731 = vpop.f32.mrb[0].mxu0
      %1732 = vmatprep.mubr.f32.mxu0 %v697
      %1733 = vmatmul.mubr.f32.gmra.mrb[0].mxu0 %v665
      %v1734 = vpop.f32.mrb[0].mxu0
      %v1735 = vadd.f32 %v1510, %v1734
      %v1736 = vpop.f32.mrb[0].mxu0
      %1737 = vmatprep.mubr.f32.mxu0 %v698
      %1738 = vmatmul.mubr.f32.gmra.mrb[0].mxu0 %v666
      %v1739 = vpop.f32.mrb[0].mxu0
      %v1740 = vadd.f32 %v1515, %v1739
      %v1741 = vpop.f32.mrb[0].mxu0
      %1742 = vmatprep.mubr.f32.mxu0 %v699
      %1743 = vmatmul.mubr.f32.gmra.mrb[0].mxu0 %v667
      %v1744 = vpop.f32.mrb[0].mxu0
      %v1745 = vadd.f32 %v1520, %v1744
      %v1746 = vpop.f32.mrb[0].mxu0
      %1747 = vmatprep.mubr.f32.mxu0 %v700
      %1748 = vmatmul.mubr.f32.gmra.mrb[0].mxu0 %v668
      %v1749 = vpop.f32.mrb[0].mxu0
      %v1750 = vadd.f32 %v1525, %v1749
      %v1751 = vpop.f32.mrb[0].mxu0
      %1752 = vmatprep.mubr.f32.mxu0 %v701
      %1753 = vmatmul.mubr.f32.gmra.mrb[0].mxu0 %v669
      %v1754 = vpop.f32.mrb[0].mxu0
      %v1755 = vadd.f32 %v1530, %v1754
      %v1756 = vpop.f32.mrb[0].mxu0
      %1757 = vmatprep.mubr.f32.mxu0 %v702
      %1758 = vmatmul.mubr.f32.gmra.mrb[0].mxu0 %v670
      %v1759 = vpop.f32.mrb[0].mxu0
      %v1760 = vadd.f32 %v1535, %v1759
      %v1761 = vpop.f32.mrb[0].mxu0
      %1762 = vmatprep.mubr.f32.mxu0 %v703
      %1763 = vmatmul.mubr.f32.gmra.mrb[0].mxu0 %v671
      %v1764 = vpop.f32.mrb[0].mxu0
      %v1765 = vadd.f32 %v1540, %v1764
      %v1766 = vpop.f32.mrb[0].mxu0
      %1767 = vmatprep.mubr.f32.mxu0 %v704
      %1768 = vmatmul.mubr.f32.gmra.mrb[0].mxu0 %v672
      %v1769 = vpop.f32.mrb[0].mxu0
      %v1770 = vadd.f32 %v1545, %v1769
      %v1771 = vpop.f32.mrb[0].mxu0
      %1772 = vmatprep.mubr.f32.mxu0 %v705
      %1773 = vmatmul.mubr.f32.gmra.mrb[0].mxu0 %v673
      %v1774 = vpop.f32.mrb[0].mxu0
      %v1775 = vadd.f32 %v1550, %v1774
      %v1776 = vpop.f32.mrb[0].mxu0
      %1777 = vmatprep.mubr.f32.mxu0 %v706
      %1778 = vmatmul.mubr.f32.gmra.mrb[0].mxu0 %v674
      %v1779 = vpop.f32.mrb[0].mxu0
      %v1780 = vadd.f32 %v1555, %v1779
      %v1781 = vpop.f32.mrb[0].mxu0
      %1782 = vdwg.mxu0
      %1783 = vmatprep.subr.mxu0 0.0
      %1784 = vmatpush1.msra.mxu0 %v867
      %1785 = vmatprep.subr.mxu0 0.0
      %1786 = vmatpush1.msra.mxu0 %v868
      %1787 = vmatprep.subr.mxu0 0.0
      %1788 = vmatpush1.msra.mxu0 %v869
      %1789 = vmatprep.subr.mxu0 0.0
      %1790 = vmatpush1.msra.mxu0 %v870
      %1791 = vmatprep.subr.mxu0 0.0
      %1792 = vmatpush1.msra.mxu0 %v871
      %1793 = vmatprep.subr.mxu0 0.0
      %1794 = vmatpush1.msra.mxu0 %v872
      %1795 = vmatprep.subr.mxu0 0.0
      %1796 = vmatpush1.msra.mxu0 %v873
      %1797 = vmatprep.subr.mxu0 0.0
      %1798 = vmatpush1.msra.mxu0 %v874
      %1799 = vmatprep.subr.mxu0 0.0
      %1800 = vmatpush1.msra.mxu0 %v875
      %1801 = vmatprep.subr.mxu0 0.0
      %1802 = vmatpush1.msra.mxu0 %v876
      %1803 = vmatprep.subr.mxu0 0.0
      %1804 = vmatpush1.msra.mxu0 %v877
      %1805 = vmatprep.subr.mxu0 0.0
      %1806 = vmatpush1.msra.mxu0 %v878
      %1807 = vmatprep.subr.mxu0 0.0
      %1808 = vmatpush1.msra.mxu0 %v879
      %1809 = vmatprep.subr.mxu0 0.0
      %1810 = vmatpush1.msra.mxu0 %v880
      %1811 = vmatprep.subr.mxu0 0.0
      %1812 = vmatpush1.msra.mxu0 %v881
      %1813 = vmatprep.subr.mxu0 0.0
      %1814 = vmatpush1.msra.mxu0 %v882
      %1815 = vmatprep.subr.mxu0 0.0
      %1816 = vmatpush1.msra.mxu0 0.0
      %1817 = vmatprep.subr.mxu0 0.0
      %1818 = vmatpush1.msra.mxu0 0.0
      %1819 = vmatprep.subr.mxu0 0.0
      %1820 = vmatpush1.msra.mxu0 0.0
      %1821 = vmatprep.subr.mxu0 0.0
      %1822 = vmatpush1.msra.mxu0 0.0
      %1823 = vmatprep.subr.mxu0 0.0
      %1824 = vmatpush1.msra.mxu0 0.0
      %1825 = vmatprep.subr.mxu0 0.0
      %1826 = vmatpush1.msra.mxu0 0.0
      %1827 = vmatprep.subr.mxu0 0.0
      %1828 = vmatpush1.msra.mxu0 0.0
      %1829 = vmatprep.subr.mxu0 0.0
      %1830 = vmatpush1.msra.mxu0 0.0
      %1831 = vmatprep.subr.mxu0 0.0
      %1832 = vmatpush1.msra.mxu0 0.0
      %1833 = vmatprep.subr.mxu0 0.0
      %1834 = vmatpush1.msra.mxu0 0.0
      %1835 = vmatprep.subr.mxu0 0.0
      %1836 = vmatpush1.msra.mxu0 0.0
      %1837 = vmatprep.subr.mxu0 0.0
      %1838 = vmatpush1.msra.mxu0 0.0
      %1839 = vmatprep.subr.mxu0 0.0
      %1840 = vmatpush1.msra.mxu0 0.0
      %1841 = vmatprep.subr.mxu0 0.0
      %1842 = vmatpush1.msra.mxu0 0.0
      %1843 = vmatprep.subr.mxu0 0.0
      %1844 = vmatpush1.msra.mxu0 0.0
      %1845 = vmatprep.subr.mxu0 0.0
      %1846 = vmatpush1.msra.mxu0 0.0
      %1847 = vmatprep.mubr.f32.mxu0 0.0
      %1848 = vmatmul.mubr.f32.gmra.mrb[0].mxu0 %v707
      %v1849 = vpop.f32.mrb[0].mxu0
      %v1850 = vadd.f32 %v1625, %v1849
      %v1851 = vpop.f32.mrb[0].mxu0
      %1852 = vmatprep.mubr.f32.mxu0 0.0
      %1853 = vmatmul.mubr.f32.gmra.mrb[0].mxu0 %v708
      %v1854 = vpop.f32.mrb[0].mxu0
      %v1855 = vadd.f32 %v1630, %v1854
      %v1856 = vpop.f32.mrb[0].mxu0
      %1857 = vmatprep.mubr.f32.mxu0 0.0
      %1858 = vmatmul.mubr.f32.gmra.mrb[0].mxu0 %v709
      %v1859 = vpop.f32.mrb[0].mxu0
      %v1860 = vadd.f32 %v1635, %v1859
      %v1861 = vpop.f32.mrb[0].mxu0
      %1862 = vmatprep.mubr.f32.mxu0 0.0
      %1863 = vmatmul.mubr.f32.gmra.mrb[0].mxu0 %v710
      %v1864 = vpop.f32.mrb[0].mxu0
      %v1865 = vadd.f32 %v1640, %v1864
      %v1866 = vpop.f32.mrb[0].mxu0
      %1867 = vmatprep.mubr.f32.mxu0 0.0
      %1868 = vmatmul.mubr.f32.gmra.mrb[0].mxu0 %v711
      %v1869 = vpop.f32.mrb[0].mxu0
      %v1870 = vadd.f32 %v1645, %v1869
      %v1871 = vpop.f32.mrb[0].mxu0
      %1872 = vmatprep.mubr.f32.mxu0 0.0
      %1873 = vmatmul.mubr.f32.gmra.mrb[0].mxu0 %v712
      %v1874 = vpop.f32.mrb[0].mxu0
      %v1875 = vadd.f32 %v1650, %v1874
      %v1876 = vpop.f32.mrb[0].mxu0
      %1877 = vmatprep.mubr.f32.mxu0 0.0
      %1878 = vmatmul.mubr.f32.gmra.mrb[0].mxu0 %v713
      %v1879 = vpop.f32.mrb[0].mxu0
      %v1880 = vadd.f32 %v1655, %v1879
      %v1881 = vpop.f32.mrb[0].mxu0
      %1882 = vmatprep.mubr.f32.mxu0 0.0
      %1883 = vmatmul.mubr.f32.gmra.mrb[0].mxu0 %v714
      %v1884 = vpop.f32.mrb[0].mxu0
      %v1885 = vadd.f32 %v1660, %v1884
      %v1886 = vpop.f32.mrb[0].mxu0
      %1887 = vmatprep.mubr.f32.mxu0 0.0
      %1888 = vmatmul.mubr.f32.gmra.mrb[0].mxu0 %v715
      %v1889 = vpop.f32.mrb[0].mxu0
      %v1890 = vadd.f32 %v1665, %v1889
      %v1891 = vpop.f32.mrb[0].mxu0
      %1892 = vmatprep.mubr.f32.mxu0 0.0
      %1893 = vmatmul.mubr.f32.gmra.mrb[0].mxu0 %v716
      %v1894 = vpop.f32.mrb[0].mxu0
      %v1895 = vadd.f32 %v1670, %v1894
      %v1896 = vpop.f32.mrb[0].mxu0
      %1897 = vmatprep.mubr.f32.mxu0 0.0
      %1898 = vmatmul.mubr.f32.gmra.mrb[0].mxu0 %v717
      %v1899 = vpop.f32.mrb[0].mxu0
      %v1900 = vadd.f32 %v1675, %v1899
      %v1901 = vpop.f32.mrb[0].mxu0
      %1902 = vmatprep.mubr.f32.mxu0 0.0
      %1903 = vmatmul.mubr.f32.gmra.mrb[0].mxu0 %v718
      %v1904 = vpop.f32.mrb[0].mxu0
      %v1905 = vadd.f32 %v1680, %v1904
      %v1906 = vpop.f32.mrb[0].mxu0
      %1907 = vmatprep.mubr.f32.mxu0 0.0
      %1908 = vmatmul.mubr.f32.gmra.mrb[0].mxu0 %v719
      %v1909 = vpop.f32.mrb[0].mxu0
      %v1910 = vadd.f32 %v1685, %v1909
      %v1911 = vpop.f32.mrb[0].mxu0
      %1912 = vmatprep.mubr.f32.mxu0 0.0
      %1913 = vmatmul.mubr.f32.gmra.mrb[0].mxu0 %v720
      %v1914 = vpop.f32.mrb[0].mxu0
      %v1915 = vadd.f32 %v1690, %v1914
      %v1916 = vpop.f32.mrb[0].mxu0
      %1917 = vmatprep.mubr.f32.mxu0 0.0
      %1918 = vmatmul.mubr.f32.gmra.mrb[0].mxu0 %v721
      %v1919 = vpop.f32.mrb[0].mxu0
      %v1920 = vadd.f32 %v1695, %v1919
      %v1921 = vpop.f32.mrb[0].mxu0
      %1922 = vmatprep.mubr.f32.mxu0 0.0
      %1923 = vmatmul.mubr.f32.gmra.mrb[0].mxu0 %v722
      %v1924 = vpop.f32.mrb[0].mxu0
      %v1925 = vadd.f32 %v1700, %v1924
      %v1926 = vpop.f32.mrb[0].mxu0
      %1927 = vmatprep.mubr.f32.mxu0 0.0
      %1928 = vmatmul.mubr.f32.gmra.mrb[0].mxu0 %v723
      %v1929 = vpop.f32.mrb[0].mxu0
      %v1930 = vadd.f32 %v1705, %v1929
      %v1931 = vpop.f32.mrb[0].mxu0
      %1932 = vmatprep.mubr.f32.mxu0 0.0
      %1933 = vmatmul.mubr.f32.gmra.mrb[0].mxu0 %v724
      %v1934 = vpop.f32.mrb[0].mxu0
      %v1935 = vadd.f32 %v1710, %v1934
      %v1936 = vpop.f32.mrb[0].mxu0
      %1937 = vmatprep.mubr.f32.mxu0 0.0
      %1938 = vmatmul.mubr.f32.gmra.mrb[0].mxu0 %v725
      %v1939 = vpop.f32.mrb[0].mxu0
      %v1940 = vadd.f32 %v1715, %v1939
      %v1941 = vpop.f32.mrb[0].mxu0
      %1942 = vmatprep.mubr.f32.mxu0 0.0
      %1943 = vmatmul.mubr.f32.gmra.mrb[0].mxu0 %v726
      %v1944 = vpop.f32.mrb[0].mxu0
      %v1945 = vadd.f32 %v1720, %v1944
      %v1946 = vpop.f32.mrb[0].mxu0
      %1947 = vmatprep.mubr.f32.mxu0 0.0
      %1948 = vmatmul.mubr.f32.gmra.mrb[0].mxu0 %v727
      %v1949 = vpop.f32.mrb[0].mxu0
      %v1950 = vadd.f32 %v1725, %v1949
      %v1951 = vpop.f32.mrb[0].mxu0
      %1952 = vmatprep.mubr.f32.mxu0 0.0
      %1953 = vmatmul.mubr.f32.gmra.mrb[0].mxu0 %v728
      %v1954 = vpop.f32.mrb[0].mxu0
      %v1955 = vadd.f32 %v1730, %v1954
      %v1956 = vpop.f32.mrb[0].mxu0
      %1957 = vmatprep.mubr.f32.mxu0 0.0
      %1958 = vmatmul.mubr.f32.gmra.mrb[0].mxu0 %v729
      %v1959 = vpop.f32.mrb[0].mxu0
      %v1960 = vadd.f32 %v1735, %v1959
      %v1961 = vpop.f32.mrb[0].mxu0
      %1962 = vmatprep.mubr.f32.mxu0 0.0
      %1963 = vmatmul.mubr.f32.gmra.mrb[0].mxu0 %v730
      %v1964 = vpop.f32.mrb[0].mxu0
      %v1965 = vadd.f32 %v1740, %v1964
      %v1966 = vpop.f32.mrb[0].mxu0
      %1967 = vmatprep.mubr.f32.mxu0 0.0
      %1968 = vmatmul.mubr.f32.gmra.mrb[0].mxu0 %v731
      %v1969 = vpop.f32.mrb[0].mxu0
      %v1970 = vadd.f32 %v1745, %v1969
      %v1971 = vpop.f32.mrb[0].mxu0
      %1972 = vmatprep.mubr.f32.mxu0 0.0
      %1973 = vmatmul.mubr.f32.gmra.mrb[0].mxu0 %v732
      %v1974 = vpop.f32.mrb[0].mxu0
      %v1975 = vadd.f32 %v1750, %v1974
      %v1976 = vpop.f32.mrb[0].mxu0
      %1977 = vmatprep.mubr.f32.mxu0 0.0
      %1978 = vmatmul.mubr.f32.gmra.mrb[0].mxu0 %v733
      %v1979 = vpop.f32.mrb[0].mxu0
      %v1980 = vadd.f32 %v1755, %v1979
      %v1981 = vpop.f32.mrb[0].mxu0
      %1982 = vmatprep.mubr.f32.mxu0 0.0
      %1983 = vmatmul.mubr.f32.gmra.mrb[0].mxu0 %v734
      %v1984 = vpop.f32.mrb[0].mxu0
      %v1985 = vadd.f32 %v1760, %v1984
      %v1986 = vpop.f32.mrb[0].mxu0
      %1987 = vmatprep.mubr.f32.mxu0 0.0
      %1988 = vmatmul.mubr.f32.gmra.mrb[0].mxu0 %v735
      %v1989 = vpop.f32.mrb[0].mxu0
      %v1990 = vadd.f32 %v1765, %v1989
      %v1991 = vpop.f32.mrb[0].mxu0
      %1992 = vmatprep.mubr.f32.mxu0 0.0
      %1993 = vmatmul.mubr.f32.gmra.mrb[0].mxu0 %v736
      %v1994 = vpop.f32.mrb[0].mxu0
      %v1995 = vadd.f32 %v1770, %v1994
      %v1996 = vpop.f32.mrb[0].mxu0
      %1997 = vmatprep.mubr.f32.mxu0 0.0
      %1998 = vmatmul.mubr.f32.gmra.mrb[0].mxu0 %v737
      %v1999 = vpop.f32.mrb[0].mxu0
      %v2000 = vadd.f32 %v1775, %v1999
      %v2001 = vpop.f32.mrb[0].mxu0
      %2002 = vmatprep.mubr.f32.mxu0 0.0
      %2003 = vmatmul.mubr.f32.gmra.mrb[0].mxu0 %v738
      %v2004 = vpop.f32.mrb[0].mxu0
      %v2005 = vadd.f32 %v1780, %v2004
      %v2006 = vpop.f32.mrb[0].mxu0
      %2007 = vdwg.mxu0
      %2008 = vst [vmem:[%s231] sm:$0xff] %v1850
      %2009 = vst [vmem:[%s231 + $0x8] sm:$0xff] %v1855
      %2010 = vst [vmem:[%s231 + $0x10] sm:$0xff] %v1860
      %2011 = vst [vmem:[%s231 + $0x18] sm:$0xff] %v1865
      %2012 = vst [vmem:[%s231 + $0x20] sm:$0xff] %v1870
      %2013 = vst [vmem:[%s231 + $0x28] sm:$0xff] %v1875
      %2014 = vst [vmem:[%s231 + $0x30] sm:$0xff] %v1880
      %2015 = vst [vmem:[%s231 + $0x38] sm:$0xff] %v1885
      %2016 = vst [vmem:[%s231 + $0x40] sm:$0xff] %v1890
      %2017 = vst [vmem:[%s231 + $0x48] sm:$0xff] %v1895
      %2018 = vst [vmem:[%s231 + $0x50] sm:$0xff] %v1900
      %2019 = vst [vmem:[%s231 + $0x58] sm:$0xff] %v1905
      %2020 = vst [vmem:[%s231 + $0x60] sm:$0xff] %v1910
      %2021 = vst [vmem:[%s231 + $0x68] sm:$0xff] %v1915
      %2022 = vst [vmem:[%s231 + $0x70] sm:$0xff] %v1920
      %2023 = vst [vmem:[%s231 + $0x78] sm:$0xff] %v1925
      %2024 = vst [vmem:[%s231 + $0x80] sm:$0xff] %v1930
      %2025 = vst [vmem:[%s231 + $0x88] sm:$0xff] %v1935
      %2026 = vst [vmem:[%s231 + $0x90] sm:$0xff] %v1940
      %2027 = vst [vmem:[%s231 + $0x98] sm:$0xff] %v1945
      %2028 = vst [vmem:[%s231 + $0xa0] sm:$0xff] %v1950
      %2029 = vst [vmem:[%s231 + $0xa8] sm:$0xff] %v1955
      %2030 = vst [vmem:[%s231 + $0xb0] sm:$0xff] %v1960
      %2031 = vst [vmem:[%s231 + $0xb8] sm:$0xff] %v1965
      %2032 = vst [vmem:[%s231 + $0xc0] sm:$0xff] %v1970
      %2033 = vst [vmem:[%s231 + $0xc8] sm:$0xff] %v1975
      %2034 = vst [vmem:[%s231 + $0xd0] sm:$0xff] %v1980
      %2035 = vst [vmem:[%s231 + $0xd8] sm:$0xff] %v1985
      %2036 = vst [vmem:[%s231 + $0xe0] sm:$0xff] %v1990
      %2037 = vst [vmem:[%s231 + $0xe8] sm:$0xff] %v1995
      %2038 = vst [vmem:[%s231 + $0xf0] sm:$0xff] %v2000
      %2039 = vst [vmem:[%s231 + $0xf8] sm:$0xff] %v2005
      %v2040 = vadd.f32 %v1850, %v1855
      %v2041 = vadd.f32 %v2040, %v1860
      %v2042 = vadd.f32 %v2041, %v1865
      %v2043 = vadd.f32 %v2042, %v1870
      %v2044 = vadd.f32 %v2043, %v1875
      %v2045 = vadd.f32 %v2044, %v1880
      %v2046 = vadd.f32 %v2045, %v1885
      %v2047 = vadd.f32 %v2046, %v1890
      %v2048 = vadd.f32 %v2047, %v1895
      %v2049 = vadd.f32 %v2048, %v1900
      %v2050 = vadd.f32 %v2049, %v1905
      %v2051 = vadd.f32 %v2050, %v1910
      %v2052 = vadd.f32 %v2051, %v1915
      %v2053 = vadd.f32 %v2052, %v1920
      %v2054 = vadd.f32 %v2053, %v1925
      %v2055 = vadd.f32 %v2054, %v1930
      %v2056 = vadd.f32 %v2055, %v1935
      %v2057 = vadd.f32 %v2056, %v1940
      %v2058 = vadd.f32 %v2057, %v1945
      %v2059 = vadd.f32 %v2058, %v1950
      %v2060 = vadd.f32 %v2059, %v1955
      %v2061 = vadd.f32 %v2060, %v1960
      %v2062 = vadd.f32 %v2061, %v1965
      %v2063 = vadd.f32 %v2062, %v1970
      %v2064 = vadd.f32 %v2063, %v1975
      %v2065 = vadd.f32 %v2064, %v1980
      %v2066 = vadd.f32 %v2065, %v1985
      %v2067 = vadd.f32 %v2066, %v1990
      %v2068 = vadd.f32 %v2067, %v1995
      %v2069 = vadd.f32 %v2068, %v2000
      %v2070 = vadd.f32 %v2069, %v2005
      %v2071 = vrot.slane %v2070, 4
      %v2072 = vadd.f32 %v2070, %v2071
      %v2073 = vrot.slane %v2072, 2
      %v2074 = vadd.f32 %v2072, %v2073
      %v2075 = vrot.slane %v2074, 1
      %v2076 = vadd.f32 %v2074, %v2075
      %v2077 = vmul.f32 %v1850, %v1850
      %v2078 = vmul.f32 %v1855, %v1855
      %v2079 = vmul.f32 %v1860, %v1860
      %v2080 = vmul.f32 %v1865, %v1865
      %v2081 = vmul.f32 %v1870, %v1870
      %v2082 = vmul.f32 %v1875, %v1875
      %v2083 = vmul.f32 %v1880, %v1880
      %v2084 = vmul.f32 %v1885, %v1885
      %v2085 = vmul.f32 %v1890, %v1890
      %v2086 = vmul.f32 %v1895, %v1895
      %v2087 = vmul.f32 %v1900, %v1900
      %v2088 = vmul.f32 %v1905, %v1905
      %v2089 = vmul.f32 %v1910, %v1910
      %v2090 = vmul.f32 %v1915, %v1915
      %v2091 = vmul.f32 %v1920, %v1920
      %v2092 = vmul.f32 %v1925, %v1925
      %v2093 = vmul.f32 %v1930, %v1930
      %v2094 = vmul.f32 %v1935, %v1935
      %v2095 = vmul.f32 %v1940, %v1940
      %v2096 = vmul.f32 %v1945, %v1945
      %v2097 = vmul.f32 %v1950, %v1950
      %v2098 = vmul.f32 %v1955, %v1955
      %v2099 = vmul.f32 %v1960, %v1960
      %v2100 = vmul.f32 %v1965, %v1965
      %v2101 = vmul.f32 %v1970, %v1970
      %v2102 = vmul.f32 %v1975, %v1975
      %v2103 = vmul.f32 %v1980, %v1980
      %v2104 = vmul.f32 %v1985, %v1985
      %v2105 = vmul.f32 %v1990, %v1990
      %v2106 = vmul.f32 %v1995, %v1995
      %v2107 = vmul.f32 %v2000, %v2000
      %v2108 = vmul.f32 %v2005, %v2005
      %v2109 = vadd.f32 %v2077, %v2078
      %v2110 = vadd.f32 %v2109, %v2079
      %v2111 = vadd.f32 %v2110, %v2080
      %v2112 = vadd.f32 %v2111, %v2081
      %v2113 = vadd.f32 %v2112, %v2082
      %v2114 = vadd.f32 %v2113, %v2083
      %v2115 = vadd.f32 %v2114, %v2084
      %v2116 = vadd.f32 %v2115, %v2085
      %v2117 = vadd.f32 %v2116, %v2086
      %v2118 = vadd.f32 %v2117, %v2087
      %v2119 = vadd.f32 %v2118, %v2088
      %v2120 = vadd.f32 %v2119, %v2089
      %v2121 = vadd.f32 %v2120, %v2090
      %v2122 = vadd.f32 %v2121, %v2091
      %v2123 = vadd.f32 %v2122, %v2092
      %v2124 = vadd.f32 %v2123, %v2093
      %v2125 = vadd.f32 %v2124, %v2094
      %v2126 = vadd.f32 %v2125, %v2095
      %v2127 = vadd.f32 %v2126, %v2096
      %v2128 = vadd.f32 %v2127, %v2097
      %v2129 = vadd.f32 %v2128, %v2098
      %v2130 = vadd.f32 %v2129, %v2099
      %v2131 = vadd.f32 %v2130, %v2100
      %v2132 = vadd.f32 %v2131, %v2101
      %v2133 = vadd.f32 %v2132, %v2102
      %v2134 = vadd.f32 %v2133, %v2103
      %v2135 = vadd.f32 %v2134, %v2104
      %v2136 = vadd.f32 %v2135, %v2105
      %v2137 = vadd.f32 %v2136, %v2106
      %v2138 = vadd.f32 %v2137, %v2107
      %v2139 = vadd.f32 %v2138, %v2108
      %v2140 = vrot.slane %v2139, 4
      %v2141 = vadd.f32 %v2139, %v2140
      %v2142 = vrot.slane %v2141, 2
      %v2143 = vadd.f32 %v2141, %v2142
      %v2144 = vrot.slane %v2143, 1
      %v2145 = vadd.f32 %v2143, %v2144
      %vm2146 = vcmask 1040384
      %v2147 = vsel %vm2146, %v2076, %v2145
      %2148 = vst [vmem:[%s235] sm:$0x3] %v2147
      %p2149 = scmp.lt.s32.totalorder %s17, 1
      %s2150 = scalar_select %p2149, %s17, 1
      %s2151 = smul.addr %s2150, 32
      %s2152 = smul.addr %s2151, 8
      %s2153 = scalar_lea.vmem %s4, %s2152
      %p2154 = scmp.lt.s32.totalorder %s17, 1
      %s2155 = scalar_select %p2154, %s17, 1
      %s2156 = smul.addr %s2155, 2
      %s2157 = scalar_lea.vmem %s5, %s2156
      // Predicated region
      $region37: #{bottleneck_forward.6} parent=35 // pred_check
        %p2158 = pneg %p124
      $region38: #{bottleneck_forward.6} parent=35 // pred_check_branch
        %2160 = sbr.rel (%p2158) target = $region40
      $region39: #{bottleneck_forward.6} parent=35 // pred_region
        _
      $region40: #{bottleneck_forward.6} parent=35 // pred_fallthru
        _
      // Predicated region
      $region41: #{bottleneck_forward.6} parent=35 // pred_check
        %p2161 = pneg %p150
      $region42: #{bottleneck_forward.6} parent=35 // pred_check_branch
        %2163 = sbr.rel (%p2161) target = $region44
      $region43: #{bottleneck_forward.6} parent=35 // pred_region
        _
      $region44: #{bottleneck_forward.6} parent=35 // pred_fallthru
        _
    $region36: #{bottleneck_forward.6} parent=5 // pred_fallthru
      _
    %p2164 = scmp.le.s32.totalorder 2, %s12
    // Predicated region
    $region45: #{bottleneck_forward.6} parent=5 // pred_check
      %p2165 = pneg %p2164
    $region46: #{bottleneck_forward.6} parent=5 // pred_check_branch
      %2167 = sbr.rel (%p2165) target = $region48
    $region47: #{bottleneck_forward.6} parent=5 // pred_region
      %s2168 = ssub.s32 %s12, 2
      // Predicated region
      $region49: #{bottleneck_forward.6} parent=47 // pred_check
        %p2169 = pneg %p130
      $region50: #{bottleneck_forward.6} parent=47 // pred_check_branch
        %2171 = sbr.rel (%p2169) target = $region52
      $region51: #{bottleneck_forward.6} parent=47 // pred_region
        %p2172 = scmp.lt.s32.totalorder %s18, 1
        %s2173 = scalar_select %p2172, %s18, 1
        %s2174 = smul.addr %s2173, 32
        %s2175 = smul.addr %s2174, 8
        %s2176 = scalar_lea.vmem %s4, %s2175
      $region52: #{bottleneck_forward.6} parent=47 // pred_fallthru
        _
      // Predicated region
      $region53: #{bottleneck_forward.6} parent=47 // pred_check
        %p2177 = pneg %p156
      $region54: #{bottleneck_forward.6} parent=47 // pred_check_branch
        %2179 = sbr.rel (%p2177) target = $region56
      $region55: #{bottleneck_forward.6} parent=47 // pred_region
        %p2180 = scmp.lt.s32.totalorder %s18, 1
        %s2181 = scalar_select %p2180, %s18, 1
        %s2182 = smul.addr %s2181, 2
        %s2183 = scalar_lea.vmem %s5, %s2182
      $region56: #{bottleneck_forward.6} parent=47 // pred_fallthru
        _
    $region48: #{bottleneck_forward.6} parent=5 // pred_fallthru
      _
  $region6: #{bottleneck_forward.6} parent=0 // loop_footer
    %s16 = sadd.s32 1, %s12
  $region7: #{bottleneck_forward.6} parent=0 // loop_footer_branch
    %11 = sbr.rel target = $region3
  $region8: #{bottleneck_forward.6} parent=0 // loop_exit
    _

</llo_original>
